<compile_context>
chip_gen: v7x
topology: tpu7x:2x2x1
jax: 0.10.0
libtpu: 0.0.40
codegen_flags: <defaults>
</compile_context>

<pallas_src>
import functools
import math

import jax
import jax.numpy as jnp
from jax import lax
from jax.experimental import pallas as pl
from jax.experimental.pallas import tpu as pltpu


# -----------------------------------------------------------------------------------------------
# Fused kernel: one grid step = Bb batch elements, everything VMEM / register resident.
# -----------------------------------------------------------------------------------------------
def _net_fwd_kernel(
    query_ref, key_ref,
    q_in_w, q_in_b, q_w1, q_b1, q_w2, q_b2, q_w3, q_b3,
    kv_in_w, kv_in_b, kv_w1, kv_b1, kv_w2, kv_b2, kv_w3, kv_b3,
    wo_ref, bo_ref, rw_ref, rb_ref,
    out_ref, *attn_out,
    K, n_blocks, need_weights, eps, mm_dtype,
):
    Bb, T, C = out_ref.shape
    BbT = Bb * T

    def mdot(a, b):
        # Narrow (bf16) MXU operands, f32 accumulation.
        return jnp.dot(a.astype(mm_dtype), b.astype(mm_dtype),
                       preferred_element_type=jnp.float32)

    # ---- RevIN 'norm': per-sample stats from key, reused for query (recalc_stats=False) ------
    key_x = key_ref[...]                                        # (Bb, T, C) f32
    query_x = query_ref[...]
    mean = jnp.mean(key_x, axis=1, keepdims=True)               # (Bb, 1, C)
    var = jnp.mean((key_x - mean) ** 2, axis=1, keepdims=True)  # biased var (RevIN)
    std = jnp.sqrt(var + eps)
    inv_std = 1.0 / std
    rw = rw_ref[...]                                            # (1, C)
    rb = rb_ref[...]
    key_n = (key_x - mean) * inv_std * rw + rb
    query_n = (query_x - mean) * inv_std * rw + rb

    # ---- dilated conv net: batch folded into M, im2col'd dilated taps --------------------------
    def conv_net(x_flat, in_w, in_b, w1, b1, w2, b2, w3, b3):
        h = mdot(x_flat, in_w[...]) + in_b[...]                 # (BbT, width)
        bn = w1.shape[-1]
        for i in range(n_blocks):
            dil = 2 ** i
            total = (K - 1) * dil
            pad_l = total // 2
            pad_r = total - pad_l
            # 1x1 bottleneck in-proj + ReLU
            t = jnp.maximum(mdot(h, w1[i]) + b1[i], 0.0)        # (BbT, bn)
            t3 = t.reshape(Bb, T, bn)
            parts = []
            if pad_l:
                parts.append(jnp.zeros((Bb, pad_l, bn), jnp.float32))
            parts.append(t3)
            if pad_r:
                parts.append(jnp.zeros((Bb, pad_r, bn), jnp.float32))
            tp = jnp.concatenate(parts, axis=1) if len(parts) > 1 else t3
            # im2col: concat the K dilated taps along features -> one (BbT,K*bn)@(K*bn,bn) matmul.
            col = jnp.concatenate(
                [tp[:, kk * dil:kk * dil + T, :] for kk in range(K)], axis=2)
            t = jnp.maximum(mdot(col.reshape(BbT, K * bn), w2[i]) + b2[i], 0.0)
            # 1x1 back to width, residual add + ReLU
            t = mdot(t, w3[i]) + b3[i]                          # (BbT, width)
            h = jnp.maximum(h + t, 0.0)
        return h

    q_h = conv_net(query_n.reshape(BbT, C),
                   q_in_w, q_in_b, q_w1, q_b1, q_w2, q_b2, q_w3, q_b3)       # (BbT, E)
    kv_h = conv_net(key_n.reshape(BbT, C),
                    kv_in_w, kv_in_b, kv_w1, kv_b1, kv_w2, kv_b2, kv_w3, kv_b3)  # (BbT, 2E)
    E = q_in_w.shape[-1]
    k_h = kv_h[:, :E]
    v_h = kv_h[:, E:]

    # ---- single-head cross attention (identity in-projection, num_heads=1) ---------------------
    # TODO(synk): tile over Tk (flash-style online softmax) once T grows beyond toy sizes,
    #             especially on v7x's 64 MiB VMEM.
    scale = 1.0 / math.sqrt(E)
    q = (q_h * scale).reshape(Bb, T, E).astype(mm_dtype)
    k = k_h.reshape(Bb, T, E).astype(mm_dtype)
    v = v_h.reshape(Bb, T, E)
    s = lax.dot_general(q, k, (((2,), (2,)), ((0,), (0,))),
                        preferred_element_type=jnp.float32)     # (Bb, Tq, Tk)
    m = jnp.max(s, axis=-1, keepdims=True)
    p = jnp.exp(s - m)
    denom = jnp.sum(p, axis=-1, keepdims=True)
    if need_weights:
        attn = p / denom                                        # exact softmax for returned weights
        attn_out[0][...] = attn
        ctx = lax.dot_general(attn.astype(mm_dtype), v.astype(mm_dtype),
                              (((2,), (1,)), ((0,), (0,))),
                              preferred_element_type=jnp.float32)
    else:
        inv_d = pl.reciprocal(denom, approx=True)               # EUP; fold 1/denom after matmul
        ctx = lax.dot_general(p.astype(mm_dtype), v.astype(mm_dtype),
                              (((2,), (1,)), ((0,), (0,))),
                              preferred_element_type=jnp.float32) * inv_d

    recon = mdot(ctx.reshape(BbT, E), wo_ref[...]) + bo_ref[...]  # (BbT, C)
    recon = recon.reshape(Bb, T, C)

    # ---- RevIN 'denorm' with the stored (key) statistics ----------------------------------------
    recon = (recon - rb) / (rw + eps * eps) * std + mean
    # TODO(synk): at production T (>=128) store a lane-dense (C, T)-transposed layout instead to
    #             avoid masked vst on the 4-wide channel axis.
    out_ref[...] = recon


# -----------------------------------------------------------------------------------------------
# Wrapper: one pallas_call for the whole forward.
# -----------------------------------------------------------------------------------------------
def net_forward(params, query_in, key_in, mask=None, *, need_weights=False,
                eps=1e-5, batch_block=None):
    """query_in / key_in: (B, T, C) channels-last.  Returns (reconstruction, attn or None)."""
    if mask is not None:
        # TODO(synk): mask path of dilated_conv_net not specified; unsupported in fused kernel.
        raise NotImplementedError("mask is not supported by the fused Pallas kernel")

    B, T, C = query_in.shape
    nb, E, Bn = params["q_w1"].shape
    K = params["q_w2"].shape[1] // Bn
    mm_dtype = params["q_in_w"].dtype

    # Batch folding: fold Bb elements into the matmul M dimension per grid step.  Keep >= 2 grid
    # steps when possible so v7x's two TensorCores both get work; on v5e/v6e the extra step is
    # negligible (~0.35 us) next to the folded matmuls.
    if batch_block is None:
        batch_block = B // 2 if (B % 2 == 0 and B >= 2) else B
    if B % batch_block != 0:
        batch_block = B
    grid = (B // batch_block,)

    kern = functools.partial(_net_fwd_kernel, K=K, n_blocks=nb,
                             need_weights=need_weights, eps=eps, mm_dtype=mm_dtype)

    weight_names = [
        "q_in_w", "q_in_b", "q_w1", "q_b1", "q_w2", "q_b2", "q_w3", "q_b3",
        "kv_in_w", "kv_in_b", "kv_w1", "kv_b1", "kv_w2", "kv_b2", "kv_w3", "kv_b3",
        "out_proj_w", "out_proj_b", "revin_w", "revin_b",
    ]
    weights = [params[n] for n in weight_names]

    def full_spec(arr):
        nd = arr.ndim
        return pl.BlockSpec(arr.shape, lambda i: (0,) * nd)     # grid-invariant weight block

    data_spec = lambda: pl.BlockSpec((batch_block, T, C), lambda i: (i, 0, 0))
    in_specs = [data_spec(), data_spec()] + [full_spec(w) for w in weights]

    if need_weights:
        out_shape = (jax.ShapeDtypeStruct((B, T, C), jnp.float32),
                     jax.ShapeDtypeStruct((B, T, T), jnp.float32))
        out_specs = (pl.BlockSpec((batch_block, T, C), lambda i: (i, 0, 0)),
                     pl.BlockSpec((batch_block, T, T), lambda i: (i, 0, 0)))
    else:
        out_shape = jax.ShapeDtypeStruct((B, T, C), jnp.float32)
        out_specs = pl.BlockSpec((batch_block, T, C), lambda i: (i, 0, 0))

    res = pl.pallas_call(
        kern,
        out_shape=out_shape,
        grid=grid,
        in_specs=in_specs,
        out_specs=out_specs,
        compiler_params=pltpu.CompilerParams(
            dimension_semantics=("parallel",),          # batch blocks shard across v7x's 2 TCs
            vmem_limit_bytes=32 * 1024 * 1024),         # explicit budget (v5e default is 16 MiB)
    )(query_in, key_in, *weights)

    if need_weights:
        recon, attn = res
    else:
        recon, attn = res, None
    return recon, attn


# -----------------------------------------------------------------------------------------------
# Parameters: 'natural' per-net layout (init) and kernel-ready packed layout (pack_params).
# -----------------------------------------------------------------------------------------------
def init_net_params(key, *, in_dims, embed_dim, kernel_size, n_blocks, bottleneck):
    """Synthetic parameters in the natural per-net matmul layout:
       in_w (C, E), w1 (nb, E, Bn), w2 (nb, K, Bn, Bn), w3 (nb, Bn, E)
       (i.e. the transposes of the torch Conv1d (C_out, C_in, K) weights)."""
    E, Bn, K, nb, C = embed_dim, bottleneck, kernel_size, n_blocks, in_dims

    def dense(k, shape, scale=0.1):
        return scale * jax.random.normal(k, shape, dtype=jnp.float32)

    def conv_net_params(k):
        ks = jax.random.split(k, 8)
        return {
            "in_w": dense(ks[0], (C, E)), "in_b": dense(ks[1], (E,), 0.05),
            "w1": dense(ks[2], (nb, E, Bn)), "b1": dense(ks[3], (nb, Bn), 0.05),
            "w2": dense(ks[4], (nb, K, Bn, Bn)), "b2": dense(ks[5], (nb, Bn), 0.05),
            "w3": dense(ks[6], (nb, Bn, E)), "b3": dense(ks[7], (nb, E), 0.05),
        }

    kq, kk, kv, ko, kr = jax.random.split(key, 5)
    ko1, ko2 = jax.random.split(ko)
    kr1, kr2 = jax.random.split(kr)
    return {
        "q": conv_net_params(kq), "k": conv_net_params(kk), "v": conv_net_params(kv),
        "out_proj_w": dense(ko1, (E, C)),                 # = out_proj.weight.T
        "out_proj_b": dense(ko2, (C,), 0.05),
        "revin_w": 1.0 + dense(kr1, (C,), 0.05),          # RevIN affine weight
        "revin_b": dense(kr2, (C,), 0.05),                # RevIN affine bias
    }


def pack_params(raw, matmul_dtype=jnp.bfloat16):
    """Kernel-ready layout: k/v nets stacked block-diagonally into one 2E-wide net, dilated-conv
       taps flattened for im2col, matmul weights pre-cast to `matmul_dtype` (biases / RevIN stay
       f32 — accumulation and elementwise math are f32 in-kernel)."""
    q, k, v = raw["q"], raw["k"], raw["v"]
    nb, K, Bn, _ = q["w2"].shape
    C = q["in_w"].shape[0]

    def bd(a, b):  # block-diagonal stack along the last two dims (leading dims kept)
        za = jnp.zeros(a.shape[:-1] + (b.shape[-1],), a.dtype)
        zb = jnp.zeros(b.shape[:-1] + (a.shape[-1],), b.dtype)
        return jnp.concatenate([jnp.concatenate([a, za], axis=-1),
                                jnp.concatenate([zb, b], axis=-1)], axis=-2)

    w = lambda x: x.astype(matmul_dtype)
    bias = lambda x: x.reshape(x.shape[:-1] + (1, x.shape[-1])).astype(jnp.float32)
    cat = lambda a, b: jnp.concatenate([a, b], axis=-1)

    return {
        # q net
        "q_in_w": w(q["in_w"]), "q_in_b": bias(q["in_b"]),
        "q_w1": w(q["w1"]), "q_b1": bias(q["b1"]),
        "q_w2": w(q["w2"].reshape(nb, K * Bn, Bn)), "q_b2": bias(q["b2"]),
        "q_w3": w(q["w3"]), "q_b3": bias(q["b3"]),
        # k & v nets fused into one 2E-wide net (they share the key input)
        "kv_in_w": w(cat(k["in_w"], v["in_w"])), "kv_in_b": bias(cat(k["in_b"], v["in_b"])),
        "kv_w1": w(bd(k["w1"], v["w1"])), "kv_b1": bias(cat(k["b1"], v["b1"])),
        "kv_w2": w(bd(k["w2"], v["w2"]).reshape(nb, K * 2 * Bn, 2 * Bn)),
        "kv_b2": bias(cat(k["b2"], v["b2"])),
        "kv_w3": w(bd(k["w3"], v["w3"])), "kv_b3": bias(cat(k["b3"], v["b3"])),
        # attention out-proj + RevIN affine
        "out_proj_w": w(raw["out_proj_w"]),
        "out_proj_b": raw["out_proj_b"].reshape(1, C).astype(jnp.float32),
        "revin_w": raw["revin_w"].reshape(1, C).astype(jnp.float32),
        "revin_b": raw["revin_b"].reshape(1, C).astype(jnp.float32),
    }


# -----------------------------------------------------------------------------------------------
# Pure-JAX f32 reference (same guessed dilated_conv_net structure) for a numerical sanity check.
# -----------------------------------------------------------------------------------------------
def ref_forward(raw, query_in, key_in, eps=1e-5):
    B, T, C = query_in.shape
    mean = jnp.mean(key_in, axis=1, keepdims=True)
    var = jnp.mean((key_in - mean) ** 2, axis=1, keepdims=True)
    std = jnp.sqrt(var + eps)
    rw, rb = raw["revin_w"], raw["revin_b"]
    key_n = (key_in - mean) / std * rw + rb
    query_n = (query_in - mean) / std * rw + rb

    def conv_net(x, p):
        h = x @ p["in_w"] + p["in_b"]
        nb, K = p["w2"].shape[0], p["w2"].shape[1]
        for i in range(nb):
            dil = 2 ** i
            total = (K - 1) * dil
            pad_l = total // 2
            t = jax.nn.relu(h @ p["w1"][i] + p["b1"][i])
            tp = jnp.pad(t, ((0, 0), (pad_l, total - pad_l), (0, 0)))
            acc = sum(tp[:, kk * dil:kk * dil + T, :] @ p["w2"][i, kk] for kk in range(K))
            t = jax.nn.relu(acc + p["b2"][i])
            t = t @ p["w3"][i] + p["b3"][i]
            h = jax.nn.relu(h + t)
        return h

    q = conv_net(query_n, raw["q"])
    k = conv_net(key_n, raw["k"])
    v = conv_net(key_n, raw["v"])
    E = q.shape[-1]
    s = jnp.einsum("bqd,bkd->bqk", q / math.sqrt(E), k)
    attn = jax.nn.softmax(s, axis=-1)
    ctx = jnp.einsum("bqk,bkd->bqd", attn, v)
    recon = ctx @ raw["out_proj_w"] + raw["out_proj_b"]
    recon = (recon - rb) / (rw + eps * eps) * std + mean
    return recon, attn


if __name__ == "__main__":
    # Small shapes consistent with the module: batch=4, seq=16, channels=4, embed_dim=32.
    B, T, C = 4, 16, 4
    EMBED, KSIZE, NBLOCKS = 32, 5, 3          # embed_dim, kernel_size, double_receptivefield

    root = jax.random.PRNGKey(0)
    kp, kq, kk = jax.random.split(root, 3)
    raw = init_net_params(kp, in_dims=C, embed_dim=EMBED, kernel_size=KSIZE,
                          n_blocks=NBLOCKS, bottleneck=EMBED // 8)
    params = pack_params(raw)                                  # bf16 MXU weights, packed layout
    query_in = jax.random.normal(kq, (B, T, C), dtype=jnp.float32)
    key_in = jax.random.normal(kk, (B, T, C), dtype=jnp.float32)

    # Eval-mode path (PyTorch returns None for the attention weights when not training).
    fwd = jax.jit(functools.partial(net_forward, need_weights=False))
    recon, attn = fwd(params, query_in, key_in)
    jax.block_until_ready(recon)
    assert recon.shape == (B, T, C), recon.shape
    assert attn is None
    assert bool(jnp.all(jnp.isfinite(recon)))

    # Training-mode weights path (materializes the (B, Tq, Tk) attention matrix).
    fwd_w = jax.jit(functools.partial(net_forward, need_weights=True))
    recon_w, attn_w = fwd_w(params, query_in, key_in)
    jax.block_until_ready((recon_w, attn_w))
    assert recon_w.shape == (B, T, C), recon_w.shape
    assert attn_w.shape == (B, T, T), attn_w.shape
    assert bool(jnp.all(jnp.isfinite(recon_w))) and bool(jnp.all(jnp.isfinite(attn_w)))

    # Numerical check vs. the pure-JAX f32 reference (bf16 MXU operands -> loose tolerance).
    recon_ref, attn_ref = ref_forward(raw, query_in, key_in)
    assert float(jnp.max(jnp.abs(recon - recon_ref))) < 5e-2
    assert float(jnp.max(jnp.abs(recon_w - recon_ref))) < 5e-2
    assert float(jnp.max(jnp.abs(attn_w - attn_ref))) < 5e-2

    print("KERNEL_OK")
</pallas_src>

<mosaic_0001>
module attributes {stable_mosaic.version = 11 : i64} {
  func.func @_net_fwd_kernel(%arg0: i32, %arg1: memref<2x16x4xf32, #tpu.memory_space<vmem>>, %arg2: memref<2x16x4xf32, #tpu.memory_space<vmem>>, %arg3: memref<4x32xbf16, #tpu.memory_space<vmem>>, %arg4: memref<1x32xf32, #tpu.memory_space<vmem>>, %arg5: memref<3x32x4xbf16, #tpu.memory_space<vmem>>, %arg6: memref<3x1x4xf32, #tpu.memory_space<vmem>>, %arg7: memref<3x20x4xbf16, #tpu.memory_space<vmem>>, %arg8: memref<3x1x4xf32, #tpu.memory_space<vmem>>, %arg9: memref<3x4x32xbf16, #tpu.memory_space<vmem>>, %arg10: memref<3x1x32xf32, #tpu.memory_space<vmem>>, %arg11: memref<4x64xbf16, #tpu.memory_space<vmem>>, %arg12: memref<1x64xf32, #tpu.memory_space<vmem>>, %arg13: memref<3x64x8xbf16, #tpu.memory_space<vmem>>, %arg14: memref<3x1x8xf32, #tpu.memory_space<vmem>>, %arg15: memref<3x40x8xbf16, #tpu.memory_space<vmem>>, %arg16: memref<3x1x8xf32, #tpu.memory_space<vmem>>, %arg17: memref<3x8x64xbf16, #tpu.memory_space<vmem>>, %arg18: memref<3x1x64xf32, #tpu.memory_space<vmem>>, %arg19: memref<32x4xbf16, #tpu.memory_space<vmem>>, %arg20: memref<1x4xf32, #tpu.memory_space<vmem>>, %arg21: memref<1x4xf32, #tpu.memory_space<vmem>>, %arg22: memref<1x4xf32, #tpu.memory_space<vmem>>, %arg23: memref<2x16x4xf32, #tpu.memory_space<vmem>>) attributes {dimension_semantics = [#tpu.dimension_semantics<parallel>], iteration_bounds = array<i64: 2>, scalar_prefetch = 0 : i64, scratch_operands = 0 : i64, tpu.core_type = #tpu.core_type<tc>, window_params = [{transform_indices = @transform_0, window_bounds = array<i64: 2, 16, 4>}, {transform_indices = @transform_1, window_bounds = array<i64: 2, 16, 4>}, {pipeline_mode = #tpu.pipeline_mode<synchronous>, transform_indices = @transform_2, window_bounds = array<i64: 4, 32>}, {pipeline_mode = #tpu.pipeline_mode<synchronous>, transform_indices = @transform_3, window_bounds = array<i64: 1, 32>}, {pipeline_mode = #tpu.pipeline_mode<synchronous>, transform_indices = @transform_4, window_bounds = array<i64: 3, 32, 4>}, {pipeline_mode = #tpu.pipeline_mode<synchronous>, transform_indices = @transform_5, window_bounds = array<i64: 3, 1, 4>}, {pipeline_mode = #tpu.pipeline_mode<synchronous>, transform_indices = @transform_6, window_bounds = array<i64: 3, 20, 4>}, {pipeline_mode = #tpu.pipeline_mode<synchronous>, transform_indices = @transform_7, window_bounds = array<i64: 3, 1, 4>}, {pipeline_mode = #tpu.pipeline_mode<synchronous>, transform_indices = @transform_8, window_bounds = array<i64: 3, 4, 32>}, {pipeline_mode = #tpu.pipeline_mode<synchronous>, transform_indices = @transform_9, window_bounds = array<i64: 3, 1, 32>}, {pipeline_mode = #tpu.pipeline_mode<synchronous>, transform_indices = @transform_10, window_bounds = array<i64: 4, 64>}, {pipeline_mode = #tpu.pipeline_mode<synchronous>, transform_indices = @transform_11, window_bounds = array<i64: 1, 64>}, {pipeline_mode = #tpu.pipeline_mode<synchronous>, transform_indices = @transform_12, window_bounds = array<i64: 3, 64, 8>}, {pipeline_mode = #tpu.pipeline_mode<synchronous>, transform_indices = @transform_13, window_bounds = array<i64: 3, 1, 8>}, {pipeline_mode = #tpu.pipeline_mode<synchronous>, transform_indices = @transform_14, window_bounds = array<i64: 3, 40, 8>}, {pipeline_mode = #tpu.pipeline_mode<synchronous>, transform_indices = @transform_15, window_bounds = array<i64: 3, 1, 8>}, {pipeline_mode = #tpu.pipeline_mode<synchronous>, transform_indices = @transform_16, window_bounds = array<i64: 3, 8, 64>}, {pipeline_mode = #tpu.pipeline_mode<synchronous>, transform_indices = @transform_17, window_bounds = array<i64: 3, 1, 64>}, {pipeline_mode = #tpu.pipeline_mode<synchronous>, transform_indices = @transform_18, window_bounds = array<i64: 32, 4>}, {pipeline_mode = #tpu.pipeline_mode<synchronous>, transform_indices = @transform_19, window_bounds = array<i64: 1, 4>}, {pipeline_mode = #tpu.pipeline_mode<synchronous>, transform_indices = @transform_20, window_bounds = array<i64: 1, 4>}, {pipeline_mode = #tpu.pipeline_mode<synchronous>, transform_indices = @transform_21, window_bounds = array<i64: 1, 4>}, {transform_indices = @transform_22, window_bounds = array<i64: 2, 16, 4>}]} {
    %c0 = arith.constant 0 : index
    %c0_0 = arith.constant 0 : index
    %c0_1 = arith.constant 0 : index
    %0 = vector.load %arg2[%c0, %c0_0, %c0_1] : memref<2x16x4xf32, #tpu.memory_space<vmem>>, vector<2x16x4xf32>
    %c0_2 = arith.constant 0 : index
    %c0_3 = arith.constant 0 : index
    %c0_4 = arith.constant 0 : index
    %1 = vector.load %arg1[%c0_2, %c0_3, %c0_4] : memref<2x16x4xf32, #tpu.memory_space<vmem>>, vector<2x16x4xf32>
    %cst = arith.constant dense<0.000000e+00> : vector<2x4xf32>
    %2 = vector.multi_reduction <add>, %0, %cst [1] : vector<2x16x4xf32> to vector<2x4xf32>
    %3 = vector.shape_cast %2 : vector<2x4xf32> to vector<2x1x4xf32>
    %cst_5 = arith.constant 1.600000e+01 : f32
    %4 = vector.broadcast %cst_5 : f32 to vector<2x1x4xf32>
    %5 = arith.divf %3, %4 : vector<2x1x4xf32>
    %6 = vector.broadcast %5 : vector<2x1x4xf32> to vector<2x16x4xf32>
    %7 = arith.subf %0, %6 : vector<2x16x4xf32>
    %8 = arith.mulf %7, %7 : vector<2x16x4xf32>
    %cst_6 = arith.constant dense<0.000000e+00> : vector<2x4xf32>
    %9 = vector.multi_reduction <add>, %8, %cst_6 [1] : vector<2x16x4xf32> to vector<2x4xf32>
    %10 = vector.shape_cast %9 : vector<2x4xf32> to vector<2x1x4xf32>
    %cst_7 = arith.constant 1.600000e+01 : f32
    %11 = vector.broadcast %cst_7 : f32 to vector<2x1x4xf32>
    %12 = arith.divf %10, %11 : vector<2x1x4xf32>
    %cst_8 = arith.constant 9.99999974E-6 : f32
    %13 = vector.broadcast %cst_8 : f32 to vector<2x1x4xf32>
    %14 = arith.addf %12, %13 : vector<2x1x4xf32>
    %15 = math.sqrt %14 : vector<2x1x4xf32>
    %cst_9 = arith.constant 1.000000e+00 : f32
    %16 = vector.broadcast %cst_9 : f32 to vector<2x1x4xf32>
    %17 = arith.divf %16, %15 : vector<2x1x4xf32>
    %c0_10 = arith.constant 0 : index
    %c0_11 = arith.constant 0 : index
    %18 = vector.load %arg21[%c0_10, %c0_11] : memref<1x4xf32, #tpu.memory_space<vmem>>, vector<1x4xf32>
    %c0_12 = arith.constant 0 : index
    %c0_13 = arith.constant 0 : index
    %19 = vector.load %arg22[%c0_12, %c0_13] : memref<1x4xf32, #tpu.memory_space<vmem>>, vector<1x4xf32>
    %20 = vector.broadcast %5 : vector<2x1x4xf32> to vector<2x16x4xf32>
    %21 = arith.subf %0, %20 : vector<2x16x4xf32>
    %22 = vector.broadcast %17 : vector<2x1x4xf32> to vector<2x16x4xf32>
    %23 = arith.mulf %21, %22 : vector<2x16x4xf32>
    %24 = vector.shape_cast %18 : vector<1x4xf32> to vector<1x1x4xf32>
    %25 = vector.broadcast %24 : vector<1x1x4xf32> to vector<2x16x4xf32>
    %26 = arith.mulf %23, %25 : vector<2x16x4xf32>
    %27 = vector.shape_cast %19 : vector<1x4xf32> to vector<1x1x4xf32>
    %28 = vector.broadcast %27 : vector<1x1x4xf32> to vector<2x16x4xf32>
    %29 = arith.addf %26, %28 : vector<2x16x4xf32>
    %30 = vector.broadcast %5 : vector<2x1x4xf32> to vector<2x16x4xf32>
    %31 = arith.subf %1, %30 : vector<2x16x4xf32>
    %32 = vector.broadcast %17 : vector<2x1x4xf32> to vector<2x16x4xf32>
    %33 = arith.mulf %31, %32 : vector<2x16x4xf32>
    %34 = vector.shape_cast %18 : vector<1x4xf32> to vector<1x1x4xf32>
    %35 = vector.broadcast %34 : vector<1x1x4xf32> to vector<2x16x4xf32>
    %36 = arith.mulf %33, %35 : vector<2x16x4xf32>
    %37 = vector.shape_cast %19 : vector<1x4xf32> to vector<1x1x4xf32>
    %38 = vector.broadcast %37 : vector<1x1x4xf32> to vector<2x16x4xf32>
    %39 = arith.addf %36, %38 : vector<2x16x4xf32>
    %40 = vector.shape_cast %39 : vector<2x16x4xf32> to vector<32x4xf32>
    %c0_14 = arith.constant 0 : index
    %c0_15 = arith.constant 0 : index
    %41 = vector.load %arg3[%c0_14, %c0_15] : memref<4x32xbf16, #tpu.memory_space<vmem>>, vector<4x32xbf16>
    %42 = arith.truncf %40 : vector<32x4xf32> to vector<32x4xbf16>
    %cst_16 = arith.constant dense<0.000000e+00> : vector<32x32xf32>
    %43 = tpu.matmul %42, %41, %cst_16 {dimension_numbers = #tpu.dot_dimension_numbers<[1], [0], [0], [1], [0, 0, 1, 1], [], []>} : vector<32x4xbf16>, vector<4x32xbf16>, vector<32x32xf32> -> vector<32x32xf32>
    %c0_17 = arith.constant 0 : index
    %c0_18 = arith.constant 0 : index
    %44 = vector.load %arg4[%c0_17, %c0_18] : memref<1x32xf32, #tpu.memory_space<vmem>>, vector<1x32xf32>
    %45 = vector.broadcast %44 : vector<1x32xf32> to vector<32x32xf32>
    %46 = arith.addf %43, %45 : vector<32x32xf32>
    %c0_19 = arith.constant 0 : index
    %c0_20 = arith.constant 0 : index
    %c0_21 = arith.constant 0 : index
    %47 = vector.load %arg5[%c0_19, %c0_20, %c0_21] : memref<3x32x4xbf16, #tpu.memory_space<vmem>>, vector<1x32x4xbf16>
    %48 = vector.shape_cast %47 : vector<1x32x4xbf16> to vector<32x4xbf16>
    %49 = arith.truncf %46 : vector<32x32xf32> to vector<32x32xbf16>
    %cst_22 = arith.constant dense<0.000000e+00> : vector<32x4xf32>
    %50 = tpu.matmul %49, %48, %cst_22 {dimension_numbers = #tpu.dot_dimension_numbers<[1], [0], [0], [1], [0, 0, 1, 1], [], []>} : vector<32x32xbf16>, vector<32x4xbf16>, vector<32x4xf32> -> vector<32x4xf32>
    %c0_23 = arith.constant 0 : index
    %c0_24 = arith.constant 0 : index
    %c0_25 = arith.constant 0 : index
    %51 = vector.load %arg6[%c0_23, %c0_24, %c0_25] : memref<3x1x4xf32, #tpu.memory_space<vmem>>, vector<1x1x4xf32>
    %52 = vector.shape_cast %51 : vector<1x1x4xf32> to vector<1x4xf32>
    %53 = vector.broadcast %52 : vector<1x4xf32> to vector<32x4xf32>
    %54 = arith.addf %50, %53 : vector<32x4xf32>
    %cst_26 = arith.constant 0.000000e+00 : f32
    %55 = vector.broadcast %cst_26 : f32 to vector<32x4xf32>
    %56 = arith.maximumf %54, %55 : vector<32x4xf32>
    %57 = vector.shape_cast %56 : vector<32x4xf32> to vector<2x16x4xf32>
    %cst_27 = arith.constant 0.000000e+00 : f32
    %58 = vector.broadcast %cst_27 : f32 to vector<2x2x4xf32>
    %cst_28 = arith.constant 0.000000e+00 : f32
    %59 = vector.broadcast %cst_28 : f32 to vector<2x2x4xf32>
    %60 = tpu.concatenate %58, %57, %59 in 1 : vector<2x2x4xf32>, vector<2x16x4xf32>, vector<2x2x4xf32> -> vector<2x20x4xf32>
    %61 = vector.extract_strided_slice %60 {offsets = [0, 0, 0], sizes = [2, 16, 4], strides = [1, 1, 1]} : vector<2x20x4xf32> to vector<2x16x4xf32>
    %62 = vector.extract_strided_slice %60 {offsets = [0, 1, 0], sizes = [2, 16, 4], strides = [1, 1, 1]} : vector<2x20x4xf32> to vector<2x16x4xf32>
    %63 = vector.extract_strided_slice %60 {offsets = [0, 2, 0], sizes = [2, 16, 4], strides = [1, 1, 1]} : vector<2x20x4xf32> to vector<2x16x4xf32>
    %64 = vector.extract_strided_slice %60 {offsets = [0, 3, 0], sizes = [2, 16, 4], strides = [1, 1, 1]} : vector<2x20x4xf32> to vector<2x16x4xf32>
    %65 = vector.extract_strided_slice %60 {offsets = [0, 4, 0], sizes = [2, 16, 4], strides = [1, 1, 1]} : vector<2x20x4xf32> to vector<2x16x4xf32>
    %66 = tpu.concatenate %61, %62, %63, %64, %65 in 2 : vector<2x16x4xf32>, vector<2x16x4xf32>, vector<2x16x4xf32>, vector<2x16x4xf32>, vector<2x16x4xf32> -> vector<2x16x20xf32>
    %67 = vector.shape_cast %66 : vector<2x16x20xf32> to vector<32x20xf32>
    %c0_29 = arith.constant 0 : index
    %c0_30 = arith.constant 0 : index
    %c0_31 = arith.constant 0 : index
    %68 = vector.load %arg7[%c0_29, %c0_30, %c0_31] : memref<3x20x4xbf16, #tpu.memory_space<vmem>>, vector<1x20x4xbf16>
    %69 = vector.shape_cast %68 : vector<1x20x4xbf16> to vector<20x4xbf16>
    %70 = arith.truncf %67 : vector<32x20xf32> to vector<32x20xbf16>
    %cst_32 = arith.constant dense<0.000000e+00> : vector<32x4xf32>
    %71 = tpu.matmul %70, %69, %cst_32 {dimension_numbers = #tpu.dot_dimension_numbers<[1], [0], [0], [1], [0, 0, 1, 1], [], []>} : vector<32x20xbf16>, vector<20x4xbf16>, vector<32x4xf32> -> vector<32x4xf32>
    %c0_33 = arith.constant 0 : index
    %c0_34 = arith.constant 0 : index
    %c0_35 = arith.constant 0 : index
    %72 = vector.load %arg8[%c0_33, %c0_34, %c0_35] : memref<3x1x4xf32, #tpu.memory_space<vmem>>, vector<1x1x4xf32>
    %73 = vector.shape_cast %72 : vector<1x1x4xf32> to vector<1x4xf32>
    %74 = vector.broadcast %73 : vector<1x4xf32> to vector<32x4xf32>
    %75 = arith.addf %71, %74 : vector<32x4xf32>
    %cst_36 = arith.constant 0.000000e+00 : f32
    %76 = vector.broadcast %cst_36 : f32 to vector<32x4xf32>
    %77 = arith.maximumf %75, %76 : vector<32x4xf32>
    %c0_37 = arith.constant 0 : index
    %c0_38 = arith.constant 0 : index
    %c0_39 = arith.constant 0 : index
    %78 = vector.load %arg9[%c0_37, %c0_38, %c0_39] : memref<3x4x32xbf16, #tpu.memory_space<vmem>>, vector<1x4x32xbf16>
    %79 = vector.shape_cast %78 : vector<1x4x32xbf16> to vector<4x32xbf16>
    %80 = arith.truncf %77 : vector<32x4xf32> to vector<32x4xbf16>
    %cst_40 = arith.constant dense<0.000000e+00> : vector<32x32xf32>
    %81 = tpu.matmul %80, %79, %cst_40 {dimension_numbers = #tpu.dot_dimension_numbers<[1], [0], [0], [1], [0, 0, 1, 1], [], []>} : vector<32x4xbf16>, vector<4x32xbf16>, vector<32x32xf32> -> vector<32x32xf32>
    %c0_41 = arith.constant 0 : index
    %c0_42 = arith.constant 0 : index
    %c0_43 = arith.constant 0 : index
    %82 = vector.load %arg10[%c0_41, %c0_42, %c0_43] : memref<3x1x32xf32, #tpu.memory_space<vmem>>, vector<1x1x32xf32>
    %83 = vector.shape_cast %82 : vector<1x1x32xf32> to vector<1x32xf32>
    %84 = vector.broadcast %83 : vector<1x32xf32> to vector<32x32xf32>
    %85 = arith.addf %81, %84 : vector<32x32xf32>
    %86 = arith.addf %46, %85 : vector<32x32xf32>
    %cst_44 = arith.constant 0.000000e+00 : f32
    %87 = vector.broadcast %cst_44 : f32 to vector<32x32xf32>
    %88 = arith.maximumf %86, %87 : vector<32x32xf32>
    %c1 = arith.constant 1 : index
    %c0_45 = arith.constant 0 : index
    %c0_46 = arith.constant 0 : index
    %89 = vector.load %arg5[%c1, %c0_45, %c0_46] : memref<3x32x4xbf16, #tpu.memory_space<vmem>>, vector<1x32x4xbf16>
    %90 = vector.shape_cast %89 : vector<1x32x4xbf16> to vector<32x4xbf16>
    %91 = arith.truncf %88 : vector<32x32xf32> to vector<32x32xbf16>
    %cst_47 = arith.constant dense<0.000000e+00> : vector<32x4xf32>
    %92 = tpu.matmul %91, %90, %cst_47 {dimension_numbers = #tpu.dot_dimension_numbers<[1], [0], [0], [1], [0, 0, 1, 1], [], []>} : vector<32x32xbf16>, vector<32x4xbf16>, vector<32x4xf32> -> vector<32x4xf32>
    %c1_48 = arith.constant 1 : index
    %c0_49 = arith.constant 0 : index
    %c0_50 = arith.constant 0 : index
    %93 = vector.load %arg6[%c1_48, %c0_49, %c0_50] : memref<3x1x4xf32, #tpu.memory_space<vmem>>, vector<1x1x4xf32>
    %94 = vector.shape_cast %93 : vector<1x1x4xf32> to vector<1x4xf32>
    %95 = vector.broadcast %94 : vector<1x4xf32> to vector<32x4xf32>
    %96 = arith.addf %92, %95 : vector<32x4xf32>
    %cst_51 = arith.constant 0.000000e+00 : f32
    %97 = vector.broadcast %cst_51 : f32 to vector<32x4xf32>
    %98 = arith.maximumf %96, %97 : vector<32x4xf32>
    %99 = vector.shape_cast %98 : vector<32x4xf32> to vector<2x16x4xf32>
    %cst_52 = arith.constant 0.000000e+00 : f32
    %100 = vector.broadcast %cst_52 : f32 to vector<2x4x4xf32>
    %cst_53 = arith.constant 0.000000e+00 : f32
    %101 = vector.broadcast %cst_53 : f32 to vector<2x4x4xf32>
    %102 = tpu.concatenate %100, %99, %101 in 1 : vector<2x4x4xf32>, vector<2x16x4xf32>, vector<2x4x4xf32> -> vector<2x24x4xf32>
    %103 = vector.extract_strided_slice %102 {offsets = [0, 0, 0], sizes = [2, 16, 4], strides = [1, 1, 1]} : vector<2x24x4xf32> to vector<2x16x4xf32>
    %104 = vector.extract_strided_slice %102 {offsets = [0, 2, 0], sizes = [2, 16, 4], strides = [1, 1, 1]} : vector<2x24x4xf32> to vector<2x16x4xf32>
    %105 = vector.extract_strided_slice %102 {offsets = [0, 4, 0], sizes = [2, 16, 4], strides = [1, 1, 1]} : vector<2x24x4xf32> to vector<2x16x4xf32>
    %106 = vector.extract_strided_slice %102 {offsets = [0, 6, 0], sizes = [2, 16, 4], strides = [1, 1, 1]} : vector<2x24x4xf32> to vector<2x16x4xf32>
    %107 = vector.extract_strided_slice %102 {offsets = [0, 8, 0], sizes = [2, 16, 4], strides = [1, 1, 1]} : vector<2x24x4xf32> to vector<2x16x4xf32>
    %108 = tpu.concatenate %103, %104, %105, %106, %107 in 2 : vector<2x16x4xf32>, vector<2x16x4xf32>, vector<2x16x4xf32>, vector<2x16x4xf32>, vector<2x16x4xf32> -> vector<2x16x20xf32>
    %109 = vector.shape_cast %108 : vector<2x16x20xf32> to vector<32x20xf32>
    %c1_54 = arith.constant 1 : index
    %c0_55 = arith.constant 0 : index
    %c0_56 = arith.constant 0 : index
    %110 = vector.load %arg7[%c1_54, %c0_55, %c0_56] : memref<3x20x4xbf16, #tpu.memory_space<vmem>>, vector<1x20x4xbf16>
    %111 = vector.shape_cast %110 : vector<1x20x4xbf16> to vector<20x4xbf16>
    %112 = arith.truncf %109 : vector<32x20xf32> to vector<32x20xbf16>
    %cst_57 = arith.constant dense<0.000000e+00> : vector<32x4xf32>
    %113 = tpu.matmul %112, %111, %cst_57 {dimension_numbers = #tpu.dot_dimension_numbers<[1], [0], [0], [1], [0, 0, 1, 1], [], []>} : vector<32x20xbf16>, vector<20x4xbf16>, vector<32x4xf32> -> vector<32x4xf32>
    %c1_58 = arith.constant 1 : index
    %c0_59 = arith.constant 0 : index
    %c0_60 = arith.constant 0 : index
    %114 = vector.load %arg8[%c1_58, %c0_59, %c0_60] : memref<3x1x4xf32, #tpu.memory_space<vmem>>, vector<1x1x4xf32>
    %115 = vector.shape_cast %114 : vector<1x1x4xf32> to vector<1x4xf32>
    %116 = vector.broadcast %115 : vector<1x4xf32> to vector<32x4xf32>
    %117 = arith.addf %113, %116 : vector<32x4xf32>
    %cst_61 = arith.constant 0.000000e+00 : f32
    %118 = vector.broadcast %cst_61 : f32 to vector<32x4xf32>
    %119 = arith.maximumf %117, %118 : vector<32x4xf32>
    %c1_62 = arith.constant 1 : index
    %c0_63 = arith.constant 0 : index
    %c0_64 = arith.constant 0 : index
    %120 = vector.load %arg9[%c1_62, %c0_63, %c0_64] : memref<3x4x32xbf16, #tpu.memory_space<vmem>>, vector<1x4x32xbf16>
    %121 = vector.shape_cast %120 : vector<1x4x32xbf16> to vector<4x32xbf16>
    %122 = arith.truncf %119 : vector<32x4xf32> to vector<32x4xbf16>
    %cst_65 = arith.constant dense<0.000000e+00> : vector<32x32xf32>
    %123 = tpu.matmul %122, %121, %cst_65 {dimension_numbers = #tpu.dot_dimension_numbers<[1], [0], [0], [1], [0, 0, 1, 1], [], []>} : vector<32x4xbf16>, vector<4x32xbf16>, vector<32x32xf32> -> vector<32x32xf32>
    %c1_66 = arith.constant 1 : index
    %c0_67 = arith.constant 0 : index
    %c0_68 = arith.constant 0 : index
    %124 = vector.load %arg10[%c1_66, %c0_67, %c0_68] : memref<3x1x32xf32, #tpu.memory_space<vmem>>, vector<1x1x32xf32>
    %125 = vector.shape_cast %124 : vector<1x1x32xf32> to vector<1x32xf32>
    %126 = vector.broadcast %125 : vector<1x32xf32> to vector<32x32xf32>
    %127 = arith.addf %123, %126 : vector<32x32xf32>
    %128 = arith.addf %88, %127 : vector<32x32xf32>
    %cst_69 = arith.constant 0.000000e+00 : f32
    %129 = vector.broadcast %cst_69 : f32 to vector<32x32xf32>
    %130 = arith.maximumf %128, %129 : vector<32x32xf32>
    %c2 = arith.constant 2 : index
    %c0_70 = arith.constant 0 : index
    %c0_71 = arith.constant 0 : index
    %131 = vector.load %arg5[%c2, %c0_70, %c0_71] : memref<3x32x4xbf16, #tpu.memory_space<vmem>>, vector<1x32x4xbf16>
    %132 = vector.shape_cast %131 : vector<1x32x4xbf16> to vector<32x4xbf16>
    %133 = arith.truncf %130 : vector<32x32xf32> to vector<32x32xbf16>
    %cst_72 = arith.constant dense<0.000000e+00> : vector<32x4xf32>
    %134 = tpu.matmul %133, %132, %cst_72 {dimension_numbers = #tpu.dot_dimension_numbers<[1], [0], [0], [1], [0, 0, 1, 1], [], []>} : vector<32x32xbf16>, vector<32x4xbf16>, vector<32x4xf32> -> vector<32x4xf32>
    %c2_73 = arith.constant 2 : index
    %c0_74 = arith.constant 0 : index
    %c0_75 = arith.constant 0 : index
    %135 = vector.load %arg6[%c2_73, %c0_74, %c0_75] : memref<3x1x4xf32, #tpu.memory_space<vmem>>, vector<1x1x4xf32>
    %136 = vector.shape_cast %135 : vector<1x1x4xf32> to vector<1x4xf32>
    %137 = vector.broadcast %136 : vector<1x4xf32> to vector<32x4xf32>
    %138 = arith.addf %134, %137 : vector<32x4xf32>
    %cst_76 = arith.constant 0.000000e+00 : f32
    %139 = vector.broadcast %cst_76 : f32 to vector<32x4xf32>
    %140 = arith.maximumf %138, %139 : vector<32x4xf32>
    %141 = vector.shape_cast %140 : vector<32x4xf32> to vector<2x16x4xf32>
    %cst_77 = arith.constant 0.000000e+00 : f32
    %142 = vector.broadcast %cst_77 : f32 to vector<2x8x4xf32>
    %cst_78 = arith.constant 0.000000e+00 : f32
    %143 = vector.broadcast %cst_78 : f32 to vector<2x8x4xf32>
    %144 = tpu.concatenate %142, %141, %143 in 1 : vector<2x8x4xf32>, vector<2x16x4xf32>, vector<2x8x4xf32> -> vector<2x32x4xf32>
    %145 = vector.extract_strided_slice %144 {offsets = [0, 0, 0], sizes = [2, 16, 4], strides = [1, 1, 1]} : vector<2x32x4xf32> to vector<2x16x4xf32>
    %146 = vector.extract_strided_slice %144 {offsets = [0, 4, 0], sizes = [2, 16, 4], strides = [1, 1, 1]} : vector<2x32x4xf32> to vector<2x16x4xf32>
    %147 = vector.extract_strided_slice %144 {offsets = [0, 8, 0], sizes = [2, 16, 4], strides = [1, 1, 1]} : vector<2x32x4xf32> to vector<2x16x4xf32>
    %148 = vector.extract_strided_slice %144 {offsets = [0, 12, 0], sizes = [2, 16, 4], strides = [1, 1, 1]} : vector<2x32x4xf32> to vector<2x16x4xf32>
    %149 = vector.extract_strided_slice %144 {offsets = [0, 16, 0], sizes = [2, 16, 4], strides = [1, 1, 1]} : vector<2x32x4xf32> to vector<2x16x4xf32>
    %150 = tpu.concatenate %145, %146, %147, %148, %149 in 2 : vector<2x16x4xf32>, vector<2x16x4xf32>, vector<2x16x4xf32>, vector<2x16x4xf32>, vector<2x16x4xf32> -> vector<2x16x20xf32>
    %151 = vector.shape_cast %150 : vector<2x16x20xf32> to vector<32x20xf32>
    %c2_79 = arith.constant 2 : index
    %c0_80 = arith.constant 0 : index
    %c0_81 = arith.constant 0 : index
    %152 = vector.load %arg7[%c2_79, %c0_80, %c0_81] : memref<3x20x4xbf16, #tpu.memory_space<vmem>>, vector<1x20x4xbf16>
    %153 = vector.shape_cast %152 : vector<1x20x4xbf16> to vector<20x4xbf16>
    %154 = arith.truncf %151 : vector<32x20xf32> to vector<32x20xbf16>
    %cst_82 = arith.constant dense<0.000000e+00> : vector<32x4xf32>
    %155 = tpu.matmul %154, %153, %cst_82 {dimension_numbers = #tpu.dot_dimension_numbers<[1], [0], [0], [1], [0, 0, 1, 1], [], []>} : vector<32x20xbf16>, vector<20x4xbf16>, vector<32x4xf32> -> vector<32x4xf32>
    %c2_83 = arith.constant 2 : index
    %c0_84 = arith.constant 0 : index
    %c0_85 = arith.constant 0 : index
    %156 = vector.load %arg8[%c2_83, %c0_84, %c0_85] : memref<3x1x4xf32, #tpu.memory_space<vmem>>, vector<1x1x4xf32>
    %157 = vector.shape_cast %156 : vector<1x1x4xf32> to vector<1x4xf32>
    %158 = vector.broadcast %157 : vector<1x4xf32> to vector<32x4xf32>
    %159 = arith.addf %155, %158 : vector<32x4xf32>
    %cst_86 = arith.constant 0.000000e+00 : f32
    %160 = vector.broadcast %cst_86 : f32 to vector<32x4xf32>
    %161 = arith.maximumf %159, %160 : vector<32x4xf32>
    %c2_87 = arith.constant 2 : index
    %c0_88 = arith.constant 0 : index
    %c0_89 = arith.constant 0 : index
    %162 = vector.load %arg9[%c2_87, %c0_88, %c0_89] : memref<3x4x32xbf16, #tpu.memory_space<vmem>>, vector<1x4x32xbf16>
    %163 = vector.shape_cast %162 : vector<1x4x32xbf16> to vector<4x32xbf16>
    %164 = arith.truncf %161 : vector<32x4xf32> to vector<32x4xbf16>
    %cst_90 = arith.constant dense<0.000000e+00> : vector<32x32xf32>
    %165 = tpu.matmul %164, %163, %cst_90 {dimension_numbers = #tpu.dot_dimension_numbers<[1], [0], [0], [1], [0, 0, 1, 1], [], []>} : vector<32x4xbf16>, vector<4x32xbf16>, vector<32x32xf32> -> vector<32x32xf32>
    %c2_91 = arith.constant 2 : index
    %c0_92 = arith.constant 0 : index
    %c0_93 = arith.constant 0 : index
    %166 = vector.load %arg10[%c2_91, %c0_92, %c0_93] : memref<3x1x32xf32, #tpu.memory_space<vmem>>, vector<1x1x32xf32>
    %167 = vector.shape_cast %166 : vector<1x1x32xf32> to vector<1x32xf32>
    %168 = vector.broadcast %167 : vector<1x32xf32> to vector<32x32xf32>
    %169 = arith.addf %165, %168 : vector<32x32xf32>
    %170 = arith.addf %130, %169 : vector<32x32xf32>
    %cst_94 = arith.constant 0.000000e+00 : f32
    %171 = vector.broadcast %cst_94 : f32 to vector<32x32xf32>
    %172 = arith.maximumf %170, %171 : vector<32x32xf32>
    %173 = vector.shape_cast %29 : vector<2x16x4xf32> to vector<32x4xf32>
    %c0_95 = arith.constant 0 : index
    %c0_96 = arith.constant 0 : index
    %174 = vector.load %arg11[%c0_95, %c0_96] : memref<4x64xbf16, #tpu.memory_space<vmem>>, vector<4x64xbf16>
    %175 = arith.truncf %173 : vector<32x4xf32> to vector<32x4xbf16>
    %cst_97 = arith.constant dense<0.000000e+00> : vector<32x64xf32>
    %176 = tpu.matmul %175, %174, %cst_97 {dimension_numbers = #tpu.dot_dimension_numbers<[1], [0], [0], [1], [0, 0, 1, 1], [], []>} : vector<32x4xbf16>, vector<4x64xbf16>, vector<32x64xf32> -> vector<32x64xf32>
    %c0_98 = arith.constant 0 : index
    %c0_99 = arith.constant 0 : index
    %177 = vector.load %arg12[%c0_98, %c0_99] : memref<1x64xf32, #tpu.memory_space<vmem>>, vector<1x64xf32>
    %178 = vector.broadcast %177 : vector<1x64xf32> to vector<32x64xf32>
    %179 = arith.addf %176, %178 : vector<32x64xf32>
    %c0_100 = arith.constant 0 : index
    %c0_101 = arith.constant 0 : index
    %c0_102 = arith.constant 0 : index
    %180 = vector.load %arg13[%c0_100, %c0_101, %c0_102] : memref<3x64x8xbf16, #tpu.memory_space<vmem>>, vector<1x64x8xbf16>
    %181 = vector.shape_cast %180 : vector<1x64x8xbf16> to vector<64x8xbf16>
    %182 = arith.truncf %179 : vector<32x64xf32> to vector<32x64xbf16>
    %cst_103 = arith.constant dense<0.000000e+00> : vector<32x8xf32>
    %183 = tpu.matmul %182, %181, %cst_103 {dimension_numbers = #tpu.dot_dimension_numbers<[1], [0], [0], [1], [0, 0, 1, 1], [], []>} : vector<32x64xbf16>, vector<64x8xbf16>, vector<32x8xf32> -> vector<32x8xf32>
    %c0_104 = arith.constant 0 : index
    %c0_105 = arith.constant 0 : index
    %c0_106 = arith.constant 0 : index
    %184 = vector.load %arg14[%c0_104, %c0_105, %c0_106] : memref<3x1x8xf32, #tpu.memory_space<vmem>>, vector<1x1x8xf32>
    %185 = vector.shape_cast %184 : vector<1x1x8xf32> to vector<1x8xf32>
    %186 = vector.broadcast %185 : vector<1x8xf32> to vector<32x8xf32>
    %187 = arith.addf %183, %186 : vector<32x8xf32>
    %cst_107 = arith.constant 0.000000e+00 : f32
    %188 = vector.broadcast %cst_107 : f32 to vector<32x8xf32>
    %189 = arith.maximumf %187, %188 : vector<32x8xf32>
    %190 = vector.shape_cast %189 : vector<32x8xf32> to vector<2x16x8xf32>
    %cst_108 = arith.constant 0.000000e+00 : f32
    %191 = vector.broadcast %cst_108 : f32 to vector<2x2x8xf32>
    %cst_109 = arith.constant 0.000000e+00 : f32
    %192 = vector.broadcast %cst_109 : f32 to vector<2x2x8xf32>
    %193 = tpu.concatenate %191, %190, %192 in 1 : vector<2x2x8xf32>, vector<2x16x8xf32>, vector<2x2x8xf32> -> vector<2x20x8xf32>
    %194 = vector.extract_strided_slice %193 {offsets = [0, 0, 0], sizes = [2, 16, 8], strides = [1, 1, 1]} : vector<2x20x8xf32> to vector<2x16x8xf32>
    %195 = vector.extract_strided_slice %193 {offsets = [0, 1, 0], sizes = [2, 16, 8], strides = [1, 1, 1]} : vector<2x20x8xf32> to vector<2x16x8xf32>
    %196 = vector.extract_strided_slice %193 {offsets = [0, 2, 0], sizes = [2, 16, 8], strides = [1, 1, 1]} : vector<2x20x8xf32> to vector<2x16x8xf32>
    %197 = vector.extract_strided_slice %193 {offsets = [0, 3, 0], sizes = [2, 16, 8], strides = [1, 1, 1]} : vector<2x20x8xf32> to vector<2x16x8xf32>
    %198 = vector.extract_strided_slice %193 {offsets = [0, 4, 0], sizes = [2, 16, 8], strides = [1, 1, 1]} : vector<2x20x8xf32> to vector<2x16x8xf32>
    %199 = tpu.concatenate %194, %195, %196, %197, %198 in 2 : vector<2x16x8xf32>, vector<2x16x8xf32>, vector<2x16x8xf32>, vector<2x16x8xf32>, vector<2x16x8xf32> -> vector<2x16x40xf32>
    %200 = vector.shape_cast %199 : vector<2x16x40xf32> to vector<32x40xf32>
    %c0_110 = arith.constant 0 : index
    %c0_111 = arith.constant 0 : index
    %c0_112 = arith.constant 0 : index
    %201 = vector.load %arg15[%c0_110, %c0_111, %c0_112] : memref<3x40x8xbf16, #tpu.memory_space<vmem>>, vector<1x40x8xbf16>
    %202 = vector.shape_cast %201 : vector<1x40x8xbf16> to vector<40x8xbf16>
    %203 = arith.truncf %200 : vector<32x40xf32> to vector<32x40xbf16>
    %cst_113 = arith.constant dense<0.000000e+00> : vector<32x8xf32>
    %204 = tpu.matmul %203, %202, %cst_113 {dimension_numbers = #tpu.dot_dimension_numbers<[1], [0], [0], [1], [0, 0, 1, 1], [], []>} : vector<32x40xbf16>, vector<40x8xbf16>, vector<32x8xf32> -> vector<32x8xf32>
    %c0_114 = arith.constant 0 : index
    %c0_115 = arith.constant 0 : index
    %c0_116 = arith.constant 0 : index
    %205 = vector.load %arg16[%c0_114, %c0_115, %c0_116] : memref<3x1x8xf32, #tpu.memory_space<vmem>>, vector<1x1x8xf32>
    %206 = vector.shape_cast %205 : vector<1x1x8xf32> to vector<1x8xf32>
    %207 = vector.broadcast %206 : vector<1x8xf32> to vector<32x8xf32>
    %208 = arith.addf %204, %207 : vector<32x8xf32>
    %cst_117 = arith.constant 0.000000e+00 : f32
    %209 = vector.broadcast %cst_117 : f32 to vector<32x8xf32>
    %210 = arith.maximumf %208, %209 : vector<32x8xf32>
    %c0_118 = arith.constant 0 : index
    %c0_119 = arith.constant 0 : index
    %c0_120 = arith.constant 0 : index
    %211 = vector.load %arg17[%c0_118, %c0_119, %c0_120] : memref<3x8x64xbf16, #tpu.memory_space<vmem>>, vector<1x8x64xbf16>
    %212 = vector.shape_cast %211 : vector<1x8x64xbf16> to vector<8x64xbf16>
    %213 = arith.truncf %210 : vector<32x8xf32> to vector<32x8xbf16>
    %cst_121 = arith.constant dense<0.000000e+00> : vector<32x64xf32>
    %214 = tpu.matmul %213, %212, %cst_121 {dimension_numbers = #tpu.dot_dimension_numbers<[1], [0], [0], [1], [0, 0, 1, 1], [], []>} : vector<32x8xbf16>, vector<8x64xbf16>, vector<32x64xf32> -> vector<32x64xf32>
    %c0_122 = arith.constant 0 : index
    %c0_123 = arith.constant 0 : index
    %c0_124 = arith.constant 0 : index
    %215 = vector.load %arg18[%c0_122, %c0_123, %c0_124] : memref<3x1x64xf32, #tpu.memory_space<vmem>>, vector<1x1x64xf32>
    %216 = vector.shape_cast %215 : vector<1x1x64xf32> to vector<1x64xf32>
    %217 = vector.broadcast %216 : vector<1x64xf32> to vector<32x64xf32>
    %218 = arith.addf %214, %217 : vector<32x64xf32>
    %219 = arith.addf %179, %218 : vector<32x64xf32>
    %cst_125 = arith.constant 0.000000e+00 : f32
    %220 = vector.broadcast %cst_125 : f32 to vector<32x64xf32>
    %221 = arith.maximumf %219, %220 : vector<32x64xf32>
    %c1_126 = arith.constant 1 : index
    %c0_127 = arith.constant 0 : index
    %c0_128 = arith.constant 0 : index
    %222 = vector.load %arg13[%c1_126, %c0_127, %c0_128] : memref<3x64x8xbf16, #tpu.memory_space<vmem>>, vector<1x64x8xbf16>
    %223 = vector.shape_cast %222 : vector<1x64x8xbf16> to vector<64x8xbf16>
    %224 = arith.truncf %221 : vector<32x64xf32> to vector<32x64xbf16>
    %cst_129 = arith.constant dense<0.000000e+00> : vector<32x8xf32>
    %225 = tpu.matmul %224, %223, %cst_129 {dimension_numbers = #tpu.dot_dimension_numbers<[1], [0], [0], [1], [0, 0, 1, 1], [], []>} : vector<32x64xbf16>, vector<64x8xbf16>, vector<32x8xf32> -> vector<32x8xf32>
    %c1_130 = arith.constant 1 : index
    %c0_131 = arith.constant 0 : index
    %c0_132 = arith.constant 0 : index
    %226 = vector.load %arg14[%c1_130, %c0_131, %c0_132] : memref<3x1x8xf32, #tpu.memory_space<vmem>>, vector<1x1x8xf32>
    %227 = vector.shape_cast %226 : vector<1x1x8xf32> to vector<1x8xf32>
    %228 = vector.broadcast %227 : vector<1x8xf32> to vector<32x8xf32>
    %229 = arith.addf %225, %228 : vector<32x8xf32>
    %cst_133 = arith.constant 0.000000e+00 : f32
    %230 = vector.broadcast %cst_133 : f32 to vector<32x8xf32>
    %231 = arith.maximumf %229, %230 : vector<32x8xf32>
    %232 = vector.shape_cast %231 : vector<32x8xf32> to vector<2x16x8xf32>
    %cst_134 = arith.constant 0.000000e+00 : f32
    %233 = vector.broadcast %cst_134 : f32 to vector<2x4x8xf32>
    %cst_135 = arith.constant 0.000000e+00 : f32
    %234 = vector.broadcast %cst_135 : f32 to vector<2x4x8xf32>
    %235 = tpu.concatenate %233, %232, %234 in 1 : vector<2x4x8xf32>, vector<2x16x8xf32>, vector<2x4x8xf32> -> vector<2x24x8xf32>
    %236 = vector.extract_strided_slice %235 {offsets = [0, 0, 0], sizes = [2, 16, 8], strides = [1, 1, 1]} : vector<2x24x8xf32> to vector<2x16x8xf32>
    %237 = vector.extract_strided_slice %235 {offsets = [0, 2, 0], sizes = [2, 16, 8], strides = [1, 1, 1]} : vector<2x24x8xf32> to vector<2x16x8xf32>
    %238 = vector.extract_strided_slice %235 {offsets = [0, 4, 0], sizes = [2, 16, 8], strides = [1, 1, 1]} : vector<2x24x8xf32> to vector<2x16x8xf32>
    %239 = vector.extract_strided_slice %235 {offsets = [0, 6, 0], sizes = [2, 16, 8], strides = [1, 1, 1]} : vector<2x24x8xf32> to vector<2x16x8xf32>
    %240 = vector.extract_strided_slice %235 {offsets = [0, 8, 0], sizes = [2, 16, 8], strides = [1, 1, 1]} : vector<2x24x8xf32> to vector<2x16x8xf32>
    %241 = tpu.concatenate %236, %237, %238, %239, %240 in 2 : vector<2x16x8xf32>, vector<2x16x8xf32>, vector<2x16x8xf32>, vector<2x16x8xf32>, vector<2x16x8xf32> -> vector<2x16x40xf32>
    %242 = vector.shape_cast %241 : vector<2x16x40xf32> to vector<32x40xf32>
    %c1_136 = arith.constant 1 : index
    %c0_137 = arith.constant 0 : index
    %c0_138 = arith.constant 0 : index
    %243 = vector.load %arg15[%c1_136, %c0_137, %c0_138] : memref<3x40x8xbf16, #tpu.memory_space<vmem>>, vector<1x40x8xbf16>
    %244 = vector.shape_cast %243 : vector<1x40x8xbf16> to vector<40x8xbf16>
    %245 = arith.truncf %242 : vector<32x40xf32> to vector<32x40xbf16>
    %cst_139 = arith.constant dense<0.000000e+00> : vector<32x8xf32>
    %246 = tpu.matmul %245, %244, %cst_139 {dimension_numbers = #tpu.dot_dimension_numbers<[1], [0], [0], [1], [0, 0, 1, 1], [], []>} : vector<32x40xbf16>, vector<40x8xbf16>, vector<32x8xf32> -> vector<32x8xf32>
    %c1_140 = arith.constant 1 : index
    %c0_141 = arith.constant 0 : index
    %c0_142 = arith.constant 0 : index
    %247 = vector.load %arg16[%c1_140, %c0_141, %c0_142] : memref<3x1x8xf32, #tpu.memory_space<vmem>>, vector<1x1x8xf32>
    %248 = vector.shape_cast %247 : vector<1x1x8xf32> to vector<1x8xf32>
    %249 = vector.broadcast %248 : vector<1x8xf32> to vector<32x8xf32>
    %250 = arith.addf %246, %249 : vector<32x8xf32>
    %cst_143 = arith.constant 0.000000e+00 : f32
    %251 = vector.broadcast %cst_143 : f32 to vector<32x8xf32>
    %252 = arith.maximumf %250, %251 : vector<32x8xf32>
    %c1_144 = arith.constant 1 : index
    %c0_145 = arith.constant 0 : index
    %c0_146 = arith.constant 0 : index
    %253 = vector.load %arg17[%c1_144, %c0_145, %c0_146] : memref<3x8x64xbf16, #tpu.memory_space<vmem>>, vector<1x8x64xbf16>
    %254 = vector.shape_cast %253 : vector<1x8x64xbf16> to vector<8x64xbf16>
    %255 = arith.truncf %252 : vector<32x8xf32> to vector<32x8xbf16>
    %cst_147 = arith.constant dense<0.000000e+00> : vector<32x64xf32>
    %256 = tpu.matmul %255, %254, %cst_147 {dimension_numbers = #tpu.dot_dimension_numbers<[1], [0], [0], [1], [0, 0, 1, 1], [], []>} : vector<32x8xbf16>, vector<8x64xbf16>, vector<32x64xf32> -> vector<32x64xf32>
    %c1_148 = arith.constant 1 : index
    %c0_149 = arith.constant 0 : index
    %c0_150 = arith.constant 0 : index
    %257 = vector.load %arg18[%c1_148, %c0_149, %c0_150] : memref<3x1x64xf32, #tpu.memory_space<vmem>>, vector<1x1x64xf32>
    %258 = vector.shape_cast %257 : vector<1x1x64xf32> to vector<1x64xf32>
    %259 = vector.broadcast %258 : vector<1x64xf32> to vector<32x64xf32>
    %260 = arith.addf %256, %259 : vector<32x64xf32>
    %261 = arith.addf %221, %260 : vector<32x64xf32>
    %cst_151 = arith.constant 0.000000e+00 : f32
    %262 = vector.broadcast %cst_151 : f32 to vector<32x64xf32>
    %263 = arith.maximumf %261, %262 : vector<32x64xf32>
    %c2_152 = arith.constant 2 : index
    %c0_153 = arith.constant 0 : index
    %c0_154 = arith.constant 0 : index
    %264 = vector.load %arg13[%c2_152, %c0_153, %c0_154] : memref<3x64x8xbf16, #tpu.memory_space<vmem>>, vector<1x64x8xbf16>
    %265 = vector.shape_cast %264 : vector<1x64x8xbf16> to vector<64x8xbf16>
    %266 = arith.truncf %263 : vector<32x64xf32> to vector<32x64xbf16>
    %cst_155 = arith.constant dense<0.000000e+00> : vector<32x8xf32>
    %267 = tpu.matmul %266, %265, %cst_155 {dimension_numbers = #tpu.dot_dimension_numbers<[1], [0], [0], [1], [0, 0, 1, 1], [], []>} : vector<32x64xbf16>, vector<64x8xbf16>, vector<32x8xf32> -> vector<32x8xf32>
    %c2_156 = arith.constant 2 : index
    %c0_157 = arith.constant 0 : index
    %c0_158 = arith.constant 0 : index
    %268 = vector.load %arg14[%c2_156, %c0_157, %c0_158] : memref<3x1x8xf32, #tpu.memory_space<vmem>>, vector<1x1x8xf32>
    %269 = vector.shape_cast %268 : vector<1x1x8xf32> to vector<1x8xf32>
    %270 = vector.broadcast %269 : vector<1x8xf32> to vector<32x8xf32>
    %271 = arith.addf %267, %270 : vector<32x8xf32>
    %cst_159 = arith.constant 0.000000e+00 : f32
    %272 = vector.broadcast %cst_159 : f32 to vector<32x8xf32>
    %273 = arith.maximumf %271, %272 : vector<32x8xf32>
    %274 = vector.shape_cast %273 : vector<32x8xf32> to vector<2x16x8xf32>
    %cst_160 = arith.constant 0.000000e+00 : f32
    %275 = vector.broadcast %cst_160 : f32 to vector<2x8x8xf32>
    %cst_161 = arith.constant 0.000000e+00 : f32
    %276 = vector.broadcast %cst_161 : f32 to vector<2x8x8xf32>
    %277 = tpu.concatenate %275, %274, %276 in 1 : vector<2x8x8xf32>, vector<2x16x8xf32>, vector<2x8x8xf32> -> vector<2x32x8xf32>
    %278 = vector.extract_strided_slice %277 {offsets = [0, 0, 0], sizes = [2, 16, 8], strides = [1, 1, 1]} : vector<2x32x8xf32> to vector<2x16x8xf32>
    %279 = vector.extract_strided_slice %277 {offsets = [0, 4, 0], sizes = [2, 16, 8], strides = [1, 1, 1]} : vector<2x32x8xf32> to vector<2x16x8xf32>
    %280 = vector.extract_strided_slice %277 {offsets = [0, 8, 0], sizes = [2, 16, 8], strides = [1, 1, 1]} : vector<2x32x8xf32> to vector<2x16x8xf32>
    %281 = vector.extract_strided_slice %277 {offsets = [0, 12, 0], sizes = [2, 16, 8], strides = [1, 1, 1]} : vector<2x32x8xf32> to vector<2x16x8xf32>
    %282 = vector.extract_strided_slice %277 {offsets = [0, 16, 0], sizes = [2, 16, 8], strides = [1, 1, 1]} : vector<2x32x8xf32> to vector<2x16x8xf32>
    %283 = tpu.concatenate %278, %279, %280, %281, %282 in 2 : vector<2x16x8xf32>, vector<2x16x8xf32>, vector<2x16x8xf32>, vector<2x16x8xf32>, vector<2x16x8xf32> -> vector<2x16x40xf32>
    %284 = vector.shape_cast %283 : vector<2x16x40xf32> to vector<32x40xf32>
    %c2_162 = arith.constant 2 : index
    %c0_163 = arith.constant 0 : index
    %c0_164 = arith.constant 0 : index
    %285 = vector.load %arg15[%c2_162, %c0_163, %c0_164] : memref<3x40x8xbf16, #tpu.memory_space<vmem>>, vector<1x40x8xbf16>
    %286 = vector.shape_cast %285 : vector<1x40x8xbf16> to vector<40x8xbf16>
    %287 = arith.truncf %284 : vector<32x40xf32> to vector<32x40xbf16>
    %cst_165 = arith.constant dense<0.000000e+00> : vector<32x8xf32>
    %288 = tpu.matmul %287, %286, %cst_165 {dimension_numbers = #tpu.dot_dimension_numbers<[1], [0], [0], [1], [0, 0, 1, 1], [], []>} : vector<32x40xbf16>, vector<40x8xbf16>, vector<32x8xf32> -> vector<32x8xf32>
    %c2_166 = arith.constant 2 : index
    %c0_167 = arith.constant 0 : index
    %c0_168 = arith.constant 0 : index
    %289 = vector.load %arg16[%c2_166, %c0_167, %c0_168] : memref<3x1x8xf32, #tpu.memory_space<vmem>>, vector<1x1x8xf32>
    %290 = vector.shape_cast %289 : vector<1x1x8xf32> to vector<1x8xf32>
    %291 = vector.broadcast %290 : vector<1x8xf32> to vector<32x8xf32>
    %292 = arith.addf %288, %291 : vector<32x8xf32>
    %cst_169 = arith.constant 0.000000e+00 : f32
    %293 = vector.broadcast %cst_169 : f32 to vector<32x8xf32>
    %294 = arith.maximumf %292, %293 : vector<32x8xf32>
    %c2_170 = arith.constant 2 : index
    %c0_171 = arith.constant 0 : index
    %c0_172 = arith.constant 0 : index
    %295 = vector.load %arg17[%c2_170, %c0_171, %c0_172] : memref<3x8x64xbf16, #tpu.memory_space<vmem>>, vector<1x8x64xbf16>
    %296 = vector.shape_cast %295 : vector<1x8x64xbf16> to vector<8x64xbf16>
    %297 = arith.truncf %294 : vector<32x8xf32> to vector<32x8xbf16>
    %cst_173 = arith.constant dense<0.000000e+00> : vector<32x64xf32>
    %298 = tpu.matmul %297, %296, %cst_173 {dimension_numbers = #tpu.dot_dimension_numbers<[1], [0], [0], [1], [0, 0, 1, 1], [], []>} : vector<32x8xbf16>, vector<8x64xbf16>, vector<32x64xf32> -> vector<32x64xf32>
    %c2_174 = arith.constant 2 : index
    %c0_175 = arith.constant 0 : index
    %c0_176 = arith.constant 0 : index
    %299 = vector.load %arg18[%c2_174, %c0_175, %c0_176] : memref<3x1x64xf32, #tpu.memory_space<vmem>>, vector<1x1x64xf32>
    %300 = vector.shape_cast %299 : vector<1x1x64xf32> to vector<1x64xf32>
    %301 = vector.broadcast %300 : vector<1x64xf32> to vector<32x64xf32>
    %302 = arith.addf %298, %301 : vector<32x64xf32>
    %303 = arith.addf %263, %302 : vector<32x64xf32>
    %cst_177 = arith.constant 0.000000e+00 : f32
    %304 = vector.broadcast %cst_177 : f32 to vector<32x64xf32>
    %305 = arith.maximumf %303, %304 : vector<32x64xf32>
    %306 = vector.extract_strided_slice %305 {offsets = [0, 0], sizes = [32, 32], strides = [1, 1]} : vector<32x64xf32> to vector<32x32xf32>
    %307 = vector.extract_strided_slice %305 {offsets = [0, 32], sizes = [32, 32], strides = [1, 1]} : vector<32x64xf32> to vector<32x32xf32>
    %cst_178 = arith.constant 0.176776692 : f32
    %308 = vector.broadcast %cst_178 : f32 to vector<32x32xf32>
    %309 = arith.mulf %172, %308 : vector<32x32xf32>
    %310 = vector.shape_cast %309 : vector<32x32xf32> to vector<2x16x32xf32>
    %311 = arith.truncf %310 : vector<2x16x32xf32> to vector<2x16x32xbf16>
    %312 = vector.shape_cast %306 : vector<32x32xf32> to vector<2x16x32xf32>
    %313 = arith.truncf %312 : vector<2x16x32xf32> to vector<2x16x32xbf16>
    %314 = vector.shape_cast %307 : vector<32x32xf32> to vector<2x16x32xf32>
    %cst_179 = arith.constant dense<0.000000e+00> : vector<2x16x16xf32>
    %315 = tpu.matmul %311, %313, %cst_179 {dimension_numbers = #tpu.dot_dimension_numbers<[2], [2], [1], [1], [0, 0, 0, 1, 1, 1], [0], [0]>} : vector<2x16x32xbf16>, vector<2x16x32xbf16>, vector<2x16x16xf32> -> vector<2x16x16xf32>
    %cst_180 = arith.constant dense<0xFF800000> : vector<2x16xf32>
    %316 = vector.multi_reduction <maximumf>, %315, %cst_180 [2] : vector<2x16x16xf32> to vector<2x16xf32>
    %317 = vector.shape_cast %316 : vector<2x16xf32> to vector<2x16x1xf32>
    %318 = vector.broadcast %317 : vector<2x16x1xf32> to vector<2x16x16xf32>
    %319 = arith.subf %315, %318 : vector<2x16x16xf32>
    %320 = math.exp %319 : vector<2x16x16xf32>
    %cst_181 = arith.constant dense<0.000000e+00> : vector<2x16xf32>
    %321 = vector.multi_reduction <add>, %320, %cst_181 [2] : vector<2x16x16xf32> to vector<2x16xf32>
    %322 = vector.shape_cast %321 : vector<2x16xf32> to vector<2x16x1xf32>
    %323 = tpu.reciprocal %322 {approx = true} : vector<2x16x1xf32> -> vector<2x16x1xf32>
    %324 = arith.truncf %320 : vector<2x16x16xf32> to vector<2x16x16xbf16>
    %325 = arith.truncf %314 : vector<2x16x32xf32> to vector<2x16x32xbf16>
    %cst_182 = arith.constant dense<0.000000e+00> : vector<2x16x32xf32>
    %326 = tpu.matmul %324, %325, %cst_182 {dimension_numbers = #tpu.dot_dimension_numbers<[2], [1], [1], [2], [0, 0, 0, 1, 1, 2], [0], [0]>} : vector<2x16x16xbf16>, vector<2x16x32xbf16>, vector<2x16x32xf32> -> vector<2x16x32xf32>
    %327 = vector.broadcast %323 : vector<2x16x1xf32> to vector<2x16x32xf32>
    %328 = arith.mulf %326, %327 : vector<2x16x32xf32>
    %329 = vector.shape_cast %328 : vector<2x16x32xf32> to vector<32x32xf32>
    %c0_183 = arith.constant 0 : index
    %c0_184 = arith.constant 0 : index
    %330 = vector.load %arg19[%c0_183, %c0_184] : memref<32x4xbf16, #tpu.memory_space<vmem>>, vector<32x4xbf16>
    %331 = arith.truncf %329 : vector<32x32xf32> to vector<32x32xbf16>
    %cst_185 = arith.constant dense<0.000000e+00> : vector<32x4xf32>
    %332 = tpu.matmul %331, %330, %cst_185 {dimension_numbers = #tpu.dot_dimension_numbers<[1], [0], [0], [1], [0, 0, 1, 1], [], []>} : vector<32x32xbf16>, vector<32x4xbf16>, vector<32x4xf32> -> vector<32x4xf32>
    %c0_186 = arith.constant 0 : index
    %c0_187 = arith.constant 0 : index
    %333 = vector.load %arg20[%c0_186, %c0_187] : memref<1x4xf32, #tpu.memory_space<vmem>>, vector<1x4xf32>
    %334 = vector.broadcast %333 : vector<1x4xf32> to vector<32x4xf32>
    %335 = arith.addf %332, %334 : vector<32x4xf32>
    %336 = vector.shape_cast %335 : vector<32x4xf32> to vector<2x16x4xf32>
    %337 = vector.shape_cast %19 : vector<1x4xf32> to vector<1x1x4xf32>
    %338 = vector.broadcast %337 : vector<1x1x4xf32> to vector<2x16x4xf32>
    %339 = arith.subf %336, %338 : vector<2x16x4xf32>
    %cst_188 = arith.constant 1.000000e-10 : f32
    %340 = vector.broadcast %cst_188 : f32 to vector<1x4xf32>
    %341 = arith.addf %18, %340 : vector<1x4xf32>
    %342 = vector.shape_cast %341 : vector<1x4xf32> to vector<1x1x4xf32>
    %343 = vector.broadcast %342 : vector<1x1x4xf32> to vector<2x16x4xf32>
    %344 = arith.divf %339, %343 : vector<2x16x4xf32>
    %345 = vector.broadcast %15 : vector<2x1x4xf32> to vector<2x16x4xf32>
    %346 = arith.mulf %344, %345 : vector<2x16x4xf32>
    %347 = vector.broadcast %5 : vector<2x1x4xf32> to vector<2x16x4xf32>
    %348 = arith.addf %346, %347 : vector<2x16x4xf32>
    %c0_189 = arith.constant 0 : index
    %c0_190 = arith.constant 0 : index
    %c0_191 = arith.constant 0 : index
    %349 = vector.load %arg23[%c0_189, %c0_190, %c0_191] : memref<2x16x4xf32, #tpu.memory_space<vmem>>, vector<2x16x4xf32>
    tpu.vector_store %arg23[%c0_189, %c0_190, %c0_191], %348 {strides = array<i32>} : memref<2x16x4xf32, #tpu.memory_space<vmem>>, vector<2x16x4xf32>,
    return
  }
  func.func @transform_0(%arg0: i32) -> (i32, i32, i32) {
    %c0_i32 = arith.constant 0 : i32
    %c0_i32_0 = arith.constant 0 : i32
    %c0_i32_1 = arith.constant 0 : i32
    return %arg0, %c0_i32, %c0_i32_0 : i32, i32, i32
  }
  func.func @transform_1(%arg0: i32) -> (i32, i32, i32) {
    %c0_i32 = arith.constant 0 : i32
    %c0_i32_0 = arith.constant 0 : i32
    %c0_i32_1 = arith.constant 0 : i32
    return %arg0, %c0_i32, %c0_i32_0 : i32, i32, i32
  }
  func.func @transform_2(%arg0: i32) -> (i32, i32) {
    %c0_i32 = arith.constant 0 : i32
    %c0_i32_0 = arith.constant 0 : i32
    %c0_i32_1 = arith.constant 0 : i32
    return %c0_i32, %c0_i32_0 : i32, i32
  }
  func.func @transform_3(%arg0: i32) -> (i32, i32) {
    %c0_i32 = arith.constant 0 : i32
    %c0_i32_0 = arith.constant 0 : i32
    %c0_i32_1 = arith.constant 0 : i32
    return %c0_i32, %c0_i32_0 : i32, i32
  }
  func.func @transform_4(%arg0: i32) -> (i32, i32, i32) {
    %c0_i32 = arith.constant 0 : i32
    %c0_i32_0 = arith.constant 0 : i32
    %c0_i32_1 = arith.constant 0 : i32
    %c0_i32_2 = arith.constant 0 : i32
    return %c0_i32, %c0_i32_0, %c0_i32_1 : i32, i32, i32
  }
  func.func @transform_5(%arg0: i32) -> (i32, i32, i32) {
    %c0_i32 = arith.constant 0 : i32
    %c0_i32_0 = arith.constant 0 : i32
    %c0_i32_1 = arith.constant 0 : i32
    %c0_i32_2 = arith.constant 0 : i32
    return %c0_i32, %c0_i32_0, %c0_i32_1 : i32, i32, i32
  }
  func.func @transform_6(%arg0: i32) -> (i32, i32, i32) {
    %c0_i32 = arith.constant 0 : i32
    %c0_i32_0 = arith.constant 0 : i32
    %c0_i32_1 = arith.constant 0 : i32
    %c0_i32_2 = arith.constant 0 : i32
    return %c0_i32, %c0_i32_0, %c0_i32_1 : i32, i32, i32
  }
  func.func @transform_7(%arg0: i32) -> (i32, i32, i32) {
    %c0_i32 = arith.constant 0 : i32
    %c0_i32_0 = arith.constant 0 : i32
    %c0_i32_1 = arith.constant 0 : i32
    %c0_i32_2 = arith.constant 0 : i32
    return %c0_i32, %c0_i32_0, %c0_i32_1 : i32, i32, i32
  }
  func.func @transform_8(%arg0: i32) -> (i32, i32, i32) {
    %c0_i32 = arith.constant 0 : i32
    %c0_i32_0 = arith.constant 0 : i32
    %c0_i32_1 = arith.constant 0 : i32
    %c0_i32_2 = arith.constant 0 : i32
    return %c0_i32, %c0_i32_0, %c0_i32_1 : i32, i32, i32
  }
  func.func @transform_9(%arg0: i32) -> (i32, i32, i32) {
    %c0_i32 = arith.constant 0 : i32
    %c0_i32_0 = arith.constant 0 : i32
    %c0_i32_1 = arith.constant 0 : i32
    %c0_i32_2 = arith.constant 0 : i32
    return %c0_i32, %c0_i32_0, %c0_i32_1 : i32, i32, i32
  }
  func.func @transform_10(%arg0: i32) -> (i32, i32) {
    %c0_i32 = arith.constant 0 : i32
    %c0_i32_0 = arith.constant 0 : i32
    %c0_i32_1 = arith.constant 0 : i32
    return %c0_i32, %c0_i32_0 : i32, i32
  }
  func.func @transform_11(%arg0: i32) -> (i32, i32) {
    %c0_i32 = arith.constant 0 : i32
    %c0_i32_0 = arith.constant 0 : i32
    %c0_i32_1 = arith.constant 0 : i32
    return %c0_i32, %c0_i32_0 : i32, i32
  }
  func.func @transform_12(%arg0: i32) -> (i32, i32, i32) {
    %c0_i32 = arith.constant 0 : i32
    %c0_i32_0 = arith.constant 0 : i32
    %c0_i32_1 = arith.constant 0 : i32
    %c0_i32_2 = arith.constant 0 : i32
    return %c0_i32, %c0_i32_0, %c0_i32_1 : i32, i32, i32
  }
  func.func @transform_13(%arg0: i32) -> (i32, i32, i32) {
    %c0_i32 = arith.constant 0 : i32
    %c0_i32_0 = arith.constant 0 : i32
    %c0_i32_1 = arith.constant 0 : i32
    %c0_i32_2 = arith.constant 0 : i32
    return %c0_i32, %c0_i32_0, %c0_i32_1 : i32, i32, i32
  }
  func.func @transform_14(%arg0: i32) -> (i32, i32, i32) {
    %c0_i32 = arith.constant 0 : i32
    %c0_i32_0 = arith.constant 0 : i32
    %c0_i32_1 = arith.constant 0 : i32
    %c0_i32_2 = arith.constant 0 : i32
    return %c0_i32, %c0_i32_0, %c0_i32_1 : i32, i32, i32
  }
  func.func @transform_15(%arg0: i32) -> (i32, i32, i32) {
    %c0_i32 = arith.constant 0 : i32
    %c0_i32_0 = arith.constant 0 : i32
    %c0_i32_1 = arith.constant 0 : i32
    %c0_i32_2 = arith.constant 0 : i32
    return %c0_i32, %c0_i32_0, %c0_i32_1 : i32, i32, i32
  }
  func.func @transform_16(%arg0: i32) -> (i32, i32, i32) {
    %c0_i32 = arith.constant 0 : i32
    %c0_i32_0 = arith.constant 0 : i32
    %c0_i32_1 = arith.constant 0 : i32
    %c0_i32_2 = arith.constant 0 : i32
    return %c0_i32, %c0_i32_0, %c0_i32_1 : i32, i32, i32
  }
  func.func @transform_17(%arg0: i32) -> (i32, i32, i32) {
    %c0_i32 = arith.constant 0 : i32
    %c0_i32_0 = arith.constant 0 : i32
    %c0_i32_1 = arith.constant 0 : i32
    %c0_i32_2 = arith.constant 0 : i32
    return %c0_i32, %c0_i32_0, %c0_i32_1 : i32, i32, i32
  }
  func.func @transform_18(%arg0: i32) -> (i32, i32) {
    %c0_i32 = arith.constant 0 : i32
    %c0_i32_0 = arith.constant 0 : i32
    %c0_i32_1 = arith.constant 0 : i32
    return %c0_i32, %c0_i32_0 : i32, i32
  }
  func.func @transform_19(%arg0: i32) -> (i32, i32) {
    %c0_i32 = arith.constant 0 : i32
    %c0_i32_0 = arith.constant 0 : i32
    %c0_i32_1 = arith.constant 0 : i32
    return %c0_i32, %c0_i32_0 : i32, i32
  }
  func.func @transform_20(%arg0: i32) -> (i32, i32) {
    %c0_i32 = arith.constant 0 : i32
    %c0_i32_0 = arith.constant 0 : i32
    %c0_i32_1 = arith.constant 0 : i32
    return %c0_i32, %c0_i32_0 : i32, i32
  }
  func.func @transform_21(%arg0: i32) -> (i32, i32) {
    %c0_i32 = arith.constant 0 : i32
    %c0_i32_0 = arith.constant 0 : i32
    %c0_i32_1 = arith.constant 0 : i32
    return %c0_i32, %c0_i32_0 : i32, i32
  }
  func.func @transform_22(%arg0: i32) -> (i32, i32, i32) {
    %c0_i32 = arith.constant 0 : i32
    %c0_i32_0 = arith.constant 0 : i32
    %c0_i32_1 = arith.constant 0 : i32
    return %arg0, %c0_i32, %c0_i32_0 : i32, i32, i32
  }
}

</mosaic_0001>

<llo_original>
// kernel: net_forward.1
$region0: #{net_forward.1}
  #allocation0 [shape = 'u32[]', space=smem, size = 0x4, offset = 0x4, fixed_abs, tag = 'smem constant byte address 0x4 - core index']
  #allocation1 [shape = 'u32[144,128]{1,0:T(1,128)}', space=vmem, size = 0x12000, scoped, tag = 'internal scratch']
  %s0 = inlined_call_operand.vmem [shape: f32[4,16,4], index: 0, kind: input, shape index: {}]
  %s1 = inlined_call_operand.vmem [shape: f32[4,16,4], index: 1, kind: input, shape index: {}]
  %s2 = inlined_call_operand.vmem [shape: bf16[4,32], index: 2, kind: input, shape index: {}]
  %s3 = inlined_call_operand.vmem [shape: f32[1,32], index: 3, kind: input, shape index: {}]
  %s4 = inlined_call_operand.vmem [shape: bf16[3,32,4], index: 4, kind: input, shape index: {}]
  %s5 = inlined_call_operand.vmem [shape: f32[3,1,4], index: 5, kind: input, shape index: {}]
  %s6 = inlined_call_operand.vmem [shape: bf16[3,20,4], index: 6, kind: input, shape index: {}]
  %s7 = inlined_call_operand.vmem [shape: f32[3,1,4], index: 7, kind: input, shape index: {}]
  %s8 = inlined_call_operand.vmem [shape: bf16[3,4,32], index: 8, kind: input, shape index: {}]
  %s9 = inlined_call_operand.vmem [shape: f32[3,1,32], index: 9, kind: input, shape index: {}]
  %s10 = inlined_call_operand.vmem [shape: bf16[4,64], index: 10, kind: input, shape index: {}]
  %s11 = inlined_call_operand.vmem [shape: f32[1,64], index: 11, kind: input, shape index: {}]
  %s12 = inlined_call_operand.vmem [shape: bf16[3,64,8], index: 12, kind: input, shape index: {}]
  %s13 = inlined_call_operand.vmem [shape: f32[3,1,8], index: 13, kind: input, shape index: {}]
  %s14 = inlined_call_operand.vmem [shape: bf16[3,40,8], index: 14, kind: input, shape index: {}]
  %s15 = inlined_call_operand.vmem [shape: f32[3,1,8], index: 15, kind: input, shape index: {}]
  %s16 = inlined_call_operand.vmem [shape: bf16[3,8,64], index: 16, kind: input, shape index: {}]
  %s17 = inlined_call_operand.vmem [shape: f32[3,1,64], index: 17, kind: input, shape index: {}]
  %s18 = inlined_call_operand.vmem [shape: bf16[32,4], index: 18, kind: input, shape index: {}]
  %s19 = inlined_call_operand.vmem [shape: f32[1,4], index: 19, kind: input, shape index: {}]
  %s20 = inlined_call_operand.vmem [shape: f32[1,4], index: 20, kind: input, shape index: {}]
  %s21 = inlined_call_operand.vmem [shape: f32[1,4], index: 21, kind: input, shape index: {}]
  %s22 = inlined_call_operand.vmem [shape: f32[4,16,4], index: 22, kind: output, shape index: {}]
  %s23 = sld [smem:[#allocation0]]
  $region121: #{net_forward.1} parent=0
    _
  %s25 = ssub.s32 1, %s23
  %s26 = scalar_select 0, %s25, %s23
  loop: start=0, step=1, limit=4
  $region2: #{net_forward.1} parent=0 // loop_pre_header
    _
  $region3: #{net_forward.1} parent=0 // loop_header
    %s28 = sphi 0, %s32
    %p29 = scmp.ge.s32.totalorder %s28, 4
    %s38 = sphi 0, %s40
    %s41 = sphi 0, %s38
    %s42 = sphi 0, %s41
    %s58 = sphi 0, %s42
    %s64 = sphi 0, %s66
    %s67 = sphi 0, %s64
    %s68 = sphi 0, %s67
    %s84 = sphi 0, %s68
    %s88 = sphi 0, %s88
    %s90 = sphi 0, %s88
    %s91 = sphi 0, %s90
    %s105 = sphi 0, %s91
    %s109 = sphi 0, %s109
    %s111 = sphi 0, %s109
    %s112 = sphi 0, %s111
    %s126 = sphi 0, %s112
    %s130 = sphi 0, %s130
    %s132 = sphi 0, %s130
    %s133 = sphi 0, %s132
    %s147 = sphi 0, %s133
    %s151 = sphi 0, %s151
    %s153 = sphi 0, %s151
    %s154 = sphi 0, %s153
    %s168 = sphi 0, %s154
    %s172 = sphi 0, %s172
    %s174 = sphi 0, %s172
    %s175 = sphi 0, %s174
    %s189 = sphi 0, %s175
    %s193 = sphi 0, %s193
    %s195 = sphi 0, %s193
    %s196 = sphi 0, %s195
    %s210 = sphi 0, %s196
    %s214 = sphi 0, %s214
    %s216 = sphi 0, %s214
    %s217 = sphi 0, %s216
    %s231 = sphi 0, %s217
    %s235 = sphi 0, %s235
    %s237 = sphi 0, %s235
    %s238 = sphi 0, %s237
    %s252 = sphi 0, %s238
    %s256 = sphi 0, %s256
    %s258 = sphi 0, %s256
    %s259 = sphi 0, %s258
    %s273 = sphi 0, %s259
    %s277 = sphi 0, %s277
    %s279 = sphi 0, %s277
    %s280 = sphi 0, %s279
    %s294 = sphi 0, %s280
    %s298 = sphi 0, %s298
    %s300 = sphi 0, %s298
    %s301 = sphi 0, %s300
    %s315 = sphi 0, %s301
    %s319 = sphi 0, %s319
    %s321 = sphi 0, %s319
    %s322 = sphi 0, %s321
    %s336 = sphi 0, %s322
    %s340 = sphi 0, %s340
    %s342 = sphi 0, %s340
    %s343 = sphi 0, %s342
    %s357 = sphi 0, %s343
    %s361 = sphi 0, %s361
    %s363 = sphi 0, %s361
    %s364 = sphi 0, %s363
    %s378 = sphi 0, %s364
    %s382 = sphi 0, %s382
    %s384 = sphi 0, %s382
    %s385 = sphi 0, %s384
    %s399 = sphi 0, %s385
    %s403 = sphi 0, %s403
    %s405 = sphi 0, %s403
    %s406 = sphi 0, %s405
    %s420 = sphi 0, %s406
    %s424 = sphi 0, %s424
    %s426 = sphi 0, %s424
    %s427 = sphi 0, %s426
    %s441 = sphi 0, %s427
    %s445 = sphi 0, %s445
    %s447 = sphi 0, %s445
    %s448 = sphi 0, %s447
    %s462 = sphi 0, %s448
    %s466 = sphi 0, %s466
    %s468 = sphi 0, %s466
    %s469 = sphi 0, %s468
    %s483 = sphi 0, %s469
    %s487 = sphi 0, %s487
    %s489 = sphi 0, %s487
    %s490 = sphi 0, %s489
    %s504 = sphi 0, %s490
    %s510 = sphi 0, %s512
    %s513 = sphi 0, %s510
    %s514 = sphi 0, %s513
    %s530 = sphi 0, %s514
  $region4: #{net_forward.1} parent=0 // loop_header_branch
    %31 = sbr.rel (%p29) target = $region8
  $region5: #{net_forward.1} parent=0 // loop_body
    %s33 = ssub.s32 %s28, 1
    %s34 = ssub.s32 %s28, 2
    %s35 = sadd.s32 %s28, 1
    %s36 = ssub.s32 %s28, %s35
    %p37 = scmp.eq.s32.totalorder %s36, 0
    %s39 = sadd.s32 %s38, 1
    %s40 = scalar_select %p37, %s38, %s39
    %p43 = pneg %p37
    %p44 = scmp.eq.s32.totalorder %s28, 1
    %p45 = por %p43, %p44
    %p46 = scmp.ne.s32.totalorder %s38, %s41
    %p47 = scmp.eq.s32.totalorder %s28, 0
    %p48 = por %p46, %p47
    %p49 = scmp.ne.s32.totalorder %s38, %s41
    %p50 = scmp.eq.s32.totalorder %s33, 1
    %p51 = por %p49, %p50
    %p52 = scmp.ne.s32.totalorder %s41, %s42
    %p53 = scmp.eq.s32.totalorder %s33, 0
    %p54 = por %p52, %p53
    %p55 = scmp.ne.s32.totalorder %s41, %s42
    %p56 = scmp.eq.s32.totalorder %s34, 1
    %p57 = por %p55, %p56
    %p59 = scmp.ne.s32.totalorder %s42, %s58
    %p60 = scmp.eq.s32.totalorder %s34, 0
    %p61 = por %p59, %p60
    %s62 = ssub.s32 %s28, %s35
    %p63 = scmp.eq.s32.totalorder %s62, 0
    %s65 = sadd.s32 %s64, 1
    %s66 = scalar_select %p63, %s64, %s65
    %p69 = pneg %p63
    %p70 = scmp.eq.s32.totalorder %s28, 1
    %p71 = por %p69, %p70
    %p72 = scmp.ne.s32.totalorder %s64, %s67
    %p73 = scmp.eq.s32.totalorder %s28, 0
    %p74 = por %p72, %p73
    %p75 = scmp.ne.s32.totalorder %s64, %s67
    %p76 = scmp.eq.s32.totalorder %s33, 1
    %p77 = por %p75, %p76
    %p78 = scmp.ne.s32.totalorder %s67, %s68
    %p79 = scmp.eq.s32.totalorder %s33, 0
    %p80 = por %p78, %p79
    %p81 = scmp.ne.s32.totalorder %s67, %s68
    %p82 = scmp.eq.s32.totalorder %s34, 1
    %p83 = por %p81, %p82
    %p85 = scmp.ne.s32.totalorder %s68, %s84
    %p86 = scmp.eq.s32.totalorder %s34, 0
    %p87 = por %p85, %p86
    %s89 = sadd.s32 %s88, 1
    %p92 = scmp.eq.s32.totalorder %s28, 1
    %p93 = scmp.ne.s32.totalorder %s88, %s90
    %p94 = scmp.eq.s32.totalorder %s28, 0
    %p95 = por %p93, %p94
    %p96 = scmp.ne.s32.totalorder %s88, %s90
    %p97 = scmp.eq.s32.totalorder %s33, 1
    %p98 = por %p96, %p97
    %p99 = scmp.ne.s32.totalorder %s90, %s91
    %p100 = scmp.eq.s32.totalorder %s33, 0
    %p101 = por %p99, %p100
    %p102 = scmp.ne.s32.totalorder %s90, %s91
    %p103 = scmp.eq.s32.totalorder %s34, 1
    %p104 = por %p102, %p103
    %p106 = scmp.ne.s32.totalorder %s91, %s105
    %p107 = scmp.eq.s32.totalorder %s34, 0
    %p108 = por %p106, %p107
    %s110 = sadd.s32 %s109, 1
    %p113 = scmp.eq.s32.totalorder %s28, 1
    %p114 = scmp.ne.s32.totalorder %s109, %s111
    %p115 = scmp.eq.s32.totalorder %s28, 0
    %p116 = por %p114, %p115
    %p117 = scmp.ne.s32.totalorder %s109, %s111
    %p118 = scmp.eq.s32.totalorder %s33, 1
    %p119 = por %p117, %p118
    %p120 = scmp.ne.s32.totalorder %s111, %s112
    %p121 = scmp.eq.s32.totalorder %s33, 0
    %p122 = por %p120, %p121
    %p123 = scmp.ne.s32.totalorder %s111, %s112
    %p124 = scmp.eq.s32.totalorder %s34, 1
    %p125 = por %p123, %p124
    %p127 = scmp.ne.s32.totalorder %s112, %s126
    %p128 = scmp.eq.s32.totalorder %s34, 0
    %p129 = por %p127, %p128
    %s131 = sadd.s32 %s130, 1
    %p134 = scmp.eq.s32.totalorder %s28, 1
    %p135 = scmp.ne.s32.totalorder %s130, %s132
    %p136 = scmp.eq.s32.totalorder %s28, 0
    %p137 = por %p135, %p136
    %p138 = scmp.ne.s32.totalorder %s130, %s132
    %p139 = scmp.eq.s32.totalorder %s33, 1
    %p140 = por %p138, %p139
    %p141 = scmp.ne.s32.totalorder %s132, %s133
    %p142 = scmp.eq.s32.totalorder %s33, 0
    %p143 = por %p141, %p142
    %p144 = scmp.ne.s32.totalorder %s132, %s133
    %p145 = scmp.eq.s32.totalorder %s34, 1
    %p146 = por %p144, %p145
    %p148 = scmp.ne.s32.totalorder %s133, %s147
    %p149 = scmp.eq.s32.totalorder %s34, 0
    %p150 = por %p148, %p149
    %s152 = sadd.s32 %s151, 1
    %p155 = scmp.eq.s32.totalorder %s28, 1
    %p156 = scmp.ne.s32.totalorder %s151, %s153
    %p157 = scmp.eq.s32.totalorder %s28, 0
    %p158 = por %p156, %p157
    %p159 = scmp.ne.s32.totalorder %s151, %s153
    %p160 = scmp.eq.s32.totalorder %s33, 1
    %p161 = por %p159, %p160
    %p162 = scmp.ne.s32.totalorder %s153, %s154
    %p163 = scmp.eq.s32.totalorder %s33, 0
    %p164 = por %p162, %p163
    %p165 = scmp.ne.s32.totalorder %s153, %s154
    %p166 = scmp.eq.s32.totalorder %s34, 1
    %p167 = por %p165, %p166
    %p169 = scmp.ne.s32.totalorder %s154, %s168
    %p170 = scmp.eq.s32.totalorder %s34, 0
    %p171 = por %p169, %p170
    %s173 = sadd.s32 %s172, 1
    %p176 = scmp.eq.s32.totalorder %s28, 1
    %p177 = scmp.ne.s32.totalorder %s172, %s174
    %p178 = scmp.eq.s32.totalorder %s28, 0
    %p179 = por %p177, %p178
    %p180 = scmp.ne.s32.totalorder %s172, %s174
    %p181 = scmp.eq.s32.totalorder %s33, 1
    %p182 = por %p180, %p181
    %p183 = scmp.ne.s32.totalorder %s174, %s175
    %p184 = scmp.eq.s32.totalorder %s33, 0
    %p185 = por %p183, %p184
    %p186 = scmp.ne.s32.totalorder %s174, %s175
    %p187 = scmp.eq.s32.totalorder %s34, 1
    %p188 = por %p186, %p187
    %p190 = scmp.ne.s32.totalorder %s175, %s189
    %p191 = scmp.eq.s32.totalorder %s34, 0
    %p192 = por %p190, %p191
    %s194 = sadd.s32 %s193, 1
    %p197 = scmp.eq.s32.totalorder %s28, 1
    %p198 = scmp.ne.s32.totalorder %s193, %s195
    %p199 = scmp.eq.s32.totalorder %s28, 0
    %p200 = por %p198, %p199
    %p201 = scmp.ne.s32.totalorder %s193, %s195
    %p202 = scmp.eq.s32.totalorder %s33, 1
    %p203 = por %p201, %p202
    %p204 = scmp.ne.s32.totalorder %s195, %s196
    %p205 = scmp.eq.s32.totalorder %s33, 0
    %p206 = por %p204, %p205
    %p207 = scmp.ne.s32.totalorder %s195, %s196
    %p208 = scmp.eq.s32.totalorder %s34, 1
    %p209 = por %p207, %p208
    %p211 = scmp.ne.s32.totalorder %s196, %s210
    %p212 = scmp.eq.s32.totalorder %s34, 0
    %p213 = por %p211, %p212
    %s215 = sadd.s32 %s214, 1
    %p218 = scmp.eq.s32.totalorder %s28, 1
    %p219 = scmp.ne.s32.totalorder %s214, %s216
    %p220 = scmp.eq.s32.totalorder %s28, 0
    %p221 = por %p219, %p220
    %p222 = scmp.ne.s32.totalorder %s214, %s216
    %p223 = scmp.eq.s32.totalorder %s33, 1
    %p224 = por %p222, %p223
    %p225 = scmp.ne.s32.totalorder %s216, %s217
    %p226 = scmp.eq.s32.totalorder %s33, 0
    %p227 = por %p225, %p226
    %p228 = scmp.ne.s32.totalorder %s216, %s217
    %p229 = scmp.eq.s32.totalorder %s34, 1
    %p230 = por %p228, %p229
    %p232 = scmp.ne.s32.totalorder %s217, %s231
    %p233 = scmp.eq.s32.totalorder %s34, 0
    %p234 = por %p232, %p233
    %s236 = sadd.s32 %s235, 1
    %p239 = scmp.eq.s32.totalorder %s28, 1
    %p240 = scmp.ne.s32.totalorder %s235, %s237
    %p241 = scmp.eq.s32.totalorder %s28, 0
    %p242 = por %p240, %p241
    %p243 = scmp.ne.s32.totalorder %s235, %s237
    %p244 = scmp.eq.s32.totalorder %s33, 1
    %p245 = por %p243, %p244
    %p246 = scmp.ne.s32.totalorder %s237, %s238
    %p247 = scmp.eq.s32.totalorder %s33, 0
    %p248 = por %p246, %p247
    %p249 = scmp.ne.s32.totalorder %s237, %s238
    %p250 = scmp.eq.s32.totalorder %s34, 1
    %p251 = por %p249, %p250
    %p253 = scmp.ne.s32.totalorder %s238, %s252
    %p254 = scmp.eq.s32.totalorder %s34, 0
    %p255 = por %p253, %p254
    %s257 = sadd.s32 %s256, 1
    %p260 = scmp.eq.s32.totalorder %s28, 1
    %p261 = scmp.ne.s32.totalorder %s256, %s258
    %p262 = scmp.eq.s32.totalorder %s28, 0
    %p263 = por %p261, %p262
    %p264 = scmp.ne.s32.totalorder %s256, %s258
    %p265 = scmp.eq.s32.totalorder %s33, 1
    %p266 = por %p264, %p265
    %p267 = scmp.ne.s32.totalorder %s258, %s259
    %p268 = scmp.eq.s32.totalorder %s33, 0
    %p269 = por %p267, %p268
    %p270 = scmp.ne.s32.totalorder %s258, %s259
    %p271 = scmp.eq.s32.totalorder %s34, 1
    %p272 = por %p270, %p271
    %p274 = scmp.ne.s32.totalorder %s259, %s273
    %p275 = scmp.eq.s32.totalorder %s34, 0
    %p276 = por %p274, %p275
    %s278 = sadd.s32 %s277, 1
    %p281 = scmp.eq.s32.totalorder %s28, 1
    %p282 = scmp.ne.s32.totalorder %s277, %s279
    %p283 = scmp.eq.s32.totalorder %s28, 0
    %p284 = por %p282, %p283
    %p285 = scmp.ne.s32.totalorder %s277, %s279
    %p286 = scmp.eq.s32.totalorder %s33, 1
    %p287 = por %p285, %p286
    %p288 = scmp.ne.s32.totalorder %s279, %s280
    %p289 = scmp.eq.s32.totalorder %s33, 0
    %p290 = por %p288, %p289
    %p291 = scmp.ne.s32.totalorder %s279, %s280
    %p292 = scmp.eq.s32.totalorder %s34, 1
    %p293 = por %p291, %p292
    %p295 = scmp.ne.s32.totalorder %s280, %s294
    %p296 = scmp.eq.s32.totalorder %s34, 0
    %p297 = por %p295, %p296
    %s299 = sadd.s32 %s298, 1
    %p302 = scmp.eq.s32.totalorder %s28, 1
    %p303 = scmp.ne.s32.totalorder %s298, %s300
    %p304 = scmp.eq.s32.totalorder %s28, 0
    %p305 = por %p303, %p304
    %p306 = scmp.ne.s32.totalorder %s298, %s300
    %p307 = scmp.eq.s32.totalorder %s33, 1
    %p308 = por %p306, %p307
    %p309 = scmp.ne.s32.totalorder %s300, %s301
    %p310 = scmp.eq.s32.totalorder %s33, 0
    %p311 = por %p309, %p310
    %p312 = scmp.ne.s32.totalorder %s300, %s301
    %p313 = scmp.eq.s32.totalorder %s34, 1
    %p314 = por %p312, %p313
    %p316 = scmp.ne.s32.totalorder %s301, %s315
    %p317 = scmp.eq.s32.totalorder %s34, 0
    %p318 = por %p316, %p317
    %s320 = sadd.s32 %s319, 1
    %p323 = scmp.eq.s32.totalorder %s28, 1
    %p324 = scmp.ne.s32.totalorder %s319, %s321
    %p325 = scmp.eq.s32.totalorder %s28, 0
    %p326 = por %p324, %p325
    %p327 = scmp.ne.s32.totalorder %s319, %s321
    %p328 = scmp.eq.s32.totalorder %s33, 1
    %p329 = por %p327, %p328
    %p330 = scmp.ne.s32.totalorder %s321, %s322
    %p331 = scmp.eq.s32.totalorder %s33, 0
    %p332 = por %p330, %p331
    %p333 = scmp.ne.s32.totalorder %s321, %s322
    %p334 = scmp.eq.s32.totalorder %s34, 1
    %p335 = por %p333, %p334
    %p337 = scmp.ne.s32.totalorder %s322, %s336
    %p338 = scmp.eq.s32.totalorder %s34, 0
    %p339 = por %p337, %p338
    %s341 = sadd.s32 %s340, 1
    %p344 = scmp.eq.s32.totalorder %s28, 1
    %p345 = scmp.ne.s32.totalorder %s340, %s342
    %p346 = scmp.eq.s32.totalorder %s28, 0
    %p347 = por %p345, %p346
    %p348 = scmp.ne.s32.totalorder %s340, %s342
    %p349 = scmp.eq.s32.totalorder %s33, 1
    %p350 = por %p348, %p349
    %p351 = scmp.ne.s32.totalorder %s342, %s343
    %p352 = scmp.eq.s32.totalorder %s33, 0
    %p353 = por %p351, %p352
    %p354 = scmp.ne.s32.totalorder %s342, %s343
    %p355 = scmp.eq.s32.totalorder %s34, 1
    %p356 = por %p354, %p355
    %p358 = scmp.ne.s32.totalorder %s343, %s357
    %p359 = scmp.eq.s32.totalorder %s34, 0
    %p360 = por %p358, %p359
    %s362 = sadd.s32 %s361, 1
    %p365 = scmp.eq.s32.totalorder %s28, 1
    %p366 = scmp.ne.s32.totalorder %s361, %s363
    %p367 = scmp.eq.s32.totalorder %s28, 0
    %p368 = por %p366, %p367
    %p369 = scmp.ne.s32.totalorder %s361, %s363
    %p370 = scmp.eq.s32.totalorder %s33, 1
    %p371 = por %p369, %p370
    %p372 = scmp.ne.s32.totalorder %s363, %s364
    %p373 = scmp.eq.s32.totalorder %s33, 0
    %p374 = por %p372, %p373
    %p375 = scmp.ne.s32.totalorder %s363, %s364
    %p376 = scmp.eq.s32.totalorder %s34, 1
    %p377 = por %p375, %p376
    %p379 = scmp.ne.s32.totalorder %s364, %s378
    %p380 = scmp.eq.s32.totalorder %s34, 0
    %p381 = por %p379, %p380
    %s383 = sadd.s32 %s382, 1
    %p386 = scmp.eq.s32.totalorder %s28, 1
    %p387 = scmp.ne.s32.totalorder %s382, %s384
    %p388 = scmp.eq.s32.totalorder %s28, 0
    %p389 = por %p387, %p388
    %p390 = scmp.ne.s32.totalorder %s382, %s384
    %p391 = scmp.eq.s32.totalorder %s33, 1
    %p392 = por %p390, %p391
    %p393 = scmp.ne.s32.totalorder %s384, %s385
    %p394 = scmp.eq.s32.totalorder %s33, 0
    %p395 = por %p393, %p394
    %p396 = scmp.ne.s32.totalorder %s384, %s385
    %p397 = scmp.eq.s32.totalorder %s34, 1
    %p398 = por %p396, %p397
    %p400 = scmp.ne.s32.totalorder %s385, %s399
    %p401 = scmp.eq.s32.totalorder %s34, 0
    %p402 = por %p400, %p401
    %s404 = sadd.s32 %s403, 1
    %p407 = scmp.eq.s32.totalorder %s28, 1
    %p408 = scmp.ne.s32.totalorder %s403, %s405
    %p409 = scmp.eq.s32.totalorder %s28, 0
    %p410 = por %p408, %p409
    %p411 = scmp.ne.s32.totalorder %s403, %s405
    %p412 = scmp.eq.s32.totalorder %s33, 1
    %p413 = por %p411, %p412
    %p414 = scmp.ne.s32.totalorder %s405, %s406
    %p415 = scmp.eq.s32.totalorder %s33, 0
    %p416 = por %p414, %p415
    %p417 = scmp.ne.s32.totalorder %s405, %s406
    %p418 = scmp.eq.s32.totalorder %s34, 1
    %p419 = por %p417, %p418
    %p421 = scmp.ne.s32.totalorder %s406, %s420
    %p422 = scmp.eq.s32.totalorder %s34, 0
    %p423 = por %p421, %p422
    %s425 = sadd.s32 %s424, 1
    %p428 = scmp.eq.s32.totalorder %s28, 1
    %p429 = scmp.ne.s32.totalorder %s424, %s426
    %p430 = scmp.eq.s32.totalorder %s28, 0
    %p431 = por %p429, %p430
    %p432 = scmp.ne.s32.totalorder %s424, %s426
    %p433 = scmp.eq.s32.totalorder %s33, 1
    %p434 = por %p432, %p433
    %p435 = scmp.ne.s32.totalorder %s426, %s427
    %p436 = scmp.eq.s32.totalorder %s33, 0
    %p437 = por %p435, %p436
    %p438 = scmp.ne.s32.totalorder %s426, %s427
    %p439 = scmp.eq.s32.totalorder %s34, 1
    %p440 = por %p438, %p439
    %p442 = scmp.ne.s32.totalorder %s427, %s441
    %p443 = scmp.eq.s32.totalorder %s34, 0
    %p444 = por %p442, %p443
    %s446 = sadd.s32 %s445, 1
    %p449 = scmp.eq.s32.totalorder %s28, 1
    %p450 = scmp.ne.s32.totalorder %s445, %s447
    %p451 = scmp.eq.s32.totalorder %s28, 0
    %p452 = por %p450, %p451
    %p453 = scmp.ne.s32.totalorder %s445, %s447
    %p454 = scmp.eq.s32.totalorder %s33, 1
    %p455 = por %p453, %p454
    %p456 = scmp.ne.s32.totalorder %s447, %s448
    %p457 = scmp.eq.s32.totalorder %s33, 0
    %p458 = por %p456, %p457
    %p459 = scmp.ne.s32.totalorder %s447, %s448
    %p460 = scmp.eq.s32.totalorder %s34, 1
    %p461 = por %p459, %p460
    %p463 = scmp.ne.s32.totalorder %s448, %s462
    %p464 = scmp.eq.s32.totalorder %s34, 0
    %p465 = por %p463, %p464
    %s467 = sadd.s32 %s466, 1
    %p470 = scmp.eq.s32.totalorder %s28, 1
    %p471 = scmp.ne.s32.totalorder %s466, %s468
    %p472 = scmp.eq.s32.totalorder %s28, 0
    %p473 = por %p471, %p472
    %p474 = scmp.ne.s32.totalorder %s466, %s468
    %p475 = scmp.eq.s32.totalorder %s33, 1
    %p476 = por %p474, %p475
    %p477 = scmp.ne.s32.totalorder %s468, %s469
    %p478 = scmp.eq.s32.totalorder %s33, 0
    %p479 = por %p477, %p478
    %p480 = scmp.ne.s32.totalorder %s468, %s469
    %p481 = scmp.eq.s32.totalorder %s34, 1
    %p482 = por %p480, %p481
    %p484 = scmp.ne.s32.totalorder %s469, %s483
    %p485 = scmp.eq.s32.totalorder %s34, 0
    %p486 = por %p484, %p485
    %s488 = sadd.s32 %s487, 1
    %p491 = scmp.eq.s32.totalorder %s28, 1
    %p492 = scmp.ne.s32.totalorder %s487, %s489
    %p493 = scmp.eq.s32.totalorder %s28, 0
    %p494 = por %p492, %p493
    %p495 = scmp.ne.s32.totalorder %s487, %s489
    %p496 = scmp.eq.s32.totalorder %s33, 1
    %p497 = por %p495, %p496
    %p498 = scmp.ne.s32.totalorder %s489, %s490
    %p499 = scmp.eq.s32.totalorder %s33, 0
    %p500 = por %p498, %p499
    %p501 = scmp.ne.s32.totalorder %s489, %s490
    %p502 = scmp.eq.s32.totalorder %s34, 1
    %p503 = por %p501, %p502
    %p505 = scmp.ne.s32.totalorder %s490, %s504
    %p506 = scmp.eq.s32.totalorder %s34, 0
    %p507 = por %p505, %p506
    %s508 = ssub.s32 %s28, %s35
    %p509 = scmp.eq.s32.totalorder %s508, 0
    %s511 = sadd.s32 %s510, 1
    %s512 = scalar_select %p509, %s510, %s511
    %p515 = pneg %p509
    %p516 = scmp.eq.s32.totalorder %s28, 1
    %p517 = por %p515, %p516
    %p518 = scmp.ne.s32.totalorder %s510, %s513
    %p519 = scmp.eq.s32.totalorder %s28, 0
    %p520 = por %p518, %p519
    %p521 = scmp.ne.s32.totalorder %s510, %s513
    %p522 = scmp.eq.s32.totalorder %s33, 1
    %p523 = por %p521, %p522
    %p524 = scmp.ne.s32.totalorder %s513, %s514
    %p525 = scmp.eq.s32.totalorder %s33, 0
    %p526 = por %p524, %p525
    %p527 = scmp.ne.s32.totalorder %s513, %s514
    %p528 = scmp.eq.s32.totalorder %s34, 1
    %p529 = por %p527, %p528
    %p531 = scmp.ne.s32.totalorder %s514, %s530
    %p532 = scmp.eq.s32.totalorder %s34, 0
    %p533 = por %p531, %p532
    %p534 = scmp.le.s32.totalorder 1, %s28
    %p535 = scmp.lt.s32.totalorder %s28, 3
    %p536 = pnand %p534, %p535
    %p537 = pneg %p536
    // Predicated region
    $region9: #{net_forward.1} parent=5 // pred_check
      _
    $region10: #{net_forward.1} parent=5 // pred_check_branch
      %539 = sbr.rel (%p536) target = $region12
    $region11: #{net_forward.1} parent=5 // pred_region
      %s540 = ssub.s32 %s28, 1
      // Predicated region
      $region13: #{net_forward.1} parent=11 // pred_check
        %p541 = pneg %p101
      $region14: #{net_forward.1} parent=11 // pred_check_branch
        %543 = sbr.rel (%p541) target = $region16
      $region15: #{net_forward.1} parent=11 // pred_region
        _
      $region16: #{net_forward.1} parent=11 // pred_fallthru
        _
      // Predicated region
      $region17: #{net_forward.1} parent=11 // pred_check
        %p544 = pneg %p122
      $region18: #{net_forward.1} parent=11 // pred_check_branch
        %546 = sbr.rel (%p544) target = $region20
      $region19: #{net_forward.1} parent=11 // pred_region
        _
      $region20: #{net_forward.1} parent=11 // pred_fallthru
        _
      // Predicated region
      $region21: #{net_forward.1} parent=11 // pred_check
        %p547 = pneg %p143
      $region22: #{net_forward.1} parent=11 // pred_check_branch
        %549 = sbr.rel (%p547) target = $region24
      $region23: #{net_forward.1} parent=11 // pred_region
        _
      $region24: #{net_forward.1} parent=11 // pred_fallthru
        _
      // Predicated region
      $region25: #{net_forward.1} parent=11 // pred_check
        %p550 = pneg %p164
      $region26: #{net_forward.1} parent=11 // pred_check_branch
        %552 = sbr.rel (%p550) target = $region28
      $region27: #{net_forward.1} parent=11 // pred_region
        _
      $region28: #{net_forward.1} parent=11 // pred_fallthru
        _
      // Predicated region
      $region29: #{net_forward.1} parent=11 // pred_check
        %p553 = pneg %p185
      $region30: #{net_forward.1} parent=11 // pred_check_branch
        %555 = sbr.rel (%p553) target = $region32
      $region31: #{net_forward.1} parent=11 // pred_region
        _
      $region32: #{net_forward.1} parent=11 // pred_fallthru
        _
      // Predicated region
      $region33: #{net_forward.1} parent=11 // pred_check
        %p556 = pneg %p206
      $region34: #{net_forward.1} parent=11 // pred_check_branch
        %558 = sbr.rel (%p556) target = $region36
      $region35: #{net_forward.1} parent=11 // pred_region
        _
      $region36: #{net_forward.1} parent=11 // pred_fallthru
        _
      // Predicated region
      $region37: #{net_forward.1} parent=11 // pred_check
        %p559 = pneg %p227
      $region38: #{net_forward.1} parent=11 // pred_check_branch
        %561 = sbr.rel (%p559) target = $region40
      $region39: #{net_forward.1} parent=11 // pred_region
        _
      $region40: #{net_forward.1} parent=11 // pred_fallthru
        _
      // Predicated region
      $region41: #{net_forward.1} parent=11 // pred_check
        %p562 = pneg %p248
      $region42: #{net_forward.1} parent=11 // pred_check_branch
        %564 = sbr.rel (%p562) target = $region44
      $region43: #{net_forward.1} parent=11 // pred_region
        _
      $region44: #{net_forward.1} parent=11 // pred_fallthru
        _
      // Predicated region
      $region45: #{net_forward.1} parent=11 // pred_check
        %p565 = pneg %p269
      $region46: #{net_forward.1} parent=11 // pred_check_branch
        %567 = sbr.rel (%p565) target = $region48
      $region47: #{net_forward.1} parent=11 // pred_region
        _
      $region48: #{net_forward.1} parent=11 // pred_fallthru
        _
      // Predicated region
      $region49: #{net_forward.1} parent=11 // pred_check
        %p568 = pneg %p290
      $region50: #{net_forward.1} parent=11 // pred_check_branch
        %570 = sbr.rel (%p568) target = $region52
      $region51: #{net_forward.1} parent=11 // pred_region
        _
      $region52: #{net_forward.1} parent=11 // pred_fallthru
        _
      // Predicated region
      $region53: #{net_forward.1} parent=11 // pred_check
        %p571 = pneg %p311
      $region54: #{net_forward.1} parent=11 // pred_check_branch
        %573 = sbr.rel (%p571) target = $region56
      $region55: #{net_forward.1} parent=11 // pred_region
        _
      $region56: #{net_forward.1} parent=11 // pred_fallthru
        _
      // Predicated region
      $region57: #{net_forward.1} parent=11 // pred_check
        %p574 = pneg %p332
      $region58: #{net_forward.1} parent=11 // pred_check_branch
        %576 = sbr.rel (%p574) target = $region60
      $region59: #{net_forward.1} parent=11 // pred_region
        _
      $region60: #{net_forward.1} parent=11 // pred_fallthru
        _
      // Predicated region
      $region61: #{net_forward.1} parent=11 // pred_check
        %p577 = pneg %p353
      $region62: #{net_forward.1} parent=11 // pred_check_branch
        %579 = sbr.rel (%p577) target = $region64
      $region63: #{net_forward.1} parent=11 // pred_region
        _
      $region64: #{net_forward.1} parent=11 // pred_fallthru
        _
      // Predicated region
      $region65: #{net_forward.1} parent=11 // pred_check
        %p580 = pneg %p374
      $region66: #{net_forward.1} parent=11 // pred_check_branch
        %582 = sbr.rel (%p580) target = $region68
      $region67: #{net_forward.1} parent=11 // pred_region
        _
      $region68: #{net_forward.1} parent=11 // pred_fallthru
        _
      // Predicated region
      $region69: #{net_forward.1} parent=11 // pred_check
        %p583 = pneg %p395
      $region70: #{net_forward.1} parent=11 // pred_check_branch
        %585 = sbr.rel (%p583) target = $region72
      $region71: #{net_forward.1} parent=11 // pred_region
        _
      $region72: #{net_forward.1} parent=11 // pred_fallthru
        _
      // Predicated region
      $region73: #{net_forward.1} parent=11 // pred_check
        %p586 = pneg %p416
      $region74: #{net_forward.1} parent=11 // pred_check_branch
        %588 = sbr.rel (%p586) target = $region76
      $region75: #{net_forward.1} parent=11 // pred_region
        _
      $region76: #{net_forward.1} parent=11 // pred_fallthru
        _
      // Predicated region
      $region77: #{net_forward.1} parent=11 // pred_check
        %p589 = pneg %p437
      $region78: #{net_forward.1} parent=11 // pred_check_branch
        %591 = sbr.rel (%p589) target = $region80
      $region79: #{net_forward.1} parent=11 // pred_region
        _
      $region80: #{net_forward.1} parent=11 // pred_fallthru
        _
      // Predicated region
      $region81: #{net_forward.1} parent=11 // pred_check
        %p592 = pneg %p458
      $region82: #{net_forward.1} parent=11 // pred_check_branch
        %594 = sbr.rel (%p592) target = $region84
      $region83: #{net_forward.1} parent=11 // pred_region
        _
      $region84: #{net_forward.1} parent=11 // pred_fallthru
        _
      // Predicated region
      $region85: #{net_forward.1} parent=11 // pred_check
        %p595 = pneg %p479
      $region86: #{net_forward.1} parent=11 // pred_check_branch
        %597 = sbr.rel (%p595) target = $region88
      $region87: #{net_forward.1} parent=11 // pred_region
        _
      $region88: #{net_forward.1} parent=11 // pred_fallthru
        _
      // Predicated region
      $region89: #{net_forward.1} parent=11 // pred_check
        %p598 = pneg %p500
      $region90: #{net_forward.1} parent=11 // pred_check_branch
        %600 = sbr.rel (%p598) target = $region92
      $region91: #{net_forward.1} parent=11 // pred_region
        _
      $region92: #{net_forward.1} parent=11 // pred_fallthru
        _
    $region12: #{net_forward.1} parent=5 // pred_fallthru
      _
    %p601 = scmp.lt.s32.totalorder %s28, 2
    // Predicated region
    $region93: #{net_forward.1} parent=5 // pred_check
      %p602 = pneg %p601
    $region94: #{net_forward.1} parent=5 // pred_check_branch
      %604 = sbr.rel (%p602) target = $region96
    $region95: #{net_forward.1} parent=5 // pred_region
      // Predicated region
      $region97: #{net_forward.1} parent=95 // pred_check
        %p605 = pneg %p48
      $region98: #{net_forward.1} parent=95 // pred_check_branch
        %607 = sbr.rel (%p605) target = $region100
      $region99: #{net_forward.1} parent=95 // pred_region
        %s608 = smul.u32 2, %s28
        %p609 = scmp.lt.s32.totalorder %s608, 3
        %s610 = scalar_select %p609, %s608, 3
        %s611 = smul.addr %s610, 2
        %s612 = smul.addr %s611, 8
        %s613 = scalar_lea.vmem %s0, %s612
        %s614 = smul.u32 2, %s28
      $region100: #{net_forward.1} parent=95 // pred_fallthru
        _
      // Predicated region
      $region101: #{net_forward.1} parent=95 // pred_check
        %p615 = pneg %p74
      $region102: #{net_forward.1} parent=95 // pred_check_branch
        %617 = sbr.rel (%p615) target = $region104
      $region103: #{net_forward.1} parent=95 // pred_region
        %s618 = smul.u32 2, %s28
        %p619 = scmp.lt.s32.totalorder %s618, 3
        %s620 = scalar_select %p619, %s618, 3
        %s621 = smul.addr %s620, 2
        %s622 = smul.addr %s621, 8
        %s623 = scalar_lea.vmem %s1, %s622
        %s624 = smul.u32 2, %s28
      $region104: #{net_forward.1} parent=95 // pred_fallthru
        _
    $region96: #{net_forward.1} parent=5 // pred_fallthru
      _
    %p625 = scmp.le.s32.totalorder 1, %s28
    %p626 = scmp.lt.s32.totalorder %s28, 3
    %p627 = pnand %p625, %p626
    %p628 = pneg %p627
    // Predicated region
    $region105: #{net_forward.1} parent=5 // pred_check
      _
    $region106: #{net_forward.1} parent=5 // pred_check_branch
      %630 = sbr.rel (%p627) target = $region108
    $region107: #{net_forward.1} parent=5 // pred_region
      %s631 = ssub.s32 %s28, 1
      %s632 = smul.u32 2, %s33
      %p633 = scmp.lt.s32.totalorder %s632, 3
      %s634 = scalar_select %p633, %s632, 3
      %s635 = smul.addr %s634, 2
      %s636 = smul.addr %s635, 8
      %s637 = scalar_lea.vmem %s0, %s636
      %p638 = pneg %p54
      %p639 = pneg %p51
      %s640 = smul.u32 2, %s33
      %p641 = scmp.lt.s32.totalorder %s640, 3
      %s642 = scalar_select %p641, %s640, 3
      %s643 = smul.addr %s642, 2
      %s644 = smul.addr %s643, 8
      %s645 = scalar_lea.vmem %s1, %s644
      %p646 = pneg %p80
      %p647 = pneg %p77
      %p648 = pneg %p101
      %p649 = pneg %p98
      %p650 = pneg %p122
      %p651 = pneg %p119
      %p652 = pneg %p143
      %p653 = pneg %p140
      %p654 = pneg %p164
      %p655 = pneg %p161
      %p656 = pneg %p185
      %p657 = pneg %p182
      %p658 = pneg %p206
      %p659 = pneg %p203
      %p660 = pneg %p227
      %p661 = pneg %p224
      %p662 = pneg %p248
      %p663 = pneg %p245
      %p664 = pneg %p269
      %p665 = pneg %p266
      %p666 = pneg %p290
      %p667 = pneg %p287
      %p668 = pneg %p311
      %p669 = pneg %p308
      %p670 = pneg %p332
      %p671 = pneg %p329
      %p672 = pneg %p353
      %p673 = pneg %p350
      %p674 = pneg %p374
      %p675 = pneg %p371
      %p676 = pneg %p395
      %p677 = pneg %p392
      %p678 = pneg %p416
      %p679 = pneg %p413
      %p680 = pneg %p437
      %p681 = pneg %p434
      %p682 = pneg %p458
      %p683 = pneg %p455
      %p684 = pneg %p479
      %p685 = pneg %p476
      %p686 = pneg %p500
      %p687 = pneg %p497
      %p688 = pneg %p526
      %p689 = pneg %p523
      %s690 = smul.u32 2, %s33
      %p691 = scmp.lt.s32.totalorder %s690, 3
      %s692 = scalar_select %p691, %s690, 3
      %s693 = smul.addr %s692, 2
      %s694 = smul.addr %s693, 8
      %s695 = scalar_lea.vmem %s22, %s694
      %s696 = smul.u32 2, %s33
      %p697 = scmp.lt.s32.totalorder %s696, 3
      %s698 = scalar_select %p697, %s696, 3
      %s699 = smul.addr %s698, 2
      %s700 = smul.addr %s699, 8
      %s701 = scalar_lea.vmem %s0, %s700
      %s702 = smul.u32 2, %s33
      %s703 = smul.u32 2, %s33
      %p704 = scmp.lt.s32.totalorder %s703, 3
      %s705 = scalar_select %p704, %s703, 3
      %s706 = smul.addr %s705, 2
      %s707 = smul.addr %s706, 8
      %s708 = scalar_lea.vmem %s1, %s707
      %s709 = smul.u32 2, %s33
      %s710 = smul.u32 2, %s33
      %p711 = scmp.lt.s32.totalorder %s710, 3
      %s712 = scalar_select %p711, %s710, 3
      %s713 = smul.addr %s712, 2
      %s714 = smul.addr %s713, 8
      %s715 = scalar_lea.vmem %s22, %s714
      %s716 = smul.u32 2, %s33
      %v718 = vld [vmem:[%s708] sm:$0xff]
      %v719 = vld [vmem:[%s708 + $0x8] sm:$0xff]
      %v720 = vld [vmem:[%s708 + $0x10] sm:$0xff]
      %v721 = vld [vmem:[%s708 + $0x18] sm:$0xff]
      %v722 = vld [vmem:[%s701] sm:$0xff]
      %v723 = vld [vmem:[%s701 + $0x8] sm:$0xff]
      %v724 = vld [vmem:[%s701 + $0x10] sm:$0xff]
      %v725 = vld [vmem:[%s701 + $0x18] sm:$0xff]
      %vm726 = vcmask 31744
      %v727 = vsel %vm726, %v718, 0.0
      %v728 = vsel %vm726, %v719, 0.0
      %v729 = vadd.f32 %v727, %v728
      %v730 = vrot.slane %v729, 4
      %v731 = vadd.f32 %v729, %v730
      %v732 = vrot.slane %v731, 2
      %v733 = vadd.f32 %v731, %v732
      %v734 = vrot.slane %v733, 1
      %v735 = vadd.f32 %v733, %v734
      %v736 = vsel %vm726, %v720, 0.0
      %v737 = vsel %vm726, %v721, 0.0
      %v738 = vadd.f32 %v736, %v737
      %v739 = vrot.slane %v738, 4
      %v740 = vadd.f32 %v738, %v739
      %v741 = vrot.slane %v740, 2
      %v742 = vadd.f32 %v740, %v741
      %v743 = vrot.slane %v742, 1
      %v744 = vadd.f32 %v742, %v743
      %v745 = vrcp.pop 16.0
      %v746 = vmul.f32 %v735, %v745
      %v747 = vmul.f32 %v744, %v745
      %v748 = vsub.f32 %v718, %v746
      %v749 = vsub.f32 %v719, %v746
      %v750 = vsub.f32 %v720, %v747
      %v751 = vsub.f32 %v721, %v747
      %v752 = vmul.f32 %v748, %v748
      %v753 = vmul.f32 %v749, %v749
      %v754 = vmul.f32 %v750, %v750
      %v755 = vmul.f32 %v751, %v751
      %v756 = vsel %vm726, %v752, 0.0
      %v757 = vsel %vm726, %v753, 0.0
      %v758 = vadd.f32 %v756, %v757
      %v759 = vrot.slane %v758, 4
      %v760 = vadd.f32 %v758, %v759
      %v761 = vrot.slane %v760, 2
      %v762 = vadd.f32 %v760, %v761
      %v763 = vrot.slane %v762, 1
      %v764 = vadd.f32 %v762, %v763
      %v765 = vsel %vm726, %v754, 0.0
      %v766 = vsel %vm726, %v755, 0.0
      %v767 = vadd.f32 %v765, %v766
      %v768 = vrot.slane %v767, 4
      %v769 = vadd.f32 %v767, %v768
      %v770 = vrot.slane %v769, 2
      %v771 = vadd.f32 %v769, %v770
      %v772 = vrot.slane %v771, 1
      %v773 = vadd.f32 %v771, %v772
      %v774 = vmul.f32 %v764, %v745
      %v775 = vmul.f32 %v773, %v745
      %v776 = vadd.f32 %v774, 1e-05
      %v777 = vadd.f32 %v775, 1e-05
      %v778 = vrsqrt.pop %v776
      %v779 = vmul.f32 %v776, %v778
      %vm780 = vcmp.eq.f32.partialorder %v776, inf
      %v781 = vsel %vm780, %v776, %v779
      %vm782 = vcmp.eq.f32.partialorder %v776, 0.0
      %v783 = vand.u32 %v776, 2147483648
      %v784 = vsel %vm782, %v783, %v781
      %v785 = vrsqrt.pop %v777
      %v786 = vmul.f32 %v777, %v785
      %vm787 = vcmp.eq.f32.partialorder %v777, inf
      %v788 = vsel %vm787, %v777, %v786
      %vm789 = vcmp.eq.f32.partialorder %v777, 0.0
      %v790 = vand.u32 %v777, 2147483648
      %v791 = vsel %vm789, %v790, %v788
      %v792 = vrcp.pop %v784
      %v793 = vmul.f32 1.0, %v792
      %v794 = vrcp.pop %v791
      %v795 = vmul.f32 1.0, %v794
      %v796 = vld [vmem:[%s20] sm:$0x1]
      %v797 = vld [vmem:[%s21] sm:$0x1]
      %v798 = vmul.f32 %v748, %v793
      %v799 = vmul.f32 %v749, %v793
      %v800 = vmul.f32 %v750, %v795
      %v801 = vmul.f32 %v751, %v795
      %v803 = vlaneseq
      %v804 = vshrl.u32 %v803, 7
      %v805 = vsub.s32 0, %v804
      %v806 = vrot.slane %v796, %v805
      %v808 = vmul.f32 %v798, %v806
      %v809 = vmul.f32 %v799, %v806
      %v810 = vmul.f32 %v800, %v806
      %v811 = vmul.f32 %v801, %v806
      %v813 = vlaneseq
      %v814 = vshrl.u32 %v813, 7
      %v815 = vsub.s32 0, %v814
      %v816 = vrot.slane %v797, %v815
      %v818 = vadd.f32 %v808, %v816
      %v819 = vadd.f32 %v809, %v816
      %v820 = vadd.f32 %v810, %v816
      %v821 = vadd.f32 %v811, %v816
      %v822 = vsub.f32 %v722, %v746
      %v823 = vsub.f32 %v723, %v746
      %v824 = vsub.f32 %v724, %v747
      %v825 = vsub.f32 %v725, %v747
      %v826 = vmul.f32 %v822, %v793
      %v827 = vmul.f32 %v823, %v793
      %v828 = vmul.f32 %v824, %v795
      %v829 = vmul.f32 %v825, %v795
      %v830 = vmul.f32 %v826, %v806
      %v831 = vmul.f32 %v827, %v806
      %v832 = vmul.f32 %v828, %v806
      %v833 = vmul.f32 %v829, %v806
      %v834 = vadd.f32 %v830, %v816
      %v835 = vadd.f32 %v831, %v816
      %v836 = vadd.f32 %v832, %v816
      %v837 = vadd.f32 %v833, %v816
      %v838 = vld [vmem:[%s2] sm:$0x3]
      %v839 = vpack.c.bf16 %v835, %v834
      %v840 = vpack.c.bf16 %v837, %v836
      %v841 = vld [vmem:[%s3] sm:$0x1]
      %v843 = vlaneseq
      %v844 = vshrl.u32 %v843, 7
      %v845 = vsub.s32 0, %v844
      %v846 = vrot.slane %v841, %v845
      %v849 = vsel %vm726, %v839, 0
      %v852 = vsel %vm726, %v840, 0
      %vm854 = vcmask 1041408
      %v856 = vsel %vm854, %v838, 0
      %858 = vmatprep.subr.bf16.mxu0 0
      %859 = vmatpush1.bf16.msra.mxu0 %v856
      %860 = vmatprep.subr.bf16.mxu0 0
      %861 = vmatpush1.bf16.msra.mxu0 0
      %862 = vmatprep.subr.bf16.mxu0 0
      %863 = vmatpush1.bf16.msra.mxu0 0
      %864 = vmatprep.subr.bf16.mxu0 0
      %865 = vmatpush1.bf16.msra.mxu0 0
      %866 = vmatprep.subr.bf16.mxu0 0
      %867 = vmatpush1.bf16.msra.mxu0 0
      %868 = vmatprep.subr.bf16.mxu0 0
      %869 = vmatpush1.bf16.msra.mxu0 0
      %870 = vmatprep.subr.bf16.mxu0 0
      %871 = vmatpush1.bf16.msra.mxu0 0
      %872 = vmatprep.subr.bf16.mxu0 0
      %873 = vmatpush1.bf16.msra.mxu0 0
      %874 = vmatprep.subr.bf16.mxu0 0
      %875 = vmatpush1.bf16.msra.mxu0 0
      %876 = vmatprep.subr.bf16.mxu0 0
      %877 = vmatpush1.bf16.msra.mxu0 0
      %878 = vmatprep.subr.bf16.mxu0 0
      %879 = vmatpush1.bf16.msra.mxu0 0
      %880 = vmatprep.subr.bf16.mxu0 0
      %881 = vmatpush1.bf16.msra.mxu0 0
      %882 = vmatprep.subr.bf16.mxu0 0
      %883 = vmatpush1.bf16.msra.mxu0 0
      %884 = vmatprep.subr.bf16.mxu0 0
      %885 = vmatpush1.bf16.msra.mxu0 0
      %886 = vmatprep.subr.bf16.mxu0 0
      %887 = vmatpush1.bf16.msra.mxu0 0
      %888 = vmatprep.subr.bf16.mxu0 0
      %889 = vmatpush1.bf16.msra.mxu0 0
      %890 = vmatprep.mubr.bf16.mxu0 0
      %891 = vmatmul.mubr.bf16.gmra.mrb[0].mxu0 %v849
      %v892 = vpop.f32.mrb[0].mxu0
      %v893 = vadd.f32 %v846, %v892
      %v894 = vpop.f32.mrb[0].mxu0
      %v895 = vpop.f32.mrb[0].mxu0
      %v896 = vadd.f32 %v846, %v895
      %v897 = vpop.f32.mrb[0].mxu0
      %898 = vmatprep.mubr.bf16.mxu0 0
      %899 = vmatmul.mubr.bf16.gmra.mrb[0].mxu0 %v852
      %v900 = vpop.f32.mrb[0].mxu0
      %v901 = vadd.f32 %v846, %v900
      %v902 = vpop.f32.mrb[0].mxu0
      %v903 = vpop.f32.mrb[0].mxu0
      %v904 = vadd.f32 %v846, %v903
      %v905 = vpop.f32.mrb[0].mxu0
      %906 = vdwg.mxu0
      %v907 = vld [vmem:[%s4] sm:$0xf]
      %v908 = vld [vmem:[%s4 + $0x4] sm:$0xf]
      %v909 = vld [vmem:[%s4 + $0x8] sm:$0xf]
      %v910 = vld [vmem:[%s4 + $0xc] sm:$0xf]
      %v911 = vpack.c.bf16 %v896, %v893
      %v912 = vpack.c.bf16 %v904, %v901
      %v913 = vld [vmem:[%s5] sm:$0x1]
      %v915 = vlaneseq
      %v916 = vshrl.u32 %v915, 7
      %v917 = vsub.s32 0, %v916
      %v918 = vrot.slane %v913, %v917
      %v924 = vunpack.c.l.b16 %v907
      %v925 = vunpack.c.l.b16 %v908
      %v926 = vunpack.c.l.b16 %v909
      %v927 = vunpack.c.l.b16 %v910
      %v928 = vpack.c.b16 %v925, %v924
      %v929 = vpack.c.b16 %v927, %v926
      %vm932 = vcmask 261120
      %v934 = vsel %vm932, %v911, 0
      %v937 = vsel %vm932, %v912, 0
      %939 = vmatprep.subr.bf16.mxu0 0
      %940 = vmatpush1.bf16.msra.mxu0 %v928
      %941 = vmatprep.subr.bf16.mxu0 0
      %942 = vmatpush1.bf16.msra.mxu0 %v929
      %943 = vmatprep.subr.bf16.mxu0 0
      %944 = vmatpush1.bf16.msra.mxu0 0
      %945 = vmatprep.subr.bf16.mxu0 0
      %946 = vmatpush1.bf16.msra.mxu0 0
      %947 = vmatprep.subr.bf16.mxu0 0
      %948 = vmatpush1.bf16.msra.mxu0 0
      %949 = vmatprep.subr.bf16.mxu0 0
      %950 = vmatpush1.bf16.msra.mxu0 0
      %951 = vmatprep.subr.bf16.mxu0 0
      %952 = vmatpush1.bf16.msra.mxu0 0
      %953 = vmatprep.subr.bf16.mxu0 0
      %954 = vmatpush1.bf16.msra.mxu0 0
      %955 = vmatprep.subr.bf16.mxu0 0
      %956 = vmatpush1.bf16.msra.mxu0 0
      %957 = vmatprep.subr.bf16.mxu0 0
      %958 = vmatpush1.bf16.msra.mxu0 0
      %959 = vmatprep.subr.bf16.mxu0 0
      %960 = vmatpush1.bf16.msra.mxu0 0
      %961 = vmatprep.subr.bf16.mxu0 0
      %962 = vmatpush1.bf16.msra.mxu0 0
      %963 = vmatprep.subr.bf16.mxu0 0
      %964 = vmatpush1.bf16.msra.mxu0 0
      %965 = vmatprep.subr.bf16.mxu0 0
      %966 = vmatpush1.bf16.msra.mxu0 0
      %967 = vmatprep.subr.bf16.mxu0 0
      %968 = vmatpush1.bf16.msra.mxu0 0
      %969 = vmatprep.subr.bf16.mxu0 0
      %970 = vmatpush1.bf16.msra.mxu0 0
      %971 = vmatprep.mubr.bf16.mxu0 0
      %972 = vmatmul.mubr.bf16.gmra.mrb[0].mxu0 %v934
      %v973 = vpop.f32.mrb[0].mxu0
      %v974 = vadd.f32 %v918, %v973
      %v975 = vpop.f32.mrb[0].mxu0
      %v976 = vpop.f32.mrb[0].mxu0
      %v977 = vadd.f32 %v918, %v976
      %v978 = vpop.f32.mrb[0].mxu0
      %979 = vmatprep.mubr.bf16.mxu0 0
      %980 = vmatmul.mubr.bf16.gmra.mrb[0].mxu0 %v937
      %v981 = vpop.f32.mrb[0].mxu0
      %v982 = vadd.f32 %v918, %v981
      %v983 = vpop.f32.mrb[0].mxu0
      %v984 = vpop.f32.mrb[0].mxu0
      %v985 = vadd.f32 %v918, %v984
      %v986 = vpop.f32.mrb[0].mxu0
      %987 = vdwg.mxu0
      %v988 = vmax.f32 %v974, 0.0
      %v989 = vmax.f32 %v977, 0.0
      %v990 = vmax.f32 %v982, 0.0
      %v991 = vmax.f32 %v985, 0.0
      %v996 = vrot.slane %v988, 6
      %v997 = vrot.slane %v989, 6
      %v998 = vsel %vm854, %v996, %v997
      %v999 = vrot.slane %v990, 6
      %v1000 = vrot.slane %v991, 6
      %v1001 = vsel %vm854, %v999, %v1000
      %v1008 = vsel %vm854, 0.0, %v996
      %v1009 = vsel %vm854, 0.0, %v999
      %v1010 = vsel %vm854, %v997, 0.0
      %v1011 = vsel %vm854, %v1000, 0.0
      %vm1016 = vcmask 1046528
      %v1017 = vrot.slane %v1008, 1
      %v1018 = vrot.slane %v998, 1
      %v1019 = vsel %vm1016, %v1017, %v1018
      %v1020 = vrot.slane %v1010, 1
      %v1021 = vsel %vm1016, %v1018, %v1020
      %v1022 = vrot.slane %v1009, 1
      %v1023 = vrot.slane %v1001, 1
      %v1024 = vsel %vm1016, %v1022, %v1023
      %v1025 = vrot.slane %v1011, 1
      %v1026 = vsel %vm1016, %v1023, %v1025
      %1027 = vrot.lane.b32.xlu0 %v1019, 4
      %v1028 = vpop.permute.xlu0 %1027
      %1029 = vrot.lane.b32.xlu0 %v1021, 4
      %v1030 = vpop.permute.xlu0 %1029
      %1031 = vrot.lane.b32.xlu0 %v1024, 4
      %v1032 = vpop.permute.xlu0 %1031
      %1033 = vrot.lane.b32.xlu0 %v1026, 4
      %v1034 = vpop.permute.xlu0 %1033
      %vm1039 = vcmask 1045504
      %v1040 = vrot.slane %v1008, 2
      %v1041 = vrot.slane %v998, 2
      %v1042 = vsel %vm1039, %v1040, %v1041
      %v1043 = vrot.slane %v1010, 2
      %v1044 = vsel %vm1039, %v1041, %v1043
      %v1045 = vrot.slane %v1009, 2
      %v1046 = vrot.slane %v1001, 2
      %v1047 = vsel %vm1039, %v1045, %v1046
      %v1048 = vrot.slane %v1011, 2
      %v1049 = vsel %vm1039, %v1046, %v1048
      %1050 = vrot.lane.b32.xlu0 %v1042, 8
      %v1051 = vpop.permute.xlu0 %1050
      %1052 = vrot.lane.b32.xlu0 %v1044, 8
      %v1053 = vpop.permute.xlu0 %1052
      %1054 = vrot.lane.b32.xlu0 %v1047, 8
      %v1055 = vpop.permute.xlu0 %1054
      %1056 = vrot.lane.b32.xlu0 %v1049, 8
      %v1057 = vpop.permute.xlu0 %1056
      %vm1062 = vcmask 1044480
      %v1063 = vrot.slane %v1008, 3
      %v1064 = vrot.slane %v998, 3
      %v1065 = vsel %vm1062, %v1063, %v1064
      %v1066 = vrot.slane %v1010, 3
      %v1067 = vsel %vm1062, %v1064, %v1066
      %v1068 = vrot.slane %v1009, 3
      %v1069 = vrot.slane %v1001, 3
      %v1070 = vsel %vm1062, %v1068, %v1069
      %v1071 = vrot.slane %v1011, 3
      %v1072 = vsel %vm1062, %v1069, %v1071
      %1073 = vrot.lane.b32.xlu0 %v1065, 12
      %v1074 = vpop.permute.xlu0 %1073
      %1075 = vrot.lane.b32.xlu0 %v1067, 12
      %v1076 = vpop.permute.xlu0 %1075
      %1077 = vrot.lane.b32.xlu0 %v1070, 12
      %v1078 = vpop.permute.xlu0 %1077
      %1079 = vrot.lane.b32.xlu0 %v1072, 12
      %v1080 = vpop.permute.xlu0 %1079
      %vm1085 = vcmask 1043456
      %v1086 = vrot.slane %v1008, 4
      %v1087 = vrot.slane %v998, 4
      %v1088 = vsel %vm1085, %v1086, %v1087
      %v1089 = vrot.slane %v1010, 4
      %v1090 = vsel %vm1085, %v1087, %v1089
      %v1091 = vrot.slane %v1009, 4
      %v1092 = vrot.slane %v1001, 4
      %v1093 = vsel %vm1085, %v1091, %v1092
      %v1094 = vrot.slane %v1011, 4
      %v1095 = vsel %vm1085, %v1092, %v1094
      %1096 = vrot.lane.b32.xlu0 %v1088, 16
      %v1097 = vpop.permute.xlu0 %1096
      %1098 = vrot.lane.b32.xlu0 %v1090, 16
      %v1099 = vpop.permute.xlu0 %1098
      %1100 = vrot.lane.b32.xlu0 %v1093, 16
      %v1101 = vpop.permute.xlu0 %1100
      %1102 = vrot.lane.b32.xlu0 %v1095, 16
      %v1103 = vpop.permute.xlu0 %1102
      %v1108 = vsel %vm726, %v1008, %v1028
      %v1109 = vsel %vm726, %v998, %v1030
      %v1110 = vsel %vm726, %v1009, %v1032
      %v1111 = vsel %vm726, %v1001, %v1034
      %vm1112 = vcmask 64512
      %v1113 = vsel %vm1112, %v1108, %v1051
      %v1114 = vsel %vm1112, %v1109, %v1053
      %v1115 = vsel %vm1112, %v1110, %v1055
      %v1116 = vsel %vm1112, %v1111, %v1057
      %vm1117 = vcmask 97280
      %v1118 = vsel %vm1117, %v1113, %v1074
      %v1119 = vsel %vm1117, %v1114, %v1076
      %v1120 = vsel %vm1117, %v1115, %v1078
      %v1121 = vsel %vm1117, %v1116, %v1080
      %vm1122 = vcmask 130048
      %v1123 = vsel %vm1122, %v1118, %v1097
      %v1124 = vsel %vm1122, %v1119, %v1099
      %v1125 = vsel %vm1122, %v1120, %v1101
      %v1126 = vsel %vm1122, %v1121, %v1103
      %v1127 = vld [vmem:[%s6] sm:$0xf]
      %v1128 = vld [vmem:[%s6 + $0x4] sm:$0xf]
      %v1129 = vld [vmem:[%s6 + $0x8] sm:$0x3]
      %v1130 = vpack.c.bf16 %v1124, %v1123
      %v1131 = vpack.c.bf16 %v1126, %v1125
      %v1132 = vld [vmem:[%s7] sm:$0x1]
      %v1134 = vlaneseq
      %v1135 = vshrl.u32 %v1134, 7
      %v1136 = vsub.s32 0, %v1135
      %v1137 = vrot.slane %v1132, %v1136
      %v1142 = vunpack.c.l.b16 %v1127
      %v1143 = vunpack.c.l.b16 %v1128
      %v1144 = vunpack.c.l.b16 %v1129
      %v1145 = vpack.c.b16 %v1143, %v1142
      %v1146 = vpack.c.b16 %v1144, %v1144
      %vm1148 = vcmask 162816
      %v1150 = vsel %vm1148, %v1130, 0
      %v1153 = vsel %vm1148, %v1131, 0
      %v1156 = vsel %vm854, %v1146, 0
      %1158 = vmatprep.subr.bf16.mxu0 0
      %1159 = vmatpush1.bf16.msra.mxu0 %v1145
      %1160 = vmatprep.subr.bf16.mxu0 0
      %1161 = vmatpush1.bf16.msra.mxu0 %v1156
      %1162 = vmatprep.subr.bf16.mxu0 0
      %1163 = vmatpush1.bf16.msra.mxu0 0
      %1164 = vmatprep.subr.bf16.mxu0 0
      %1165 = vmatpush1.bf16.msra.mxu0 0
      %1166 = vmatprep.subr.bf16.mxu0 0
      %1167 = vmatpush1.bf16.msra.mxu0 0
      %1168 = vmatprep.subr.bf16.mxu0 0
      %1169 = vmatpush1.bf16.msra.mxu0 0
      %1170 = vmatprep.subr.bf16.mxu0 0
      %1171 = vmatpush1.bf16.msra.mxu0 0
      %1172 = vmatprep.subr.bf16.mxu0 0
      %1173 = vmatpush1.bf16.msra.mxu0 0
      %1174 = vmatprep.subr.bf16.mxu0 0
      %1175 = vmatpush1.bf16.msra.mxu0 0
      %1176 = vmatprep.subr.bf16.mxu0 0
      %1177 = vmatpush1.bf16.msra.mxu0 0
      %1178 = vmatprep.subr.bf16.mxu0 0
      %1179 = vmatpush1.bf16.msra.mxu0 0
      %1180 = vmatprep.subr.bf16.mxu0 0
      %1181 = vmatpush1.bf16.msra.mxu0 0
      %1182 = vmatprep.subr.bf16.mxu0 0
      %1183 = vmatpush1.bf16.msra.mxu0 0
      %1184 = vmatprep.subr.bf16.mxu0 0
      %1185 = vmatpush1.bf16.msra.mxu0 0
      %1186 = vmatprep.subr.bf16.mxu0 0
      %1187 = vmatpush1.bf16.msra.mxu0 0
      %1188 = vmatprep.subr.bf16.mxu0 0
      %1189 = vmatpush1.bf16.msra.mxu0 0
      %1190 = vmatprep.mubr.bf16.mxu0 0
      %1191 = vmatmul.mubr.bf16.gmra.mrb[0].mxu0 %v1150
      %v1192 = vpop.f32.mrb[0].mxu0
      %v1193 = vadd.f32 %v1137, %v1192
      %v1194 = vpop.f32.mrb[0].mxu0
      %v1195 = vpop.f32.mrb[0].mxu0
      %v1196 = vadd.f32 %v1137, %v1195
      %v1197 = vpop.f32.mrb[0].mxu0
      %1198 = vmatprep.mubr.bf16.mxu0 0
      %1199 = vmatmul.mubr.bf16.gmra.mrb[0].mxu0 %v1153
      %v1200 = vpop.f32.mrb[0].mxu0
      %v1201 = vadd.f32 %v1137, %v1200
      %v1202 = vpop.f32.mrb[0].mxu0
      %v1203 = vpop.f32.mrb[0].mxu0
      %v1204 = vadd.f32 %v1137, %v1203
      %v1205 = vpop.f32.mrb[0].mxu0
      %1206 = vdwg.mxu0
      %v1207 = vmax.f32 %v1193, 0.0
      %v1208 = vmax.f32 %v1196, 0.0
      %v1209 = vmax.f32 %v1201, 0.0
      %v1210 = vmax.f32 %v1204, 0.0
      %v1211 = vld [vmem:[%s8] sm:$0x3]
      %v1212 = vpack.c.bf16 %v1208, %v1207
      %v1213 = vpack.c.bf16 %v1210, %v1209
      %v1214 = vld [vmem:[%s9] sm:$0x1]
      %v1216 = vlaneseq
      %v1217 = vshrl.u32 %v1216, 7
      %v1218 = vsub.s32 0, %v1217
      %v1219 = vrot.slane %v1214, %v1218
      %v1222 = vsel %vm726, %v1212, 0
      %v1225 = vsel %vm726, %v1213, 0
      %v1228 = vsel %vm854, %v1211, 0
      %1230 = vmatprep.subr.bf16.mxu0 0
      %1231 = vmatpush1.bf16.msra.mxu0 %v1228
      %1232 = vmatprep.subr.bf16.mxu0 0
      %1233 = vmatpush1.bf16.msra.mxu0 0
      %1234 = vmatprep.subr.bf16.mxu0 0
      %1235 = vmatpush1.bf16.msra.mxu0 0
      %1236 = vmatprep.subr.bf16.mxu0 0
      %1237 = vmatpush1.bf16.msra.mxu0 0
      %1238 = vmatprep.subr.bf16.mxu0 0
      %1239 = vmatpush1.bf16.msra.mxu0 0
      %1240 = vmatprep.subr.bf16.mxu0 0
      %1241 = vmatpush1.bf16.msra.mxu0 0
      %1242 = vmatprep.subr.bf16.mxu0 0
      %1243 = vmatpush1.bf16.msra.mxu0 0
      %1244 = vmatprep.subr.bf16.mxu0 0
      %1245 = vmatpush1.bf16.msra.mxu0 0
      %1246 = vmatprep.subr.bf16.mxu0 0
      %1247 = vmatpush1.bf16.msra.mxu0 0
      %1248 = vmatprep.subr.bf16.mxu0 0
      %1249 = vmatpush1.bf16.msra.mxu0 0
      %1250 = vmatprep.subr.bf16.mxu0 0
      %1251 = vmatpush1.bf16.msra.mxu0 0
      %1252 = vmatprep.subr.bf16.mxu0 0
      %1253 = vmatpush1.bf16.msra.mxu0 0
      %1254 = vmatprep.subr.bf16.mxu0 0
      %1255 = vmatpush1.bf16.msra.mxu0 0
      %1256 = vmatprep.subr.bf16.mxu0 0
      %1257 = vmatpush1.bf16.msra.mxu0 0
      %1258 = vmatprep.subr.bf16.mxu0 0
      %1259 = vmatpush1.bf16.msra.mxu0 0
      %1260 = vmatprep.subr.bf16.mxu0 0
      %1261 = vmatpush1.bf16.msra.mxu0 0
      %1262 = vmatprep.mubr.bf16.mxu0 0
      %1263 = vmatmul.mubr.bf16.gmra.mrb[0].mxu0 %v1222
      %v1264 = vpop.f32.mrb[0].mxu0
      %v1265 = vadd.f32 %v1219, %v1264
      %v1266 = vpop.f32.mrb[0].mxu0
      %v1267 = vpop.f32.mrb[0].mxu0
      %v1268 = vadd.f32 %v1219, %v1267
      %v1269 = vpop.f32.mrb[0].mxu0
      %1270 = vmatprep.mubr.bf16.mxu0 0
      %1271 = vmatmul.mubr.bf16.gmra.mrb[0].mxu0 %v1225
      %v1272 = vpop.f32.mrb[0].mxu0
      %v1273 = vadd.f32 %v1219, %v1272
      %v1274 = vpop.f32.mrb[0].mxu0
      %v1275 = vpop.f32.mrb[0].mxu0
      %v1276 = vadd.f32 %v1219, %v1275
      %v1277 = vpop.f32.mrb[0].mxu0
      %1278 = vdwg.mxu0
      %v1279 = vadd.f32 %v893, %v1265
      %v1280 = vadd.f32 %v896, %v1268
      %v1281 = vadd.f32 %v901, %v1273
      %v1282 = vadd.f32 %v904, %v1276
      %v1283 = vmax.f32 %v1279, 0.0
      %v1284 = vmax.f32 %v1280, 0.0
      %v1285 = vmax.f32 %v1281, 0.0
      %v1286 = vmax.f32 %v1282, 0.0
      %s1287 = scalar_lea.vmem %s4, 16
      %v1288 = vld [vmem:[%s1287] sm:$0xf]
      %v1289 = vld [vmem:[%s1287 + $0x4] sm:$0xf]
      %v1290 = vld [vmem:[%s1287 + $0x8] sm:$0xf]
      %v1291 = vld [vmem:[%s1287 + $0xc] sm:$0xf]
      %v1292 = vpack.c.bf16 %v1284, %v1283
      %v1293 = vpack.c.bf16 %v1286, %v1285
      %s1294 = scalar_lea.vmem %s5, 1
      %v1295 = vld [vmem:[%s1294] sm:$0x1]
      %v1297 = vlaneseq
      %v1298 = vshrl.u32 %v1297, 7
      %v1299 = vsub.s32 0, %v1298
      %v1300 = vrot.slane %v1295, %v1299
      %v1306 = vunpack.c.l.b16 %v1288
      %v1307 = vunpack.c.l.b16 %v1289
      %v1308 = vunpack.c.l.b16 %v1290
      %v1309 = vunpack.c.l.b16 %v1291
      %v1310 = vpack.c.b16 %v1307, %v1306
      %v1311 = vpack.c.b16 %v1309, %v1308
      %v1315 = vsel %vm932, %v1292, 0
      %v1318 = vsel %vm932, %v1293, 0
      %1320 = vmatprep.subr.bf16.mxu0 0
      %1321 = vmatpush1.bf16.msra.mxu0 %v1310
      %1322 = vmatprep.subr.bf16.mxu0 0
      %1323 = vmatpush1.bf16.msra.mxu0 %v1311
      %1324 = vmatprep.subr.bf16.mxu0 0
      %1325 = vmatpush1.bf16.msra.mxu0 0
      %1326 = vmatprep.subr.bf16.mxu0 0
      %1327 = vmatpush1.bf16.msra.mxu0 0
      %1328 = vmatprep.subr.bf16.mxu0 0
      %1329 = vmatpush1.bf16.msra.mxu0 0
      %1330 = vmatprep.subr.bf16.mxu0 0
      %1331 = vmatpush1.bf16.msra.mxu0 0
      %1332 = vmatprep.subr.bf16.mxu0 0
      %1333 = vmatpush1.bf16.msra.mxu0 0
      %1334 = vmatprep.subr.bf16.mxu0 0
      %1335 = vmatpush1.bf16.msra.mxu0 0
      %1336 = vmatprep.subr.bf16.mxu0 0
      %1337 = vmatpush1.bf16.msra.mxu0 0
      %1338 = vmatprep.subr.bf16.mxu0 0
      %1339 = vmatpush1.bf16.msra.mxu0 0
      %1340 = vmatprep.subr.bf16.mxu0 0
      %1341 = vmatpush1.bf16.msra.mxu0 0
      %1342 = vmatprep.subr.bf16.mxu0 0
      %1343 = vmatpush1.bf16.msra.mxu0 0
      %1344 = vmatprep.subr.bf16.mxu0 0
      %1345 = vmatpush1.bf16.msra.mxu0 0
      %1346 = vmatprep.subr.bf16.mxu0 0
      %1347 = vmatpush1.bf16.msra.mxu0 0
      %1348 = vmatprep.subr.bf16.mxu0 0
      %1349 = vmatpush1.bf16.msra.mxu0 0
      %1350 = vmatprep.subr.bf16.mxu0 0
      %1351 = vmatpush1.bf16.msra.mxu0 0
      %1352 = vmatprep.mubr.bf16.mxu0 0
      %1353 = vmatmul.mubr.bf16.gmra.mrb[0].mxu0 %v1315
      %v1354 = vpop.f32.mrb[0].mxu0
      %v1355 = vadd.f32 %v1300, %v1354
      %v1356 = vpop.f32.mrb[0].mxu0
      %v1357 = vpop.f32.mrb[0].mxu0
      %v1358 = vadd.f32 %v1300, %v1357
      %v1359 = vpop.f32.mrb[0].mxu0
      %1360 = vmatprep.mubr.bf16.mxu0 0
      %1361 = vmatmul.mubr.bf16.gmra.mrb[0].mxu0 %v1318
      %v1362 = vpop.f32.mrb[0].mxu0
      %v1363 = vadd.f32 %v1300, %v1362
      %v1364 = vpop.f32.mrb[0].mxu0
      %v1365 = vpop.f32.mrb[0].mxu0
      %v1366 = vadd.f32 %v1300, %v1365
      %v1367 = vpop.f32.mrb[0].mxu0
      %1368 = vdwg.mxu0
      %v1369 = vmax.f32 %v1355, 0.0
      %v1370 = vmax.f32 %v1358, 0.0
      %v1371 = vmax.f32 %v1363, 0.0
      %v1372 = vmax.f32 %v1366, 0.0
      %v1377 = vrot.slane %v1369, 4
      %v1378 = vrot.slane %v1370, 4
      %v1379 = vsel %vm1085, %v1377, %v1378
      %v1380 = vrot.slane %v1371, 4
      %v1381 = vrot.slane %v1372, 4
      %v1382 = vsel %vm1085, %v1380, %v1381
      %v1389 = vsel %vm1085, 0.0, %v1377
      %v1390 = vsel %vm1085, 0.0, %v1380
      %v1391 = vsel %vm1085, %v1378, 0.0
      %v1392 = vsel %vm1085, %v1381, 0.0
      %v1397 = vrot.slane %v1389, 2
      %v1398 = vrot.slane %v1379, 2
      %v1399 = vsel %vm1039, %v1397, %v1398
      %v1400 = vrot.slane %v1391, 2
      %v1401 = vsel %vm1039, %v1398, %v1400
      %v1402 = vrot.slane %v1390, 2
      %v1403 = vrot.slane %v1382, 2
      %v1404 = vsel %vm1039, %v1402, %v1403
      %v1405 = vrot.slane %v1392, 2
      %v1406 = vsel %vm1039, %v1403, %v1405
      %1407 = vrot.lane.b32.xlu0 %v1399, 4
      %v1408 = vpop.permute.xlu0 %1407
      %1409 = vrot.lane.b32.xlu0 %v1401, 4
      %v1410 = vpop.permute.xlu0 %1409
      %1411 = vrot.lane.b32.xlu0 %v1404, 4
      %v1412 = vpop.permute.xlu0 %1411
      %1413 = vrot.lane.b32.xlu0 %v1406, 4
      %v1414 = vpop.permute.xlu0 %1413
      %v1419 = vrot.slane %v1389, 4
      %v1420 = vrot.slane %v1379, 4
      %v1421 = vsel %vm1085, %v1419, %v1420
      %v1422 = vrot.slane %v1391, 4
      %v1423 = vsel %vm1085, %v1420, %v1422
      %v1424 = vrot.slane %v1390, 4
      %v1425 = vrot.slane %v1382, 4
      %v1426 = vsel %vm1085, %v1424, %v1425
      %v1427 = vrot.slane %v1392, 4
      %v1428 = vsel %vm1085, %v1425, %v1427
      %1429 = vrot.lane.b32.xlu0 %v1421, 8
      %v1430 = vpop.permute.xlu0 %1429
      %1431 = vrot.lane.b32.xlu0 %v1423, 8
      %v1432 = vpop.permute.xlu0 %1431
      %1433 = vrot.lane.b32.xlu0 %v1426, 8
      %v1434 = vpop.permute.xlu0 %1433
      %1435 = vrot.lane.b32.xlu0 %v1428, 8
      %v1436 = vpop.permute.xlu0 %1435
      %v1441 = vrot.slane %v1389, 6
      %v1442 = vrot.slane %v1379, 6
      %v1443 = vsel %vm854, %v1441, %v1442
      %v1444 = vrot.slane %v1391, 6
      %v1445 = vsel %vm854, %v1442, %v1444
      %v1446 = vrot.slane %v1390, 6
      %v1447 = vrot.slane %v1382, 6
      %v1448 = vsel %vm854, %v1446, %v1447
      %v1449 = vrot.slane %v1392, 6
      %v1450 = vsel %vm854, %v1447, %v1449
      %1451 = vrot.lane.b32.xlu0 %v1443, 12
      %v1452 = vpop.permute.xlu0 %1451
      %1453 = vrot.lane.b32.xlu0 %v1445, 12
      %v1454 = vpop.permute.xlu0 %1453
      %1455 = vrot.lane.b32.xlu0 %v1448, 12
      %v1456 = vpop.permute.xlu0 %1455
      %1457 = vrot.lane.b32.xlu0 %v1450, 12
      %v1458 = vpop.permute.xlu0 %1457
      %1463 = vrot.lane.b32.xlu0 %v1379, 16
      %v1464 = vpop.permute.xlu0 %1463
      %1465 = vrot.lane.b32.xlu0 %v1391, 16
      %v1466 = vpop.permute.xlu0 %1465
      %1467 = vrot.lane.b32.xlu0 %v1382, 16
      %v1468 = vpop.permute.xlu0 %1467
      %1469 = vrot.lane.b32.xlu0 %v1392, 16
      %v1470 = vpop.permute.xlu0 %1469
      %v1475 = vsel %vm726, %v1389, %v1408
      %v1476 = vsel %vm726, %v1379, %v1410
      %v1477 = vsel %vm726, %v1390, %v1412
      %v1478 = vsel %vm726, %v1382, %v1414
      %v1479 = vsel %vm1112, %v1475, %v1430
      %v1480 = vsel %vm1112, %v1476, %v1432
      %v1481 = vsel %vm1112, %v1477, %v1434
      %v1482 = vsel %vm1112, %v1478, %v1436
      %v1483 = vsel %vm1117, %v1479, %v1452
      %v1484 = vsel %vm1117, %v1480, %v1454
      %v1485 = vsel %vm1117, %v1481, %v1456
      %v1486 = vsel %vm1117, %v1482, %v1458
      %v1487 = vsel %vm1122, %v1483, %v1464
      %v1488 = vsel %vm1122, %v1484, %v1466
      %v1489 = vsel %vm1122, %v1485, %v1468
      %v1490 = vsel %vm1122, %v1486, %v1470
      %s1491 = scalar_lea.vmem %s6, 12
      %v1492 = vld [vmem:[%s1491] sm:$0xf]
      %v1493 = vld [vmem:[%s1491 + $0x4] sm:$0xf]
      %v1494 = vld [vmem:[%s1491 + $0x8] sm:$0x3]
      %v1495 = vpack.c.bf16 %v1488, %v1487
      %v1496 = vpack.c.bf16 %v1490, %v1489
      %s1497 = scalar_lea.vmem %s7, 1
      %v1498 = vld [vmem:[%s1497] sm:$0x1]
      %v1500 = vlaneseq
      %v1501 = vshrl.u32 %v1500, 7
      %v1502 = vsub.s32 0, %v1501
      %v1503 = vrot.slane %v1498, %v1502
      %v1508 = vunpack.c.l.b16 %v1492
      %v1509 = vunpack.c.l.b16 %v1493
      %v1510 = vunpack.c.l.b16 %v1494
      %v1511 = vpack.c.b16 %v1509, %v1508
      %v1512 = vpack.c.b16 %v1510, %v1510
      %v1515 = vsel %vm1148, %v1495, 0
      %v1518 = vsel %vm1148, %v1496, 0
      %v1521 = vsel %vm854, %v1512, 0
      %1523 = vmatprep.subr.bf16.mxu0 0
      %1524 = vmatpush1.bf16.msra.mxu0 %v1511
      %1525 = vmatprep.subr.bf16.mxu0 0
      %1526 = vmatpush1.bf16.msra.mxu0 %v1521
      %1527 = vmatprep.subr.bf16.mxu0 0
      %1528 = vmatpush1.bf16.msra.mxu0 0
      %1529 = vmatprep.subr.bf16.mxu0 0
      %1530 = vmatpush1.bf16.msra.mxu0 0
      %1531 = vmatprep.subr.bf16.mxu0 0
      %1532 = vmatpush1.bf16.msra.mxu0 0
      %1533 = vmatprep.subr.bf16.mxu0 0
      %1534 = vmatpush1.bf16.msra.mxu0 0
      %1535 = vmatprep.subr.bf16.mxu0 0
      %1536 = vmatpush1.bf16.msra.mxu0 0
      %1537 = vmatprep.subr.bf16.mxu0 0
      %1538 = vmatpush1.bf16.msra.mxu0 0
      %1539 = vmatprep.subr.bf16.mxu0 0
      %1540 = vmatpush1.bf16.msra.mxu0 0
      %1541 = vmatprep.subr.bf16.mxu0 0
      %1542 = vmatpush1.bf16.msra.mxu0 0
      %1543 = vmatprep.subr.bf16.mxu0 0
      %1544 = vmatpush1.bf16.msra.mxu0 0
      %1545 = vmatprep.subr.bf16.mxu0 0
      %1546 = vmatpush1.bf16.msra.mxu0 0
      %1547 = vmatprep.subr.bf16.mxu0 0
      %1548 = vmatpush1.bf16.msra.mxu0 0
      %1549 = vmatprep.subr.bf16.mxu0 0
      %1550 = vmatpush1.bf16.msra.mxu0 0
      %1551 = vmatprep.subr.bf16.mxu0 0
      %1552 = vmatpush1.bf16.msra.mxu0 0
      %1553 = vmatprep.subr.bf16.mxu0 0
      %1554 = vmatpush1.bf16.msra.mxu0 0
      %1555 = vmatprep.mubr.bf16.mxu0 0
      %1556 = vmatmul.mubr.bf16.gmra.mrb[0].mxu0 %v1515
      %v1557 = vpop.f32.mrb[0].mxu0
      %v1558 = vadd.f32 %v1503, %v1557
      %v1559 = vpop.f32.mrb[0].mxu0
      %v1560 = vpop.f32.mrb[0].mxu0
      %v1561 = vadd.f32 %v1503, %v1560
      %v1562 = vpop.f32.mrb[0].mxu0
      %1563 = vmatprep.mubr.bf16.mxu0 0
      %1564 = vmatmul.mubr.bf16.gmra.mrb[0].mxu0 %v1518
      %v1565 = vpop.f32.mrb[0].mxu0
      %v1566 = vadd.f32 %v1503, %v1565
      %v1567 = vpop.f32.mrb[0].mxu0
      %v1568 = vpop.f32.mrb[0].mxu0
      %v1569 = vadd.f32 %v1503, %v1568
      %v1570 = vpop.f32.mrb[0].mxu0
      %1571 = vdwg.mxu0
      %v1572 = vmax.f32 %v1558, 0.0
      %v1573 = vmax.f32 %v1561, 0.0
      %v1574 = vmax.f32 %v1566, 0.0
      %v1575 = vmax.f32 %v1569, 0.0
      %s1576 = scalar_lea.vmem %s8, 2
      %v1577 = vld [vmem:[%s1576] sm:$0x3]
      %v1578 = vpack.c.bf16 %v1573, %v1572
      %v1579 = vpack.c.bf16 %v1575, %v1574
      %s1580 = scalar_lea.vmem %s9, 1
      %v1581 = vld [vmem:[%s1580] sm:$0x1]
      %v1583 = vlaneseq
      %v1584 = vshrl.u32 %v1583, 7
      %v1585 = vsub.s32 0, %v1584
      %v1586 = vrot.slane %v1581, %v1585
      %v1589 = vsel %vm726, %v1578, 0
      %v1592 = vsel %vm726, %v1579, 0
      %v1595 = vsel %vm854, %v1577, 0
      %1597 = vmatprep.subr.bf16.mxu0 0
      %1598 = vmatpush1.bf16.msra.mxu0 %v1595
      %1599 = vmatprep.subr.bf16.mxu0 0
      %1600 = vmatpush1.bf16.msra.mxu0 0
      %1601 = vmatprep.subr.bf16.mxu0 0
      %1602 = vmatpush1.bf16.msra.mxu0 0
      %1603 = vmatprep.subr.bf16.mxu0 0
      %1604 = vmatpush1.bf16.msra.mxu0 0
      %1605 = vmatprep.subr.bf16.mxu0 0
      %1606 = vmatpush1.bf16.msra.mxu0 0
      %1607 = vmatprep.subr.bf16.mxu0 0
      %1608 = vmatpush1.bf16.msra.mxu0 0
      %1609 = vmatprep.subr.bf16.mxu0 0
      %1610 = vmatpush1.bf16.msra.mxu0 0
      %1611 = vmatprep.subr.bf16.mxu0 0
      %1612 = vmatpush1.bf16.msra.mxu0 0
      %1613 = vmatprep.subr.bf16.mxu0 0
      %1614 = vmatpush1.bf16.msra.mxu0 0
      %1615 = vmatprep.subr.bf16.mxu0 0
      %1616 = vmatpush1.bf16.msra.mxu0 0
      %1617 = vmatprep.subr.bf16.mxu0 0
      %1618 = vmatpush1.bf16.msra.mxu0 0
      %1619 = vmatprep.subr.bf16.mxu0 0
      %1620 = vmatpush1.bf16.msra.mxu0 0
      %1621 = vmatprep.subr.bf16.mxu0 0
      %1622 = vmatpush1.bf16.msra.mxu0 0
      %1623 = vmatprep.subr.bf16.mxu0 0
      %1624 = vmatpush1.bf16.msra.mxu0 0
      %1625 = vmatprep.subr.bf16.mxu0 0
      %1626 = vmatpush1.bf16.msra.mxu0 0
      %1627 = vmatprep.subr.bf16.mxu0 0
      %1628 = vmatpush1.bf16.msra.mxu0 0
      %1629 = vmatprep.mubr.bf16.mxu0 0
      %1630 = vmatmul.mubr.bf16.gmra.mrb[0].mxu0 %v1589
      %v1631 = vpop.f32.mrb[0].mxu0
      %v1632 = vadd.f32 %v1586, %v1631
      %v1633 = vpop.f32.mrb[0].mxu0
      %v1634 = vpop.f32.mrb[0].mxu0
      %v1635 = vadd.f32 %v1586, %v1634
      %v1636 = vpop.f32.mrb[0].mxu0
      %1637 = vmatprep.mubr.bf16.mxu0 0
      %1638 = vmatmul.mubr.bf16.gmra.mrb[0].mxu0 %v1592
      %v1639 = vpop.f32.mrb[0].mxu0
      %v1640 = vadd.f32 %v1586, %v1639
      %v1641 = vpop.f32.mrb[0].mxu0
      %v1642 = vpop.f32.mrb[0].mxu0
      %v1643 = vadd.f32 %v1586, %v1642
      %v1644 = vpop.f32.mrb[0].mxu0
      %1645 = vdwg.mxu0
      %v1646 = vadd.f32 %v1283, %v1632
      %v1647 = vadd.f32 %v1284, %v1635
      %v1648 = vadd.f32 %v1285, %v1640
      %v1649 = vadd.f32 %v1286, %v1643
      %v1650 = vmax.f32 %v1646, 0.0
      %v1651 = vmax.f32 %v1647, 0.0
      %v1652 = vmax.f32 %v1648, 0.0
      %v1653 = vmax.f32 %v1649, 0.0
      %s1654 = scalar_lea.vmem %s4, 32
      %v1655 = vld [vmem:[%s1654] sm:$0xf]
      %v1656 = vld [vmem:[%s1654 + $0x4] sm:$0xf]
      %v1657 = vld [vmem:[%s1654 + $0x8] sm:$0xf]
      %v1658 = vld [vmem:[%s1654 + $0xc] sm:$0xf]
      %v1659 = vpack.c.bf16 %v1651, %v1650
      %v1660 = vpack.c.bf16 %v1653, %v1652
      %s1661 = scalar_lea.vmem %s5, 2
      %v1662 = vld [vmem:[%s1661] sm:$0x1]
      %v1664 = vlaneseq
      %v1665 = vshrl.u32 %v1664, 7
      %v1666 = vsub.s32 0, %v1665
      %v1667 = vrot.slane %v1662, %v1666
      %v1673 = vunpack.c.l.b16 %v1655
      %v1674 = vunpack.c.l.b16 %v1656
      %v1675 = vunpack.c.l.b16 %v1657
      %v1676 = vunpack.c.l.b16 %v1658
      %v1677 = vpack.c.b16 %v1674, %v1673
      %v1678 = vpack.c.b16 %v1676, %v1675
      %v1682 = vsel %vm932, %v1659, 0
      %v1685 = vsel %vm932, %v1660, 0
      %1687 = vmatprep.subr.bf16.mxu0 0
      %1688 = vmatpush1.bf16.msra.mxu0 %v1677
      %1689 = vmatprep.subr.bf16.mxu0 0
      %1690 = vmatpush1.bf16.msra.mxu0 %v1678
      %1691 = vmatprep.subr.bf16.mxu0 0
      %1692 = vmatpush1.bf16.msra.mxu0 0
      %1693 = vmatprep.subr.bf16.mxu0 0
      %1694 = vmatpush1.bf16.msra.mxu0 0
      %1695 = vmatprep.subr.bf16.mxu0 0
      %1696 = vmatpush1.bf16.msra.mxu0 0
      %1697 = vmatprep.subr.bf16.mxu0 0
      %1698 = vmatpush1.bf16.msra.mxu0 0
      %1699 = vmatprep.subr.bf16.mxu0 0
      %1700 = vmatpush1.bf16.msra.mxu0 0
      %1701 = vmatprep.subr.bf16.mxu0 0
      %1702 = vmatpush1.bf16.msra.mxu0 0
      %1703 = vmatprep.subr.bf16.mxu0 0
      %1704 = vmatpush1.bf16.msra.mxu0 0
      %1705 = vmatprep.subr.bf16.mxu0 0
      %1706 = vmatpush1.bf16.msra.mxu0 0
      %1707 = vmatprep.subr.bf16.mxu0 0
      %1708 = vmatpush1.bf16.msra.mxu0 0
      %1709 = vmatprep.subr.bf16.mxu0 0
      %1710 = vmatpush1.bf16.msra.mxu0 0
      %1711 = vmatprep.subr.bf16.mxu0 0
      %1712 = vmatpush1.bf16.msra.mxu0 0
      %1713 = vmatprep.subr.bf16.mxu0 0
      %1714 = vmatpush1.bf16.msra.mxu0 0
      %1715 = vmatprep.subr.bf16.mxu0 0
      %1716 = vmatpush1.bf16.msra.mxu0 0
      %1717 = vmatprep.subr.bf16.mxu0 0
      %1718 = vmatpush1.bf16.msra.mxu0 0
      %1719 = vmatprep.mubr.bf16.mxu0 0
      %1720 = vmatmul.mubr.bf16.gmra.mrb[0].mxu0 %v1682
      %v1721 = vpop.f32.mrb[0].mxu0
      %v1722 = vadd.f32 %v1667, %v1721
      %v1723 = vpop.f32.mrb[0].mxu0
      %v1724 = vpop.f32.mrb[0].mxu0
      %v1725 = vadd.f32 %v1667, %v1724
      %v1726 = vpop.f32.mrb[0].mxu0
      %1727 = vmatprep.mubr.bf16.mxu0 0
      %1728 = vmatmul.mubr.bf16.gmra.mrb[0].mxu0 %v1685
      %v1729 = vpop.f32.mrb[0].mxu0
      %v1730 = vadd.f32 %v1667, %v1729
      %v1731 = vpop.f32.mrb[0].mxu0
      %v1732 = vpop.f32.mrb[0].mxu0
      %v1733 = vadd.f32 %v1667, %v1732
      %v1734 = vpop.f32.mrb[0].mxu0
      %1735 = vdwg.mxu0
      %v1736 = vmax.f32 %v1722, 0.0
      %v1737 = vmax.f32 %v1725, 0.0
      %v1738 = vmax.f32 %v1730, 0.0
      %v1739 = vmax.f32 %v1733, 0.0
      %v1745 = vrot.slane 0.0, 4
      %v1746 = vrot.slane %v1736, 4
      %v1747 = vsel %vm1085, %v1745, %v1746
      %v1748 = vrot.slane %v1737, 4
      %v1749 = vsel %vm1085, %v1746, %v1748
      %v1750 = vrot.slane %v1738, 4
      %v1751 = vsel %vm1085, %v1745, %v1750
      %v1752 = vrot.slane %v1739, 4
      %v1753 = vsel %vm1085, %v1750, %v1752
      %1754 = vrot.lane.b32.xlu0 %v1747, 4
      %v1755 = vpop.permute.xlu0 %1754
      %1756 = vrot.lane.b32.xlu0 %v1749, 4
      %v1757 = vpop.permute.xlu0 %1756
      %1758 = vrot.lane.b32.xlu0 %v1751, 4
      %v1759 = vpop.permute.xlu0 %1758
      %1760 = vrot.lane.b32.xlu0 %v1753, 4
      %v1761 = vpop.permute.xlu0 %1760
      %1766 = vrot.lane.b32.xlu0 %v1736, 8
      %v1767 = vpop.permute.xlu0 %1766
      %1768 = vrot.lane.b32.xlu0 %v1737, 8
      %v1769 = vpop.permute.xlu0 %1768
      %1770 = vrot.lane.b32.xlu0 %v1738, 8
      %v1771 = vpop.permute.xlu0 %1770
      %1772 = vrot.lane.b32.xlu0 %v1739, 8
      %v1773 = vpop.permute.xlu0 %1772
      %v1778 = vsel %vm1085, %v1748, %v1745
      %v1779 = vsel %vm1085, %v1752, %v1745
      %1780 = vrot.lane.b32.xlu0 %v1749, 12
      %v1781 = vpop.permute.xlu0 %1780
      %1782 = vrot.lane.b32.xlu0 %v1778, 12
      %v1783 = vpop.permute.xlu0 %1782
      %1784 = vrot.lane.b32.xlu0 %v1753, 12
      %v1785 = vpop.permute.xlu0 %1784
      %1786 = vrot.lane.b32.xlu0 %v1779, 12
      %v1787 = vpop.permute.xlu0 %1786
      %1792 = vrot.lane.b32.xlu0 %v1737, 16
      %v1793 = vpop.permute.xlu0 %1792
      %1794 = vrot.lane.b32.xlu0 0.0, 16
      %v1795 = vpop.permute.xlu0 %1794
      %1796 = vrot.lane.b32.xlu0 %v1739, 16
      %v1797 = vpop.permute.xlu0 %1796
      %v1801 = vsel %vm726, 0.0, %v1755
      %v1802 = vsel %vm726, %v1736, %v1757
      %v1803 = vsel %vm726, 0.0, %v1759
      %v1804 = vsel %vm726, %v1738, %v1761
      %v1805 = vsel %vm1112, %v1801, %v1767
      %v1806 = vsel %vm1112, %v1802, %v1769
      %v1807 = vsel %vm1112, %v1803, %v1771
      %v1808 = vsel %vm1112, %v1804, %v1773
      %v1809 = vsel %vm1117, %v1805, %v1781
      %v1810 = vsel %vm1117, %v1806, %v1783
      %v1811 = vsel %vm1117, %v1807, %v1785
      %v1812 = vsel %vm1117, %v1808, %v1787
      %v1813 = vsel %vm1122, %v1809, %v1793
      %v1814 = vsel %vm1122, %v1810, %v1795
      %v1815 = vsel %vm1122, %v1811, %v1797
      %v1816 = vsel %vm1122, %v1812, %v1795
      %s1817 = scalar_lea.vmem %s6, 24
      %v1818 = vld [vmem:[%s1817] sm:$0xf]
      %v1819 = vld [vmem:[%s1817 + $0x4] sm:$0xf]
      %v1820 = vld [vmem:[%s1817 + $0x8] sm:$0x3]
      %v1821 = vpack.c.bf16 %v1814, %v1813
      %v1822 = vpack.c.bf16 %v1816, %v1815
      %s1823 = scalar_lea.vmem %s7, 2
      %v1824 = vld [vmem:[%s1823] sm:$0x1]
      %v1826 = vlaneseq
      %v1827 = vshrl.u32 %v1826, 7
      %v1828 = vsub.s32 0, %v1827
      %v1829 = vrot.slane %v1824, %v1828
      %v1834 = vunpack.c.l.b16 %v1818
      %v1835 = vunpack.c.l.b16 %v1819
      %v1836 = vunpack.c.l.b16 %v1820
      %v1837 = vpack.c.b16 %v1835, %v1834
      %v1838 = vpack.c.b16 %v1836, %v1836
      %v1841 = vsel %vm1148, %v1821, 0
      %v1844 = vsel %vm1148, %v1822, 0
      %v1847 = vsel %vm854, %v1838, 0
      %1849 = vmatprep.subr.bf16.mxu0 0
      %1850 = vmatpush1.bf16.msra.mxu0 %v1837
      %1851 = vmatprep.subr.bf16.mxu0 0
      %1852 = vmatpush1.bf16.msra.mxu0 %v1847
      %1853 = vmatprep.subr.bf16.mxu0 0
      %1854 = vmatpush1.bf16.msra.mxu0 0
      %1855 = vmatprep.subr.bf16.mxu0 0
      %1856 = vmatpush1.bf16.msra.mxu0 0
      %1857 = vmatprep.subr.bf16.mxu0 0
      %1858 = vmatpush1.bf16.msra.mxu0 0
      %1859 = vmatprep.subr.bf16.mxu0 0
      %1860 = vmatpush1.bf16.msra.mxu0 0
      %1861 = vmatprep.subr.bf16.mxu0 0
      %1862 = vmatpush1.bf16.msra.mxu0 0
      %1863 = vmatprep.subr.bf16.mxu0 0
      %1864 = vmatpush1.bf16.msra.mxu0 0
      %1865 = vmatprep.subr.bf16.mxu0 0
      %1866 = vmatpush1.bf16.msra.mxu0 0
      %1867 = vmatprep.subr.bf16.mxu0 0
      %1868 = vmatpush1.bf16.msra.mxu0 0
      %1869 = vmatprep.subr.bf16.mxu0 0
      %1870 = vmatpush1.bf16.msra.mxu0 0
      %1871 = vmatprep.subr.bf16.mxu0 0
      %1872 = vmatpush1.bf16.msra.mxu0 0
      %1873 = vmatprep.subr.bf16.mxu0 0
      %1874 = vmatpush1.bf16.msra.mxu0 0
      %1875 = vmatprep.subr.bf16.mxu0 0
      %1876 = vmatpush1.bf16.msra.mxu0 0
      %1877 = vmatprep.subr.bf16.mxu0 0
      %1878 = vmatpush1.bf16.msra.mxu0 0
      %1879 = vmatprep.subr.bf16.mxu0 0
      %1880 = vmatpush1.bf16.msra.mxu0 0
      %1881 = vmatprep.mubr.bf16.mxu0 0
      %1882 = vmatmul.mubr.bf16.gmra.mrb[0].mxu0 %v1841
      %v1883 = vpop.f32.mrb[0].mxu0
      %v1884 = vadd.f32 %v1829, %v1883
      %v1885 = vpop.f32.mrb[0].mxu0
      %v1886 = vpop.f32.mrb[0].mxu0
      %v1887 = vadd.f32 %v1829, %v1886
      %v1888 = vpop.f32.mrb[0].mxu0
      %1889 = vmatprep.mubr.bf16.mxu0 0
      %1890 = vmatmul.mubr.bf16.gmra.mrb[0].mxu0 %v1844
      %v1891 = vpop.f32.mrb[0].mxu0
      %v1892 = vadd.f32 %v1829, %v1891
      %v1893 = vpop.f32.mrb[0].mxu0
      %v1894 = vpop.f32.mrb[0].mxu0
      %v1895 = vadd.f32 %v1829, %v1894
      %v1896 = vpop.f32.mrb[0].mxu0
      %1897 = vdwg.mxu0
      %v1898 = vmax.f32 %v1884, 0.0
      %v1899 = vmax.f32 %v1887, 0.0
      %v1900 = vmax.f32 %v1892, 0.0
      %v1901 = vmax.f32 %v1895, 0.0
      %s1902 = scalar_lea.vmem %s8, 4
      %v1903 = vld [vmem:[%s1902] sm:$0x3]
      %v1904 = vpack.c.bf16 %v1899, %v1898
      %v1905 = vpack.c.bf16 %v1901, %v1900
      %s1906 = scalar_lea.vmem %s9, 2
      %v1907 = vld [vmem:[%s1906] sm:$0x1]
      %v1909 = vlaneseq
      %v1910 = vshrl.u32 %v1909, 7
      %v1911 = vsub.s32 0, %v1910
      %v1912 = vrot.slane %v1907, %v1911
      %v1915 = vsel %vm726, %v1904, 0
      %v1918 = vsel %vm726, %v1905, 0
      %v1921 = vsel %vm854, %v1903, 0
      %1923 = vmatprep.subr.bf16.mxu0 0
      %1924 = vmatpush1.bf16.msra.mxu0 %v1921
      %1925 = vmatprep.subr.bf16.mxu0 0
      %1926 = vmatpush1.bf16.msra.mxu0 0
      %1927 = vmatprep.subr.bf16.mxu0 0
      %1928 = vmatpush1.bf16.msra.mxu0 0
      %1929 = vmatprep.subr.bf16.mxu0 0
      %1930 = vmatpush1.bf16.msra.mxu0 0
      %1931 = vmatprep.subr.bf16.mxu0 0
      %1932 = vmatpush1.bf16.msra.mxu0 0
      %1933 = vmatprep.subr.bf16.mxu0 0
      %1934 = vmatpush1.bf16.msra.mxu0 0
      %1935 = vmatprep.subr.bf16.mxu0 0
      %1936 = vmatpush1.bf16.msra.mxu0 0
      %1937 = vmatprep.subr.bf16.mxu0 0
      %1938 = vmatpush1.bf16.msra.mxu0 0
      %1939 = vmatprep.subr.bf16.mxu0 0
      %1940 = vmatpush1.bf16.msra.mxu0 0
      %1941 = vmatprep.subr.bf16.mxu0 0
      %1942 = vmatpush1.bf16.msra.mxu0 0
      %1943 = vmatprep.subr.bf16.mxu0 0
      %1944 = vmatpush1.bf16.msra.mxu0 0
      %1945 = vmatprep.subr.bf16.mxu0 0
      %1946 = vmatpush1.bf16.msra.mxu0 0
      %1947 = vmatprep.subr.bf16.mxu0 0
      %1948 = vmatpush1.bf16.msra.mxu0 0
      %1949 = vmatprep.subr.bf16.mxu0 0
      %1950 = vmatpush1.bf16.msra.mxu0 0
      %1951 = vmatprep.subr.bf16.mxu0 0
      %1952 = vmatpush1.bf16.msra.mxu0 0
      %1953 = vmatprep.subr.bf16.mxu0 0
      %1954 = vmatpush1.bf16.msra.mxu0 0
      %1955 = vmatprep.mubr.bf16.mxu0 0
      %1956 = vmatmul.mubr.bf16.gmra.mrb[0].mxu0 %v1915
      %v1957 = vpop.f32.mrb[0].mxu0
      %v1958 = vadd.f32 %v1912, %v1957
      %v1959 = vpop.f32.mrb[0].mxu0
      %v1960 = vpop.f32.mrb[0].mxu0
      %v1961 = vadd.f32 %v1912, %v1960
      %v1962 = vpop.f32.mrb[0].mxu0
      %1963 = vmatprep.mubr.bf16.mxu0 0
      %1964 = vmatmul.mubr.bf16.gmra.mrb[0].mxu0 %v1918
      %v1965 = vpop.f32.mrb[0].mxu0
      %v1966 = vadd.f32 %v1912, %v1965
      %v1967 = vpop.f32.mrb[0].mxu0
      %v1968 = vpop.f32.mrb[0].mxu0
      %v1969 = vadd.f32 %v1912, %v1968
      %v1970 = vpop.f32.mrb[0].mxu0
      %1971 = vdwg.mxu0
      %v1972 = vadd.f32 %v1650, %v1958
      %v1973 = vadd.f32 %v1651, %v1961
      %v1974 = vadd.f32 %v1652, %v1966
      %v1975 = vadd.f32 %v1653, %v1969
      %v1976 = vmax.f32 %v1972, 0.0
      %v1977 = vmax.f32 %v1973, 0.0
      %v1978 = vmax.f32 %v1974, 0.0
      %v1979 = vmax.f32 %v1975, 0.0
      %v1980 = vld [vmem:[%s10] sm:$0x3]
      %v1981 = vpack.c.bf16 %v819, %v818
      %v1982 = vpack.c.bf16 %v821, %v820
      %v1983 = vld [vmem:[%s11] sm:$0x1]
      %v1985 = vlaneseq
      %v1986 = vshrl.u32 %v1985, 7
      %v1987 = vsub.s32 0, %v1986
      %v1988 = vrot.slane %v1983, %v1987
      %v1991 = vsel %vm726, %v1981, 0
      %v1994 = vsel %vm726, %v1982, 0
      %v1997 = vsel %vm854, %v1980, 0
      %1999 = vmatprep.subr.bf16.mxu0 0
      %2000 = vmatpush1.bf16.msra.mxu0 %v1997
      %2001 = vmatprep.subr.bf16.mxu0 0
      %2002 = vmatpush1.bf16.msra.mxu0 0
      %2003 = vmatprep.subr.bf16.mxu0 0
      %2004 = vmatpush1.bf16.msra.mxu0 0
      %2005 = vmatprep.subr.bf16.mxu0 0
      %2006 = vmatpush1.bf16.msra.mxu0 0
      %2007 = vmatprep.subr.bf16.mxu0 0
      %2008 = vmatpush1.bf16.msra.mxu0 0
      %2009 = vmatprep.subr.bf16.mxu0 0
      %2010 = vmatpush1.bf16.msra.mxu0 0
      %2011 = vmatprep.subr.bf16.mxu0 0
      %2012 = vmatpush1.bf16.msra.mxu0 0
      %2013 = vmatprep.subr.bf16.mxu0 0
      %2014 = vmatpush1.bf16.msra.mxu0 0
      %2015 = vmatprep.subr.bf16.mxu0 0
      %2016 = vmatpush1.bf16.msra.mxu0 0
      %2017 = vmatprep.subr.bf16.mxu0 0
      %2018 = vmatpush1.bf16.msra.mxu0 0
      %2019 = vmatprep.subr.bf16.mxu0 0
      %2020 = vmatpush1.bf16.msra.mxu0 0
      %2021 = vmatprep.subr.bf16.mxu0 0
      %2022 = vmatpush1.bf16.msra.mxu0 0
      %2023 = vmatprep.subr.bf16.mxu0 0
      %2024 = vmatpush1.bf16.msra.mxu0 0
      %2025 = vmatprep.subr.bf16.mxu0 0
      %2026 = vmatpush1.bf16.msra.mxu0 0
      %2027 = vmatprep.subr.bf16.mxu0 0
      %2028 = vmatpush1.bf16.msra.mxu0 0
      %2029 = vmatprep.subr.bf16.mxu0 0
      %2030 = vmatpush1.bf16.msra.mxu0 0
      %2031 = vmatprep.mubr.bf16.mxu0 0
      %2032 = vmatmul.mubr.bf16.gmra.mrb[0].mxu0 %v1991
      %v2033 = vpop.f32.mrb[0].mxu0
      %v2034 = vadd.f32 %v1988, %v2033
      %v2035 = vpop.f32.mrb[0].mxu0
      %v2036 = vpop.f32.mrb[0].mxu0
      %v2037 = vadd.f32 %v1988, %v2036
      %v2038 = vpop.f32.mrb[0].mxu0
      %2039 = vmatprep.mubr.bf16.mxu0 0
      %2040 = vmatmul.mubr.bf16.gmra.mrb[0].mxu0 %v1994
      %v2041 = vpop.f32.mrb[0].mxu0
      %v2042 = vadd.f32 %v1988, %v2041
      %v2043 = vpop.f32.mrb[0].mxu0
      %v2044 = vpop.f32.mrb[0].mxu0
      %v2045 = vadd.f32 %v1988, %v2044
      %v2046 = vpop.f32.mrb[0].mxu0
      %2047 = vdwg.mxu0
      %v2048 = vld [vmem:[%s12] sm:$0xf]
      %v2049 = vld [vmem:[%s12 + $0x4] sm:$0xf]
      %v2050 = vld [vmem:[%s12 + $0x8] sm:$0xf]
      %v2051 = vld [vmem:[%s12 + $0xc] sm:$0xf]
      %v2052 = vld [vmem:[%s12 + $0x10] sm:$0xf]
      %v2053 = vld [vmem:[%s12 + $0x14] sm:$0xf]
      %v2054 = vld [vmem:[%s12 + $0x18] sm:$0xf]
      %v2055 = vld [vmem:[%s12 + $0x1c] sm:$0xf]
      %v2056 = vpack.c.bf16 %v2037, %v2034
      %v2057 = vpack.c.bf16 %v2045, %v2042
      %v2058 = vld [vmem:[%s13] sm:$0x1]
      %v2060 = vlaneseq
      %v2061 = vshrl.u32 %v2060, 7
      %v2062 = vsub.s32 0, %v2061
      %v2063 = vrot.slane %v2058, %v2062
      %v2073 = vunpack.c.l.b16 %v2048
      %v2074 = vunpack.c.l.b16 %v2049
      %v2075 = vunpack.c.l.b16 %v2050
      %v2076 = vunpack.c.l.b16 %v2051
      %v2077 = vunpack.c.l.b16 %v2052
      %v2078 = vunpack.c.l.b16 %v2053
      %v2079 = vunpack.c.l.b16 %v2054
      %v2080 = vunpack.c.l.b16 %v2055
      %v2081 = vpack.c.b16 %v2074, %v2073
      %v2082 = vpack.c.b16 %v2076, %v2075
      %v2083 = vpack.c.b16 %v2078, %v2077
      %v2084 = vpack.c.b16 %v2080, %v2079
      %vm2089 = vcmask 523264
      %v2091 = vsel %vm2089, %v2056, 0
      %v2094 = vsel %vm2089, %v2057, 0
      %2096 = vmatprep.subr.bf16.mxu0 0
      %2097 = vmatpush1.bf16.msra.mxu0 %v2081
      %2098 = vmatprep.subr.bf16.mxu0 0
      %2099 = vmatpush1.bf16.msra.mxu0 %v2082
      %2100 = vmatprep.subr.bf16.mxu0 0
      %2101 = vmatpush1.bf16.msra.mxu0 %v2083
      %2102 = vmatprep.subr.bf16.mxu0 0
      %2103 = vmatpush1.bf16.msra.mxu0 %v2084
      %2104 = vmatprep.subr.bf16.mxu0 0
      %2105 = vmatpush1.bf16.msra.mxu0 0
      %2106 = vmatprep.subr.bf16.mxu0 0
      %2107 = vmatpush1.bf16.msra.mxu0 0
      %2108 = vmatprep.subr.bf16.mxu0 0
      %2109 = vmatpush1.bf16.msra.mxu0 0
      %2110 = vmatprep.subr.bf16.mxu0 0
      %2111 = vmatpush1.bf16.msra.mxu0 0
      %2112 = vmatprep.subr.bf16.mxu0 0
      %2113 = vmatpush1.bf16.msra.mxu0 0
      %2114 = vmatprep.subr.bf16.mxu0 0
      %2115 = vmatpush1.bf16.msra.mxu0 0
      %2116 = vmatprep.subr.bf16.mxu0 0
      %2117 = vmatpush1.bf16.msra.mxu0 0
      %2118 = vmatprep.subr.bf16.mxu0 0
      %2119 = vmatpush1.bf16.msra.mxu0 0
      %2120 = vmatprep.subr.bf16.mxu0 0
      %2121 = vmatpush1.bf16.msra.mxu0 0
      %2122 = vmatprep.subr.bf16.mxu0 0
      %2123 = vmatpush1.bf16.msra.mxu0 0
      %2124 = vmatprep.subr.bf16.mxu0 0
      %2125 = vmatpush1.bf16.msra.mxu0 0
      %2126 = vmatprep.subr.bf16.mxu0 0
      %2127 = vmatpush1.bf16.msra.mxu0 0
      %2128 = vmatprep.mubr.bf16.mxu0 0
      %2129 = vmatmul.mubr.bf16.gmra.mrb[0].mxu0 %v2091
      %v2130 = vpop.f32.mrb[0].mxu0
      %v2131 = vadd.f32 %v2063, %v2130
      %v2132 = vpop.f32.mrb[0].mxu0
      %v2133 = vpop.f32.mrb[0].mxu0
      %v2134 = vadd.f32 %v2063, %v2133
      %v2135 = vpop.f32.mrb[0].mxu0
      %2136 = vmatprep.mubr.bf16.mxu0 0
      %2137 = vmatmul.mubr.bf16.gmra.mrb[0].mxu0 %v2094
      %v2138 = vpop.f32.mrb[0].mxu0
      %v2139 = vadd.f32 %v2063, %v2138
      %v2140 = vpop.f32.mrb[0].mxu0
      %v2141 = vpop.f32.mrb[0].mxu0
      %v2142 = vadd.f32 %v2063, %v2141
      %v2143 = vpop.f32.mrb[0].mxu0
      %2144 = vdwg.mxu0
      %v2145 = vmax.f32 %v2131, 0.0
      %v2146 = vmax.f32 %v2134, 0.0
      %v2147 = vmax.f32 %v2139, 0.0
      %v2148 = vmax.f32 %v2142, 0.0
      %v2153 = vrot.slane %v2145, 6
      %v2154 = vrot.slane %v2146, 6
      %v2155 = vsel %vm854, %v2153, %v2154
      %v2156 = vrot.slane %v2147, 6
      %v2157 = vrot.slane %v2148, 6
      %v2158 = vsel %vm854, %v2156, %v2157
      %v2165 = vsel %vm854, 0.0, %v2153
      %v2166 = vsel %vm854, 0.0, %v2156
      %v2167 = vsel %vm854, %v2154, 0.0
      %v2168 = vsel %vm854, %v2157, 0.0
      %v2173 = vrot.slane %v2165, 1
      %v2174 = vrot.slane %v2155, 1
      %v2175 = vsel %vm1016, %v2173, %v2174
      %v2176 = vrot.slane %v2167, 1
      %v2177 = vsel %vm1016, %v2174, %v2176
      %v2178 = vrot.slane %v2166, 1
      %v2179 = vrot.slane %v2158, 1
      %v2180 = vsel %vm1016, %v2178, %v2179
      %v2181 = vrot.slane %v2168, 1
      %v2182 = vsel %vm1016, %v2179, %v2181
      %2183 = vrot.lane.b32.xlu0 %v2175, 8
      %v2184 = vpop.permute.xlu0 %2183
      %2185 = vrot.lane.b32.xlu0 %v2177, 8
      %v2186 = vpop.permute.xlu0 %2185
      %2187 = vrot.lane.b32.xlu0 %v2180, 8
      %v2188 = vpop.permute.xlu0 %2187
      %2189 = vrot.lane.b32.xlu0 %v2182, 8
      %v2190 = vpop.permute.xlu0 %2189
      %v2195 = vrot.slane %v2165, 2
      %v2196 = vrot.slane %v2155, 2
      %v2197 = vsel %vm1039, %v2195, %v2196
      %v2198 = vrot.slane %v2167, 2
      %v2199 = vsel %vm1039, %v2196, %v2198
      %v2200 = vrot.slane %v2166, 2
      %v2201 = vrot.slane %v2158, 2
      %v2202 = vsel %vm1039, %v2200, %v2201
      %v2203 = vrot.slane %v2168, 2
      %v2204 = vsel %vm1039, %v2201, %v2203
      %2205 = vrot.lane.b32.xlu0 %v2197, 16
      %v2206 = vpop.permute.xlu0 %2205
      %2207 = vrot.lane.b32.xlu0 %v2199, 16
      %v2208 = vpop.permute.xlu0 %2207
      %2209 = vrot.lane.b32.xlu0 %v2202, 16
      %v2210 = vpop.permute.xlu0 %2209
      %2211 = vrot.lane.b32.xlu0 %v2204, 16
      %v2212 = vpop.permute.xlu0 %2211
      %v2217 = vrot.slane %v2165, 3
      %v2218 = vrot.slane %v2155, 3
      %v2219 = vsel %vm1062, %v2217, %v2218
      %v2220 = vrot.slane %v2167, 3
      %v2221 = vsel %vm1062, %v2218, %v2220
      %v2222 = vrot.slane %v2166, 3
      %v2223 = vrot.slane %v2158, 3
      %v2224 = vsel %vm1062, %v2222, %v2223
      %v2225 = vrot.slane %v2168, 3
      %v2226 = vsel %vm1062, %v2223, %v2225
      %2227 = vrot.lane.b32.xlu0 %v2219, 24
      %v2228 = vpop.permute.xlu0 %2227
      %2229 = vrot.lane.b32.xlu0 %v2221, 24
      %v2230 = vpop.permute.xlu0 %2229
      %2231 = vrot.lane.b32.xlu0 %v2224, 24
      %v2232 = vpop.permute.xlu0 %2231
      %2233 = vrot.lane.b32.xlu0 %v2226, 24
      %v2234 = vpop.permute.xlu0 %2233
      %v2239 = vrot.slane %v2165, 4
      %v2240 = vrot.slane %v2155, 4
      %v2241 = vsel %vm1085, %v2239, %v2240
      %v2242 = vrot.slane %v2167, 4
      %v2243 = vsel %vm1085, %v2240, %v2242
      %v2244 = vrot.slane %v2166, 4
      %v2245 = vrot.slane %v2158, 4
      %v2246 = vsel %vm1085, %v2244, %v2245
      %v2247 = vrot.slane %v2168, 4
      %v2248 = vsel %vm1085, %v2245, %v2247
      %2249 = vrot.lane.b32.xlu0 %v2241, 32
      %v2250 = vpop.permute.xlu0 %2249
      %2251 = vrot.lane.b32.xlu0 %v2243, 32
      %v2252 = vpop.permute.xlu0 %2251
      %2253 = vrot.lane.b32.xlu0 %v2246, 32
      %v2254 = vpop.permute.xlu0 %2253
      %2255 = vrot.lane.b32.xlu0 %v2248, 32
      %v2256 = vpop.permute.xlu0 %2255
      %v2261 = vsel %vm1112, %v2165, %v2184
      %v2262 = vsel %vm1112, %v2155, %v2186
      %v2263 = vsel %vm1112, %v2166, %v2188
      %v2264 = vsel %vm1112, %v2158, %v2190
      %v2265 = vsel %vm1122, %v2261, %v2206
      %v2266 = vsel %vm1122, %v2262, %v2208
      %v2267 = vsel %vm1122, %v2263, %v2210
      %v2268 = vsel %vm1122, %v2264, %v2212
      %vm2269 = vcmask 195584
      %v2270 = vsel %vm2269, %v2265, %v2228
      %v2271 = vsel %vm2269, %v2266, %v2230
      %v2272 = vsel %vm2269, %v2267, %v2232
      %v2273 = vsel %vm2269, %v2268, %v2234
      %v2274 = vsel %vm932, %v2270, %v2250
      %v2275 = vsel %vm932, %v2271, %v2252
      %v2276 = vsel %vm932, %v2272, %v2254
      %v2277 = vsel %vm932, %v2273, %v2256
      %v2278 = vld [vmem:[%s14] sm:$0xf]
      %v2279 = vld [vmem:[%s14 + $0x4] sm:$0xf]
      %v2280 = vld [vmem:[%s14 + $0x8] sm:$0xf]
      %v2281 = vld [vmem:[%s14 + $0xc] sm:$0xf]
      %v2282 = vld [vmem:[%s14 + $0x10] sm:$0xf]
      %v2283 = vpack.c.bf16 %v2275, %v2274
      %v2284 = vpack.c.bf16 %v2277, %v2276
      %v2285 = vld [vmem:[%s15] sm:$0x1]
      %v2287 = vlaneseq
      %v2288 = vshrl.u32 %v2287, 7
      %v2289 = vsub.s32 0, %v2288
      %v2290 = vrot.slane %v2285, %v2289
      %v2297 = vunpack.c.l.b16 %v2278
      %v2298 = vunpack.c.l.b16 %v2279
      %v2299 = vunpack.c.l.b16 %v2280
      %v2300 = vunpack.c.l.b16 %v2281
      %v2301 = vunpack.c.l.b16 %v2282
      %v2302 = vpack.c.b16 %v2298, %v2297
      %v2303 = vpack.c.b16 %v2300, %v2299
      %v2304 = vpack.c.b16 %v2301, %v2301
      %vm2307 = vcmask 326656
      %v2309 = vsel %vm2307, %v2283, 0
      %v2312 = vsel %vm2307, %v2284, 0
      %v2315 = vsel %vm1085, %v2304, 0
      %2317 = vmatprep.subr.bf16.mxu0 0
      %2318 = vmatpush1.bf16.msra.mxu0 %v2302
      %2319 = vmatprep.subr.bf16.mxu0 0
      %2320 = vmatpush1.bf16.msra.mxu0 %v2303
      %2321 = vmatprep.subr.bf16.mxu0 0
      %2322 = vmatpush1.bf16.msra.mxu0 %v2315
      %2323 = vmatprep.subr.bf16.mxu0 0
      %2324 = vmatpush1.bf16.msra.mxu0 0
      %2325 = vmatprep.subr.bf16.mxu0 0
      %2326 = vmatpush1.bf16.msra.mxu0 0
      %2327 = vmatprep.subr.bf16.mxu0 0
      %2328 = vmatpush1.bf16.msra.mxu0 0
      %2329 = vmatprep.subr.bf16.mxu0 0
      %2330 = vmatpush1.bf16.msra.mxu0 0
      %2331 = vmatprep.subr.bf16.mxu0 0
      %2332 = vmatpush1.bf16.msra.mxu0 0
      %2333 = vmatprep.subr.bf16.mxu0 0
      %2334 = vmatpush1.bf16.msra.mxu0 0
      %2335 = vmatprep.subr.bf16.mxu0 0
      %2336 = vmatpush1.bf16.msra.mxu0 0
      %2337 = vmatprep.subr.bf16.mxu0 0
      %2338 = vmatpush1.bf16.msra.mxu0 0
      %2339 = vmatprep.subr.bf16.mxu0 0
      %2340 = vmatpush1.bf16.msra.mxu0 0
      %2341 = vmatprep.subr.bf16.mxu0 0
      %2342 = vmatpush1.bf16.msra.mxu0 0
      %2343 = vmatprep.subr.bf16.mxu0 0
      %2344 = vmatpush1.bf16.msra.mxu0 0
      %2345 = vmatprep.subr.bf16.mxu0 0
      %2346 = vmatpush1.bf16.msra.mxu0 0
      %2347 = vmatprep.subr.bf16.mxu0 0
      %2348 = vmatpush1.bf16.msra.mxu0 0
      %2349 = vmatprep.mubr.bf16.mxu0 0
      %2350 = vmatmul.mubr.bf16.gmra.mrb[0].mxu0 %v2309
      %v2351 = vpop.f32.mrb[0].mxu0
      %v2352 = vadd.f32 %v2290, %v2351
      %v2353 = vpop.f32.mrb[0].mxu0
      %v2354 = vpop.f32.mrb[0].mxu0
      %v2355 = vadd.f32 %v2290, %v2354
      %v2356 = vpop.f32.mrb[0].mxu0
      %2357 = vmatprep.mubr.bf16.mxu0 0
      %2358 = vmatmul.mubr.bf16.gmra.mrb[0].mxu0 %v2312
      %v2359 = vpop.f32.mrb[0].mxu0
      %v2360 = vadd.f32 %v2290, %v2359
      %v2361 = vpop.f32.mrb[0].mxu0
      %v2362 = vpop.f32.mrb[0].mxu0
      %v2363 = vadd.f32 %v2290, %v2362
      %v2364 = vpop.f32.mrb[0].mxu0
      %2365 = vdwg.mxu0
      %v2366 = vmax.f32 %v2352, 0.0
      %v2367 = vmax.f32 %v2355, 0.0
      %v2368 = vmax.f32 %v2360, 0.0
      %v2369 = vmax.f32 %v2363, 0.0
      %v2370 = vld [vmem:[%s16] sm:$0xf]
      %v2371 = vpack.c.bf16 %v2367, %v2366
      %v2372 = vpack.c.bf16 %v2369, %v2368
      %v2373 = vld [vmem:[%s17] sm:$0x1]
      %v2375 = vlaneseq
      %v2376 = vshrl.u32 %v2375, 7
      %v2377 = vsub.s32 0, %v2376
      %v2378 = vrot.slane %v2373, %v2377
      %v2381 = vsel %vm1112, %v2371, 0
      %v2384 = vsel %vm1112, %v2372, 0
      %v2387 = vsel %vm1085, %v2370, 0
      %2389 = vmatprep.subr.bf16.mxu0 0
      %2390 = vmatpush1.bf16.msra.mxu0 %v2387
      %2391 = vmatprep.subr.bf16.mxu0 0
      %2392 = vmatpush1.bf16.msra.mxu0 0
      %2393 = vmatprep.subr.bf16.mxu0 0
      %2394 = vmatpush1.bf16.msra.mxu0 0
      %2395 = vmatprep.subr.bf16.mxu0 0
      %2396 = vmatpush1.bf16.msra.mxu0 0
      %2397 = vmatprep.subr.bf16.mxu0 0
      %2398 = vmatpush1.bf16.msra.mxu0 0
      %2399 = vmatprep.subr.bf16.mxu0 0
      %2400 = vmatpush1.bf16.msra.mxu0 0
      %2401 = vmatprep.subr.bf16.mxu0 0
      %2402 = vmatpush1.bf16.msra.mxu0 0
      %2403 = vmatprep.subr.bf16.mxu0 0
      %2404 = vmatpush1.bf16.msra.mxu0 0
      %2405 = vmatprep.subr.bf16.mxu0 0
      %2406 = vmatpush1.bf16.msra.mxu0 0
      %2407 = vmatprep.subr.bf16.mxu0 0
      %2408 = vmatpush1.bf16.msra.mxu0 0
      %2409 = vmatprep.subr.bf16.mxu0 0
      %2410 = vmatpush1.bf16.msra.mxu0 0
      %2411 = vmatprep.subr.bf16.mxu0 0
      %2412 = vmatpush1.bf16.msra.mxu0 0
      %2413 = vmatprep.subr.bf16.mxu0 0
      %2414 = vmatpush1.bf16.msra.mxu0 0
      %2415 = vmatprep.subr.bf16.mxu0 0
      %2416 = vmatpush1.bf16.msra.mxu0 0
      %2417 = vmatprep.subr.bf16.mxu0 0
      %2418 = vmatpush1.bf16.msra.mxu0 0
      %2419 = vmatprep.subr.bf16.mxu0 0
      %2420 = vmatpush1.bf16.msra.mxu0 0
      %2421 = vmatprep.mubr.bf16.mxu0 0
      %2422 = vmatmul.mubr.bf16.gmra.mrb[0].mxu0 %v2381
      %v2423 = vpop.f32.mrb[0].mxu0
      %v2424 = vadd.f32 %v2378, %v2423
      %v2425 = vpop.f32.mrb[0].mxu0
      %v2426 = vpop.f32.mrb[0].mxu0
      %v2427 = vadd.f32 %v2378, %v2426
      %v2428 = vpop.f32.mrb[0].mxu0
      %2429 = vmatprep.mubr.bf16.mxu0 0
      %2430 = vmatmul.mubr.bf16.gmra.mrb[0].mxu0 %v2384
      %v2431 = vpop.f32.mrb[0].mxu0
      %v2432 = vadd.f32 %v2378, %v2431
      %v2433 = vpop.f32.mrb[0].mxu0
      %v2434 = vpop.f32.mrb[0].mxu0
      %v2435 = vadd.f32 %v2378, %v2434
      %v2436 = vpop.f32.mrb[0].mxu0
      %2437 = vdwg.mxu0
      %v2438 = vadd.f32 %v2034, %v2424
      %v2439 = vadd.f32 %v2037, %v2427
      %v2440 = vadd.f32 %v2042, %v2432
      %v2441 = vadd.f32 %v2045, %v2435
      %v2442 = vmax.f32 %v2438, 0.0
      %v2443 = vmax.f32 %v2439, 0.0
      %v2444 = vmax.f32 %v2440, 0.0
      %v2445 = vmax.f32 %v2441, 0.0
      %s2446 = scalar_lea.vmem %s12, 32
      %v2447 = vld [vmem:[%s2446] sm:$0xf]
      %v2448 = vld [vmem:[%s2446 + $0x4] sm:$0xf]
      %v2449 = vld [vmem:[%s2446 + $0x8] sm:$0xf]
      %v2450 = vld [vmem:[%s2446 + $0xc] sm:$0xf]
      %v2451 = vld [vmem:[%s2446 + $0x10] sm:$0xf]
      %v2452 = vld [vmem:[%s2446 + $0x14] sm:$0xf]
      %v2453 = vld [vmem:[%s2446 + $0x18] sm:$0xf]
      %v2454 = vld [vmem:[%s2446 + $0x1c] sm:$0xf]
      %v2455 = vpack.c.bf16 %v2443, %v2442
      %v2456 = vpack.c.bf16 %v2445, %v2444
      %s2457 = scalar_lea.vmem %s13, 1
      %v2458 = vld [vmem:[%s2457] sm:$0x1]
      %v2460 = vlaneseq
      %v2461 = vshrl.u32 %v2460, 7
      %v2462 = vsub.s32 0, %v2461
      %v2463 = vrot.slane %v2458, %v2462
      %v2473 = vunpack.c.l.b16 %v2447
      %v2474 = vunpack.c.l.b16 %v2448
      %v2475 = vunpack.c.l.b16 %v2449
      %v2476 = vunpack.c.l.b16 %v2450
      %v2477 = vunpack.c.l.b16 %v2451
      %v2478 = vunpack.c.l.b16 %v2452
      %v2479 = vunpack.c.l.b16 %v2453
      %v2480 = vunpack.c.l.b16 %v2454
      %v2481 = vpack.c.b16 %v2474, %v2473
      %v2482 = vpack.c.b16 %v2476, %v2475
      %v2483 = vpack.c.b16 %v2478, %v2477
      %v2484 = vpack.c.b16 %v2480, %v2479
      %v2490 = vsel %vm2089, %v2455, 0
      %v2493 = vsel %vm2089, %v2456, 0
      %2495 = vmatprep.subr.bf16.mxu0 0
      %2496 = vmatpush1.bf16.msra.mxu0 %v2481
      %2497 = vmatprep.subr.bf16.mxu0 0
      %2498 = vmatpush1.bf16.msra.mxu0 %v2482
      %2499 = vmatprep.subr.bf16.mxu0 0
      %2500 = vmatpush1.bf16.msra.mxu0 %v2483
      %2501 = vmatprep.subr.bf16.mxu0 0
      %2502 = vmatpush1.bf16.msra.mxu0 %v2484
      %2503 = vmatprep.subr.bf16.mxu0 0
      %2504 = vmatpush1.bf16.msra.mxu0 0
      %2505 = vmatprep.subr.bf16.mxu0 0
      %2506 = vmatpush1.bf16.msra.mxu0 0
      %2507 = vmatprep.subr.bf16.mxu0 0
      %2508 = vmatpush1.bf16.msra.mxu0 0
      %2509 = vmatprep.subr.bf16.mxu0 0
      %2510 = vmatpush1.bf16.msra.mxu0 0
      %2511 = vmatprep.subr.bf16.mxu0 0
      %2512 = vmatpush1.bf16.msra.mxu0 0
      %2513 = vmatprep.subr.bf16.mxu0 0
      %2514 = vmatpush1.bf16.msra.mxu0 0
      %2515 = vmatprep.subr.bf16.mxu0 0
      %2516 = vmatpush1.bf16.msra.mxu0 0
      %2517 = vmatprep.subr.bf16.mxu0 0
      %2518 = vmatpush1.bf16.msra.mxu0 0
      %2519 = vmatprep.subr.bf16.mxu0 0
      %2520 = vmatpush1.bf16.msra.mxu0 0
      %2521 = vmatprep.subr.bf16.mxu0 0
      %2522 = vmatpush1.bf16.msra.mxu0 0
      %2523 = vmatprep.subr.bf16.mxu0 0
      %2524 = vmatpush1.bf16.msra.mxu0 0
      %2525 = vmatprep.subr.bf16.mxu0 0
      %2526 = vmatpush1.bf16.msra.mxu0 0
      %2527 = vmatprep.mubr.bf16.mxu0 0
      %2528 = vmatmul.mubr.bf16.gmra.mrb[0].mxu0 %v2490
      %v2529 = vpop.f32.mrb[0].mxu0
      %v2530 = vadd.f32 %v2463, %v2529
      %v2531 = vpop.f32.mrb[0].mxu0
      %v2532 = vpop.f32.mrb[0].mxu0
      %v2533 = vadd.f32 %v2463, %v2532
      %v2534 = vpop.f32.mrb[0].mxu0
      %2535 = vmatprep.mubr.bf16.mxu0 0
      %2536 = vmatmul.mubr.bf16.gmra.mrb[0].mxu0 %v2493
      %v2537 = vpop.f32.mrb[0].mxu0
      %v2538 = vadd.f32 %v2463, %v2537
      %v2539 = vpop.f32.mrb[0].mxu0
      %v2540 = vpop.f32.mrb[0].mxu0
      %v2541 = vadd.f32 %v2463, %v2540
      %v2542 = vpop.f32.mrb[0].mxu0
      %2543 = vdwg.mxu0
      %v2544 = vmax.f32 %v2530, 0.0
      %v2545 = vmax.f32 %v2533, 0.0
      %v2546 = vmax.f32 %v2538, 0.0
      %v2547 = vmax.f32 %v2541, 0.0
      %v2552 = vrot.slane %v2544, 4
      %v2553 = vrot.slane %v2545, 4
      %v2554 = vsel %vm1085, %v2552, %v2553
      %v2555 = vrot.slane %v2546, 4
      %v2556 = vrot.slane %v2547, 4
      %v2557 = vsel %vm1085, %v2555, %v2556
      %v2564 = vsel %vm1085, 0.0, %v2552
      %v2565 = vsel %vm1085, 0.0, %v2555
      %v2566 = vsel %vm1085, %v2553, 0.0
      %v2567 = vsel %vm1085, %v2556, 0.0
      %v2572 = vrot.slane %v2564, 2
      %v2573 = vrot.slane %v2554, 2
      %v2574 = vsel %vm1039, %v2572, %v2573
      %v2575 = vrot.slane %v2566, 2
      %v2576 = vsel %vm1039, %v2573, %v2575
      %v2577 = vrot.slane %v2565, 2
      %v2578 = vrot.slane %v2557, 2
      %v2579 = vsel %vm1039, %v2577, %v2578
      %v2580 = vrot.slane %v2567, 2
      %v2581 = vsel %vm1039, %v2578, %v2580
      %2582 = vrot.lane.b32.xlu0 %v2574, 8
      %v2583 = vpop.permute.xlu0 %2582
      %2584 = vrot.lane.b32.xlu0 %v2576, 8
      %v2585 = vpop.permute.xlu0 %2584
      %2586 = vrot.lane.b32.xlu0 %v2579, 8
      %v2587 = vpop.permute.xlu0 %2586
      %2588 = vrot.lane.b32.xlu0 %v2581, 8
      %v2589 = vpop.permute.xlu0 %2588
      %v2594 = vrot.slane %v2564, 4
      %v2595 = vrot.slane %v2554, 4
      %v2596 = vsel %vm1085, %v2594, %v2595
      %v2597 = vrot.slane %v2566, 4
      %v2598 = vsel %vm1085, %v2595, %v2597
      %v2599 = vrot.slane %v2565, 4
      %v2600 = vrot.slane %v2557, 4
      %v2601 = vsel %vm1085, %v2599, %v2600
      %v2602 = vrot.slane %v2567, 4
      %v2603 = vsel %vm1085, %v2600, %v2602
      %2604 = vrot.lane.b32.xlu0 %v2596, 16
      %v2605 = vpop.permute.xlu0 %2604
      %2606 = vrot.lane.b32.xlu0 %v2598, 16
      %v2607 = vpop.permute.xlu0 %2606
      %2608 = vrot.lane.b32.xlu0 %v2601, 16
      %v2609 = vpop.permute.xlu0 %2608
      %2610 = vrot.lane.b32.xlu0 %v2603, 16
      %v2611 = vpop.permute.xlu0 %2610
      %v2616 = vrot.slane %v2564, 6
      %v2617 = vrot.slane %v2554, 6
      %v2618 = vsel %vm854, %v2616, %v2617
      %v2619 = vrot.slane %v2566, 6
      %v2620 = vsel %vm854, %v2617, %v2619
      %v2621 = vrot.slane %v2565, 6
      %v2622 = vrot.slane %v2557, 6
      %v2623 = vsel %vm854, %v2621, %v2622
      %v2624 = vrot.slane %v2567, 6
      %v2625 = vsel %vm854, %v2622, %v2624
      %2626 = vrot.lane.b32.xlu0 %v2618, 24
      %v2627 = vpop.permute.xlu0 %2626
      %2628 = vrot.lane.b32.xlu0 %v2620, 24
      %v2629 = vpop.permute.xlu0 %2628
      %2630 = vrot.lane.b32.xlu0 %v2623, 24
      %v2631 = vpop.permute.xlu0 %2630
      %2632 = vrot.lane.b32.xlu0 %v2625, 24
      %v2633 = vpop.permute.xlu0 %2632
      %2638 = vrot.lane.b32.xlu0 %v2554, 32
      %v2639 = vpop.permute.xlu0 %2638
      %2640 = vrot.lane.b32.xlu0 %v2566, 32
      %v2641 = vpop.permute.xlu0 %2640
      %2642 = vrot.lane.b32.xlu0 %v2557, 32
      %v2643 = vpop.permute.xlu0 %2642
      %2644 = vrot.lane.b32.xlu0 %v2567, 32
      %v2645 = vpop.permute.xlu0 %2644
      %v2650 = vsel %vm1112, %v2564, %v2583
      %v2651 = vsel %vm1112, %v2554, %v2585
      %v2652 = vsel %vm1112, %v2565, %v2587
      %v2653 = vsel %vm1112, %v2557, %v2589
      %v2654 = vsel %vm1122, %v2650, %v2605
      %v2655 = vsel %vm1122, %v2651, %v2607
      %v2656 = vsel %vm1122, %v2652, %v2609
      %v2657 = vsel %vm1122, %v2653, %v2611
      %v2658 = vsel %vm2269, %v2654, %v2627
      %v2659 = vsel %vm2269, %v2655, %v2629
      %v2660 = vsel %vm2269, %v2656, %v2631
      %v2661 = vsel %vm2269, %v2657, %v2633
      %v2662 = vsel %vm932, %v2658, %v2639
      %v2663 = vsel %vm932, %v2659, %v2641
      %v2664 = vsel %vm932, %v2660, %v2643
      %v2665 = vsel %vm932, %v2661, %v2645
      %s2666 = scalar_lea.vmem %s14, 20
      %v2667 = vld [vmem:[%s2666] sm:$0xf]
      %v2668 = vld [vmem:[%s2666 + $0x4] sm:$0xf]
      %v2669 = vld [vmem:[%s2666 + $0x8] sm:$0xf]
      %v2670 = vld [vmem:[%s2666 + $0xc] sm:$0xf]
      %v2671 = vld [vmem:[%s2666 + $0x10] sm:$0xf]
      %v2672 = vpack.c.bf16 %v2663, %v2662
      %v2673 = vpack.c.bf16 %v2665, %v2664
      %s2674 = scalar_lea.vmem %s15, 1
      %v2675 = vld [vmem:[%s2674] sm:$0x1]
      %v2677 = vlaneseq
      %v2678 = vshrl.u32 %v2677, 7
      %v2679 = vsub.s32 0, %v2678
      %v2680 = vrot.slane %v2675, %v2679
      %v2687 = vunpack.c.l.b16 %v2667
      %v2688 = vunpack.c.l.b16 %v2668
      %v2689 = vunpack.c.l.b16 %v2669
      %v2690 = vunpack.c.l.b16 %v2670
      %v2691 = vunpack.c.l.b16 %v2671
      %v2692 = vpack.c.b16 %v2688, %v2687
      %v2693 = vpack.c.b16 %v2690, %v2689
      %v2694 = vpack.c.b16 %v2691, %v2691
      %v2698 = vsel %vm2307, %v2672, 0
      %v2701 = vsel %vm2307, %v2673, 0
      %v2704 = vsel %vm1085, %v2694, 0
      %2706 = vmatprep.subr.bf16.mxu0 0
      %2707 = vmatpush1.bf16.msra.mxu0 %v2692
      %2708 = vmatprep.subr.bf16.mxu0 0
      %2709 = vmatpush1.bf16.msra.mxu0 %v2693
      %2710 = vmatprep.subr.bf16.mxu0 0
      %2711 = vmatpush1.bf16.msra.mxu0 %v2704
      %2712 = vmatprep.subr.bf16.mxu0 0
      %2713 = vmatpush1.bf16.msra.mxu0 0
      %2714 = vmatprep.subr.bf16.mxu0 0
      %2715 = vmatpush1.bf16.msra.mxu0 0
      %2716 = vmatprep.subr.bf16.mxu0 0
      %2717 = vmatpush1.bf16.msra.mxu0 0
      %2718 = vmatprep.subr.bf16.mxu0 0
      %2719 = vmatpush1.bf16.msra.mxu0 0
      %2720 = vmatprep.subr.bf16.mxu0 0
      %2721 = vmatpush1.bf16.msra.mxu0 0
      %2722 = vmatprep.subr.bf16.mxu0 0
      %2723 = vmatpush1.bf16.msra.mxu0 0
      %2724 = vmatprep.subr.bf16.mxu0 0
      %2725 = vmatpush1.bf16.msra.mxu0 0
      %2726 = vmatprep.subr.bf16.mxu0 0
      %2727 = vmatpush1.bf16.msra.mxu0 0
      %2728 = vmatprep.subr.bf16.mxu0 0
      %2729 = vmatpush1.bf16.msra.mxu0 0
      %2730 = vmatprep.subr.bf16.mxu0 0
      %2731 = vmatpush1.bf16.msra.mxu0 0
      %2732 = vmatprep.subr.bf16.mxu0 0
      %2733 = vmatpush1.bf16.msra.mxu0 0
      %2734 = vmatprep.subr.bf16.mxu0 0
      %2735 = vmatpush1.bf16.msra.mxu0 0
      %2736 = vmatprep.subr.bf16.mxu0 0
      %2737 = vmatpush1.bf16.msra.mxu0 0
      %2738 = vmatprep.mubr.bf16.mxu0 0
      %2739 = vmatmul.mubr.bf16.gmra.mrb[0].mxu0 %v2698
      %v2740 = vpop.f32.mrb[0].mxu0
      %v2741 = vadd.f32 %v2680, %v2740
      %v2742 = vpop.f32.mrb[0].mxu0
      %v2743 = vpop.f32.mrb[0].mxu0
      %v2744 = vadd.f32 %v2680, %v2743
      %v2745 = vpop.f32.mrb[0].mxu0
      %2746 = vmatprep.mubr.bf16.mxu0 0
      %2747 = vmatmul.mubr.bf16.gmra.mrb[0].mxu0 %v2701
      %v2748 = vpop.f32.mrb[0].mxu0
      %v2749 = vadd.f32 %v2680, %v2748
      %v2750 = vpop.f32.mrb[0].mxu0
      %v2751 = vpop.f32.mrb[0].mxu0
      %v2752 = vadd.f32 %v2680, %v2751
      %v2753 = vpop.f32.mrb[0].mxu0
      %2754 = vdwg.mxu0
      %v2755 = vmax.f32 %v2741, 0.0
      %v2756 = vmax.f32 %v2744, 0.0
      %v2757 = vmax.f32 %v2749, 0.0
      %v2758 = vmax.f32 %v2752, 0.0
      %s2759 = scalar_lea.vmem %s16, 4
      %v2760 = vld [vmem:[%s2759] sm:$0xf]
      %v2761 = vpack.c.bf16 %v2756, %v2755
      %v2762 = vpack.c.bf16 %v2758, %v2757
      %s2763 = scalar_lea.vmem %s17, 1
      %v2764 = vld [vmem:[%s2763] sm:$0x1]
      %v2766 = vlaneseq
      %v2767 = vshrl.u32 %v2766, 7
      %v2768 = vsub.s32 0, %v2767
      %v2769 = vrot.slane %v2764, %v2768
      %v2772 = vsel %vm1112, %v2761, 0
      %v2775 = vsel %vm1112, %v2762, 0
      %v2778 = vsel %vm1085, %v2760, 0
      %2780 = vmatprep.subr.bf16.mxu0 0
      %2781 = vmatpush1.bf16.msra.mxu0 %v2778
      %2782 = vmatprep.subr.bf16.mxu0 0
      %2783 = vmatpush1.bf16.msra.mxu0 0
      %2784 = vmatprep.subr.bf16.mxu0 0
      %2785 = vmatpush1.bf16.msra.mxu0 0
      %2786 = vmatprep.subr.bf16.mxu0 0
      %2787 = vmatpush1.bf16.msra.mxu0 0
      %2788 = vmatprep.subr.bf16.mxu0 0
      %2789 = vmatpush1.bf16.msra.mxu0 0
      %2790 = vmatprep.subr.bf16.mxu0 0
      %2791 = vmatpush1.bf16.msra.mxu0 0
      %2792 = vmatprep.subr.bf16.mxu0 0
      %2793 = vmatpush1.bf16.msra.mxu0 0
      %2794 = vmatprep.subr.bf16.mxu0 0
      %2795 = vmatpush1.bf16.msra.mxu0 0
      %2796 = vmatprep.subr.bf16.mxu0 0
      %2797 = vmatpush1.bf16.msra.mxu0 0
      %2798 = vmatprep.subr.bf16.mxu0 0
      %2799 = vmatpush1.bf16.msra.mxu0 0
      %2800 = vmatprep.subr.bf16.mxu0 0
      %2801 = vmatpush1.bf16.msra.mxu0 0
      %2802 = vmatprep.subr.bf16.mxu0 0
      %2803 = vmatpush1.bf16.msra.mxu0 0
      %2804 = vmatprep.subr.bf16.mxu0 0
      %2805 = vmatpush1.bf16.msra.mxu0 0
      %2806 = vmatprep.subr.bf16.mxu0 0
      %2807 = vmatpush1.bf16.msra.mxu0 0
      %2808 = vmatprep.subr.bf16.mxu0 0
      %2809 = vmatpush1.bf16.msra.mxu0 0
      %2810 = vmatprep.subr.bf16.mxu0 0
      %2811 = vmatpush1.bf16.msra.mxu0 0
      %2812 = vmatprep.mubr.bf16.mxu0 0
      %2813 = vmatmul.mubr.bf16.gmra.mrb[0].mxu0 %v2772
      %v2814 = vpop.f32.mrb[0].mxu0
      %v2815 = vadd.f32 %v2769, %v2814
      %v2816 = vpop.f32.mrb[0].mxu0
      %v2817 = vpop.f32.mrb[0].mxu0
      %v2818 = vadd.f32 %v2769, %v2817
      %v2819 = vpop.f32.mrb[0].mxu0
      %2820 = vmatprep.mubr.bf16.mxu0 0
      %2821 = vmatmul.mubr.bf16.gmra.mrb[0].mxu0 %v2775
      %v2822 = vpop.f32.mrb[0].mxu0
      %v2823 = vadd.f32 %v2769, %v2822
      %v2824 = vpop.f32.mrb[0].mxu0
      %v2825 = vpop.f32.mrb[0].mxu0
      %v2826 = vadd.f32 %v2769, %v2825
      %v2827 = vpop.f32.mrb[0].mxu0
      %2828 = vdwg.mxu0
      %v2829 = vadd.f32 %v2442, %v2815
      %v2830 = vadd.f32 %v2443, %v2818
      %v2831 = vadd.f32 %v2444, %v2823
      %v2832 = vadd.f32 %v2445, %v2826
      %v2833 = vmax.f32 %v2829, 0.0
      %v2834 = vmax.f32 %v2830, 0.0
      %v2835 = vmax.f32 %v2831, 0.0
      %v2836 = vmax.f32 %v2832, 0.0
      %s2837 = scalar_lea.vmem %s12, 64
      %v2838 = vld [vmem:[%s2837] sm:$0xf]
      %v2839 = vld [vmem:[%s2837 + $0x4] sm:$0xf]
      %v2840 = vld [vmem:[%s2837 + $0x8] sm:$0xf]
      %v2841 = vld [vmem:[%s2837 + $0xc] sm:$0xf]
      %v2842 = vld [vmem:[%s2837 + $0x10] sm:$0xf]
      %v2843 = vld [vmem:[%s2837 + $0x14] sm:$0xf]
      %v2844 = vld [vmem:[%s2837 + $0x18] sm:$0xf]
      %v2845 = vld [vmem:[%s2837 + $0x1c] sm:$0xf]
      %v2846 = vpack.c.bf16 %v2834, %v2833
      %v2847 = vpack.c.bf16 %v2836, %v2835
      %s2848 = scalar_lea.vmem %s13, 2
      %v2849 = vld [vmem:[%s2848] sm:$0x1]
      %v2851 = vlaneseq
      %v2852 = vshrl.u32 %v2851, 7
      %v2853 = vsub.s32 0, %v2852
      %v2854 = vrot.slane %v2849, %v2853
      %v2864 = vunpack.c.l.b16 %v2838
      %v2865 = vunpack.c.l.b16 %v2839
      %v2866 = vunpack.c.l.b16 %v2840
      %v2867 = vunpack.c.l.b16 %v2841
      %v2868 = vunpack.c.l.b16 %v2842
      %v2869 = vunpack.c.l.b16 %v2843
      %v2870 = vunpack.c.l.b16 %v2844
      %v2871 = vunpack.c.l.b16 %v2845
      %v2872 = vpack.c.b16 %v2865, %v2864
      %v2873 = vpack.c.b16 %v2867, %v2866
      %v2874 = vpack.c.b16 %v2869, %v2868
      %v2875 = vpack.c.b16 %v2871, %v2870
      %v2881 = vsel %vm2089, %v2846, 0
      %v2884 = vsel %vm2089, %v2847, 0
      %2886 = vmatprep.subr.bf16.mxu0 0
      %2887 = vmatpush1.bf16.msra.mxu0 %v2872
      %2888 = vmatprep.subr.bf16.mxu0 0
      %2889 = vmatpush1.bf16.msra.mxu0 %v2873
      %2890 = vmatprep.subr.bf16.mxu0 0
      %2891 = vmatpush1.bf16.msra.mxu0 %v2874
      %2892 = vmatprep.subr.bf16.mxu0 0
      %2893 = vmatpush1.bf16.msra.mxu0 %v2875
      %2894 = vmatprep.subr.bf16.mxu0 0
      %2895 = vmatpush1.bf16.msra.mxu0 0
      %2896 = vmatprep.subr.bf16.mxu0 0
      %2897 = vmatpush1.bf16.msra.mxu0 0
      %2898 = vmatprep.subr.bf16.mxu0 0
      %2899 = vmatpush1.bf16.msra.mxu0 0
      %2900 = vmatprep.subr.bf16.mxu0 0
      %2901 = vmatpush1.bf16.msra.mxu0 0
      %2902 = vmatprep.subr.bf16.mxu0 0
      %2903 = vmatpush1.bf16.msra.mxu0 0
      %2904 = vmatprep.subr.bf16.mxu0 0
      %2905 = vmatpush1.bf16.msra.mxu0 0
      %2906 = vmatprep.subr.bf16.mxu0 0
      %2907 = vmatpush1.bf16.msra.mxu0 0
      %2908 = vmatprep.subr.bf16.mxu0 0
      %2909 = vmatpush1.bf16.msra.mxu0 0
      %2910 = vmatprep.subr.bf16.mxu0 0
      %2911 = vmatpush1.bf16.msra.mxu0 0
      %2912 = vmatprep.subr.bf16.mxu0 0
      %2913 = vmatpush1.bf16.msra.mxu0 0
      %2914 = vmatprep.subr.bf16.mxu0 0
      %2915 = vmatpush1.bf16.msra.mxu0 0
      %2916 = vmatprep.subr.bf16.mxu0 0
      %2917 = vmatpush1.bf16.msra.mxu0 0
      %2918 = vmatprep.mubr.bf16.mxu0 0
      %2919 = vmatmul.mubr.bf16.gmra.mrb[0].mxu0 %v2881
      %v2920 = vpop.f32.mrb[0].mxu0
      %v2921 = vadd.f32 %v2854, %v2920
      %v2922 = vpop.f32.mrb[0].mxu0
      %v2923 = vpop.f32.mrb[0].mxu0
      %v2924 = vadd.f32 %v2854, %v2923
      %v2925 = vpop.f32.mrb[0].mxu0
      %2926 = vmatprep.mubr.bf16.mxu0 0
      %2927 = vmatmul.mubr.bf16.gmra.mrb[0].mxu0 %v2884
      %v2928 = vpop.f32.mrb[0].mxu0
      %v2929 = vadd.f32 %v2854, %v2928
      %v2930 = vpop.f32.mrb[0].mxu0
      %v2931 = vpop.f32.mrb[0].mxu0
      %v2932 = vadd.f32 %v2854, %v2931
      %v2933 = vpop.f32.mrb[0].mxu0
      %2934 = vdwg.mxu0
      %v2935 = vmax.f32 %v2921, 0.0
      %v2936 = vmax.f32 %v2924, 0.0
      %v2937 = vmax.f32 %v2929, 0.0
      %v2938 = vmax.f32 %v2932, 0.0
      %v2943 = vrot.slane %v2935, 4
      %v2944 = vsel %vm1085, %v1745, %v2943
      %v2945 = vrot.slane %v2936, 4
      %v2946 = vsel %vm1085, %v2943, %v2945
      %v2947 = vrot.slane %v2937, 4
      %v2948 = vsel %vm1085, %v1745, %v2947
      %v2949 = vrot.slane %v2938, 4
      %v2950 = vsel %vm1085, %v2947, %v2949
      %2951 = vrot.lane.b32.xlu0 %v2944, 8
      %v2952 = vpop.permute.xlu0 %2951
      %2953 = vrot.lane.b32.xlu0 %v2946, 8
      %v2954 = vpop.permute.xlu0 %2953
      %2955 = vrot.lane.b32.xlu0 %v2948, 8
      %v2956 = vpop.permute.xlu0 %2955
      %2957 = vrot.lane.b32.xlu0 %v2950, 8
      %v2958 = vpop.permute.xlu0 %2957
      %2963 = vrot.lane.b32.xlu0 %v2935, 16
      %v2964 = vpop.permute.xlu0 %2963
      %2965 = vrot.lane.b32.xlu0 %v2936, 16
      %v2966 = vpop.permute.xlu0 %2965
      %2967 = vrot.lane.b32.xlu0 %v2937, 16
      %v2968 = vpop.permute.xlu0 %2967
      %2969 = vrot.lane.b32.xlu0 %v2938, 16
      %v2970 = vpop.permute.xlu0 %2969
      %v2975 = vsel %vm1085, %v2945, %v1745
      %v2976 = vsel %vm1085, %v2949, %v1745
      %2977 = vrot.lane.b32.xlu0 %v2946, 24
      %v2978 = vpop.permute.xlu0 %2977
      %2979 = vrot.lane.b32.xlu0 %v2975, 24
      %v2980 = vpop.permute.xlu0 %2979
      %2981 = vrot.lane.b32.xlu0 %v2950, 24
      %v2982 = vpop.permute.xlu0 %2981
      %2983 = vrot.lane.b32.xlu0 %v2976, 24
      %v2984 = vpop.permute.xlu0 %2983
      %2989 = vrot.lane.b32.xlu0 %v2936, 32
      %v2990 = vpop.permute.xlu0 %2989
      %2991 = vrot.lane.b32.xlu0 0.0, 32
      %v2992 = vpop.permute.xlu0 %2991
      %2993 = vrot.lane.b32.xlu0 %v2938, 32
      %v2994 = vpop.permute.xlu0 %2993
      %v2998 = vsel %vm1112, 0.0, %v2952
      %v2999 = vsel %vm1112, %v2935, %v2954
      %v3000 = vsel %vm1112, 0.0, %v2956
      %v3001 = vsel %vm1112, %v2937, %v2958
      %v3002 = vsel %vm1122, %v2998, %v2964
      %v3003 = vsel %vm1122, %v2999, %v2966
      %v3004 = vsel %vm1122, %v3000, %v2968
      %v3005 = vsel %vm1122, %v3001, %v2970
      %v3006 = vsel %vm2269, %v3002, %v2978
      %v3007 = vsel %vm2269, %v3003, %v2980
      %v3008 = vsel %vm2269, %v3004, %v2982
      %v3009 = vsel %vm2269, %v3005, %v2984
      %v3010 = vsel %vm932, %v3006, %v2990
      %v3011 = vsel %vm932, %v3007, %v2992
      %v3012 = vsel %vm932, %v3008, %v2994
      %v3013 = vsel %vm932, %v3009, %v2992
      %s3014 = scalar_lea.vmem %s14, 40
      %v3015 = vld [vmem:[%s3014] sm:$0xf]
      %v3016 = vld [vmem:[%s3014 + $0x4] sm:$0xf]
      %v3017 = vld [vmem:[%s3014 + $0x8] sm:$0xf]
      %v3018 = vld [vmem:[%s3014 + $0xc] sm:$0xf]
      %v3019 = vld [vmem:[%s3014 + $0x10] sm:$0xf]
      %v3020 = vpack.c.bf16 %v3011, %v3010
      %v3021 = vpack.c.bf16 %v3013, %v3012
      %s3022 = scalar_lea.vmem %s15, 2
      %v3023 = vld [vmem:[%s3022] sm:$0x1]
      %v3025 = vlaneseq
      %v3026 = vshrl.u32 %v3025, 7
      %v3027 = vsub.s32 0, %v3026
      %v3028 = vrot.slane %v3023, %v3027
      %v3035 = vunpack.c.l.b16 %v3015
      %v3036 = vunpack.c.l.b16 %v3016
      %v3037 = vunpack.c.l.b16 %v3017
      %v3038 = vunpack.c.l.b16 %v3018
      %v3039 = vunpack.c.l.b16 %v3019
      %v3040 = vpack.c.b16 %v3036, %v3035
      %v3041 = vpack.c.b16 %v3038, %v3037
      %v3042 = vpack.c.b16 %v3039, %v3039
      %v3046 = vsel %vm2307, %v3020, 0
      %v3049 = vsel %vm2307, %v3021, 0
      %v3052 = vsel %vm1085, %v3042, 0
      %3054 = vmatprep.subr.bf16.mxu0 0
      %3055 = vmatpush1.bf16.msra.mxu0 %v3040
      %3056 = vmatprep.subr.bf16.mxu0 0
      %3057 = vmatpush1.bf16.msra.mxu0 %v3041
      %3058 = vmatprep.subr.bf16.mxu0 0
      %3059 = vmatpush1.bf16.msra.mxu0 %v3052
      %3060 = vmatprep.subr.bf16.mxu0 0
      %3061 = vmatpush1.bf16.msra.mxu0 0
      %3062 = vmatprep.subr.bf16.mxu0 0
      %3063 = vmatpush1.bf16.msra.mxu0 0
      %3064 = vmatprep.subr.bf16.mxu0 0
      %3065 = vmatpush1.bf16.msra.mxu0 0
      %3066 = vmatprep.subr.bf16.mxu0 0
      %3067 = vmatpush1.bf16.msra.mxu0 0
      %3068 = vmatprep.subr.bf16.mxu0 0
      %3069 = vmatpush1.bf16.msra.mxu0 0
      %3070 = vmatprep.subr.bf16.mxu0 0
      %3071 = vmatpush1.bf16.msra.mxu0 0
      %3072 = vmatprep.subr.bf16.mxu0 0
      %3073 = vmatpush1.bf16.msra.mxu0 0
      %3074 = vmatprep.subr.bf16.mxu0 0
      %3075 = vmatpush1.bf16.msra.mxu0 0
      %3076 = vmatprep.subr.bf16.mxu0 0
      %3077 = vmatpush1.bf16.msra.mxu0 0
      %3078 = vmatprep.subr.bf16.mxu0 0
      %3079 = vmatpush1.bf16.msra.mxu0 0
      %3080 = vmatprep.subr.bf16.mxu0 0
      %3081 = vmatpush1.bf16.msra.mxu0 0
      %3082 = vmatprep.subr.bf16.mxu0 0
      %3083 = vmatpush1.bf16.msra.mxu0 0
      %3084 = vmatprep.subr.bf16.mxu0 0
      %3085 = vmatpush1.bf16.msra.mxu0 0
      %3086 = vmatprep.mubr.bf16.mxu0 0
      %3087 = vmatmul.mubr.bf16.gmra.mrb[0].mxu0 %v3046
      %v3088 = vpop.f32.mrb[0].mxu0
      %v3089 = vadd.f32 %v3028, %v3088
      %v3090 = vpop.f32.mrb[0].mxu0
      %v3091 = vpop.f32.mrb[0].mxu0
      %v3092 = vadd.f32 %v3028, %v3091
      %v3093 = vpop.f32.mrb[0].mxu0
      %3094 = vmatprep.mubr.bf16.mxu0 0
      %3095 = vmatmul.mubr.bf16.gmra.mrb[0].mxu0 %v3049
      %v3096 = vpop.f32.mrb[0].mxu0
      %v3097 = vadd.f32 %v3028, %v3096
      %v3098 = vpop.f32.mrb[0].mxu0
      %v3099 = vpop.f32.mrb[0].mxu0
      %v3100 = vadd.f32 %v3028, %v3099
      %v3101 = vpop.f32.mrb[0].mxu0
      %3102 = vdwg.mxu0
      %v3103 = vmax.f32 %v3089, 0.0
      %v3104 = vmax.f32 %v3092, 0.0
      %v3105 = vmax.f32 %v3097, 0.0
      %v3106 = vmax.f32 %v3100, 0.0
      %s3107 = scalar_lea.vmem %s16, 8
      %v3108 = vld [vmem:[%s3107] sm:$0xf]
      %v3109 = vpack.c.bf16 %v3104, %v3103
      %v3110 = vpack.c.bf16 %v3106, %v3105
      %s3111 = scalar_lea.vmem %s17, 2
      %v3112 = vld [vmem:[%s3111] sm:$0x1]
      %v3114 = vlaneseq
      %v3115 = vshrl.u32 %v3114, 7
      %v3116 = vsub.s32 0, %v3115
      %v3117 = vrot.slane %v3112, %v3116
      %v3120 = vsel %vm1112, %v3109, 0
      %v3123 = vsel %vm1112, %v3110, 0
      %v3126 = vsel %vm1085, %v3108, 0
      %3128 = vmatprep.subr.bf16.mxu0 0
      %3129 = vmatpush1.bf16.msra.mxu0 %v3126
      %3130 = vmatprep.subr.bf16.mxu0 0
      %3131 = vmatpush1.bf16.msra.mxu0 0
      %3132 = vmatprep.subr.bf16.mxu0 0
      %3133 = vmatpush1.bf16.msra.mxu0 0
      %3134 = vmatprep.subr.bf16.mxu0 0
      %3135 = vmatpush1.bf16.msra.mxu0 0
      %3136 = vmatprep.subr.bf16.mxu0 0
      %3137 = vmatpush1.bf16.msra.mxu0 0
      %3138 = vmatprep.subr.bf16.mxu0 0
      %3139 = vmatpush1.bf16.msra.mxu0 0
      %3140 = vmatprep.subr.bf16.mxu0 0
      %3141 = vmatpush1.bf16.msra.mxu0 0
      %3142 = vmatprep.subr.bf16.mxu0 0
      %3143 = vmatpush1.bf16.msra.mxu0 0
      %3144 = vmatprep.subr.bf16.mxu0 0
      %3145 = vmatpush1.bf16.msra.mxu0 0
      %3146 = vmatprep.subr.bf16.mxu0 0
      %3147 = vmatpush1.bf16.msra.mxu0 0
      %3148 = vmatprep.subr.bf16.mxu0 0
      %3149 = vmatpush1.bf16.msra.mxu0 0
      %3150 = vmatprep.subr.bf16.mxu0 0
      %3151 = vmatpush1.bf16.msra.mxu0 0
      %3152 = vmatprep.subr.bf16.mxu0 0
      %3153 = vmatpush1.bf16.msra.mxu0 0
      %3154 = vmatprep.subr.bf16.mxu0 0
      %3155 = vmatpush1.bf16.msra.mxu0 0
      %3156 = vmatprep.subr.bf16.mxu0 0
      %3157 = vmatpush1.bf16.msra.mxu0 0
      %3158 = vmatprep.subr.bf16.mxu0 0
      %3159 = vmatpush1.bf16.msra.mxu0 0
      %3160 = vmatprep.mubr.bf16.mxu0 0
      %3161 = vmatmul.mubr.bf16.gmra.mrb[0].mxu0 %v3120
      %v3162 = vpop.f32.mrb[0].mxu0
      %v3163 = vadd.f32 %v3117, %v3162
      %v3164 = vpop.f32.mrb[0].mxu0
      %v3165 = vpop.f32.mrb[0].mxu0
      %v3166 = vadd.f32 %v3117, %v3165
      %v3167 = vpop.f32.mrb[0].mxu0
      %3168 = vmatprep.mubr.bf16.mxu0 0
      %3169 = vmatmul.mubr.bf16.gmra.mrb[0].mxu0 %v3123
      %v3170 = vpop.f32.mrb[0].mxu0
      %v3171 = vadd.f32 %v3117, %v3170
      %v3172 = vpop.f32.mrb[0].mxu0
      %v3173 = vpop.f32.mrb[0].mxu0
      %v3174 = vadd.f32 %v3117, %v3173
      %v3175 = vpop.f32.mrb[0].mxu0
      %3176 = vdwg.mxu0
      %v3177 = vadd.f32 %v2833, %v3163
      %v3178 = vadd.f32 %v2834, %v3166
      %v3179 = vadd.f32 %v2835, %v3171
      %v3180 = vadd.f32 %v2836, %v3174
      %v3181 = vmax.f32 %v3177, 0.0
      %v3182 = vmax.f32 %v3178, 0.0
      %v3183 = vmax.f32 %v3179, 0.0
      %v3184 = vmax.f32 %v3180, 0.0
      %v3185 = vmul.f32 %v1976, 0.17677669
      %v3186 = vmul.f32 %v1977, 0.17677669
      %v3187 = vmul.f32 %v1978, 0.17677669
      %v3188 = vmul.f32 %v1979, 0.17677669
      %v3189 = vpack.c.bf16 %v3186, %v3185
      %v3190 = vpack.c.bf16 %v3188, %v3187
      %v3191 = vpack.c.bf16 %v3182, %v3181
      %v3192 = vpack.c.bf16 %v3184, %v3183
      %v3194 = vsel %vm932, %v3189, 0
      %v3197 = vsel %vm932, %v3191, 0
      %3199 = vmatprep.subr.bf16.mxu0 0
      %3200 = vmatpush1.bf16.xpose.msra.mxu0 %v3197
      %3201 = vmatprep.subr.bf16.mxu0 0
      %3202 = vmatpush1.bf16.xpose.msra.mxu0 0
      %3203 = vmatprep.subr.bf16.mxu0 0
      %3204 = vmatpush1.bf16.xpose.msra.mxu0 0
      %3205 = vmatprep.subr.bf16.mxu0 0
      %3206 = vmatpush1.bf16.xpose.msra.mxu0 0
      %3207 = vmatprep.subr.bf16.mxu0 0
      %3208 = vmatpush1.bf16.xpose.msra.mxu0 0
      %3209 = vmatprep.subr.bf16.mxu0 0
      %3210 = vmatpush1.bf16.xpose.msra.mxu0 0
      %3211 = vmatprep.subr.bf16.mxu0 0
      %3212 = vmatpush1.bf16.xpose.msra.mxu0 0
      %3213 = vmatprep.subr.bf16.mxu0 0
      %3214 = vmatpush1.bf16.xpose.msra.mxu0 0
      %3215 = vmatprep.subr.bf16.mxu0 0
      %3216 = vmatpush1.bf16.xpose.msra.mxu0 0
      %3217 = vmatprep.subr.bf16.mxu0 0
      %3218 = vmatpush1.bf16.xpose.msra.mxu0 0
      %3219 = vmatprep.subr.bf16.mxu0 0
      %3220 = vmatpush1.bf16.xpose.msra.mxu0 0
      %3221 = vmatprep.subr.bf16.mxu0 0
      %3222 = vmatpush1.bf16.xpose.msra.mxu0 0
      %3223 = vmatprep.subr.bf16.mxu0 0
      %3224 = vmatpush1.bf16.xpose.msra.mxu0 0
      %3225 = vmatprep.subr.bf16.mxu0 0
      %3226 = vmatpush1.bf16.xpose.msra.mxu0 0
      %3227 = vmatprep.subr.bf16.mxu0 0
      %3228 = vmatpush1.bf16.xpose.msra.mxu0 0
      %3229 = vmatprep.subr.bf16.mxu0 0
      %3230 = vmatpush1.bf16.xpose.msra.mxu0 0
      %3231 = vmatprep.mubr.bf16.mxu0 0
      %3232 = vmatmul.mubr.bf16.gmra.mrb[0].mxu0 %v3194
      %v3233 = vpop.f32.mrb[0].mxu0
      %v3234 = vadd.f32 0.0, %v3233
      %v3235 = vpop.f32.mrb[0].mxu0
      %v3236 = vpop.f32.mrb[0].mxu0
      %v3237 = vadd.f32 0.0, %v3236
      %v3238 = vpop.f32.mrb[0].mxu0
      %3239 = vdwg.mxu0
      %v3241 = vsel %vm932, %v3190, 0
      %v3244 = vsel %vm932, %v3192, 0
      %3246 = vmatprep.subr.bf16.mxu0 0
      %3247 = vmatpush1.bf16.xpose.msra.mxu0 %v3244
      %3248 = vmatprep.subr.bf16.mxu0 0
      %3249 = vmatpush1.bf16.xpose.msra.mxu0 0
      %3250 = vmatprep.subr.bf16.mxu0 0
      %3251 = vmatpush1.bf16.xpose.msra.mxu0 0
      %3252 = vmatprep.subr.bf16.mxu0 0
      %3253 = vmatpush1.bf16.xpose.msra.mxu0 0
      %3254 = vmatprep.subr.bf16.mxu0 0
      %3255 = vmatpush1.bf16.xpose.msra.mxu0 0
      %3256 = vmatprep.subr.bf16.mxu0 0
      %3257 = vmatpush1.bf16.xpose.msra.mxu0 0
      %3258 = vmatprep.subr.bf16.mxu0 0
      %3259 = vmatpush1.bf16.xpose.msra.mxu0 0
      %3260 = vmatprep.subr.bf16.mxu0 0
      %3261 = vmatpush1.bf16.xpose.msra.mxu0 0
      %3262 = vmatprep.subr.bf16.mxu0 0
      %3263 = vmatpush1.bf16.xpose.msra.mxu0 0
      %3264 = vmatprep.subr.bf16.mxu0 0
      %3265 = vmatpush1.bf16.xpose.msra.mxu0 0
      %3266 = vmatprep.subr.bf16.mxu0 0
      %3267 = vmatpush1.bf16.xpose.msra.mxu0 0
      %3268 = vmatprep.subr.bf16.mxu0 0
      %3269 = vmatpush1.bf16.xpose.msra.mxu0 0
      %3270 = vmatprep.subr.bf16.mxu0 0
      %3271 = vmatpush1.bf16.xpose.msra.mxu0 0
      %3272 = vmatprep.subr.bf16.mxu0 0
      %3273 = vmatpush1.bf16.xpose.msra.mxu0 0
      %3274 = vmatprep.subr.bf16.mxu0 0
      %3275 = vmatpush1.bf16.xpose.msra.mxu0 0
      %3276 = vmatprep.subr.bf16.mxu0 0
      %3277 = vmatpush1.bf16.xpose.msra.mxu0 0
      %3278 = vmatprep.mubr.bf16.mxu0 0
      %3279 = vmatmul.mubr.bf16.gmra.mrb[0].mxu0 %v3241
      %v3280 = vpop.f32.mrb[0].mxu0
      %v3281 = vadd.f32 0.0, %v3280
      %v3282 = vpop.f32.mrb[0].mxu0
      %v3283 = vpop.f32.mrb[0].mxu0
      %v3284 = vadd.f32 0.0, %v3283
      %v3285 = vpop.f32.mrb[0].mxu0
      %3286 = vdwg.mxu0
      %v3287 = vsel %vm1122, %v3234, -inf
      %3288 = vmax.xlane.f32.xlu0 %v3287
      %v3289 = vpop.xlane.xlu0 %3288
      %v3290 = vsel %vm1122, %v3237, -inf
      %3291 = vmax.xlane.f32.xlu0 %v3290
      %v3292 = vpop.xlane.xlu0 %3291
      %v3293 = vsel %vm1122, %v3281, -inf
      %3294 = vmax.xlane.f32.xlu0 %v3293
      %v3295 = vpop.xlane.xlu0 %3294
      %v3296 = vsel %vm1122, %v3284, -inf
      %3297 = vmax.xlane.f32.xlu0 %v3296
      %v3298 = vpop.xlane.xlu0 %3297
      %v3299 = vsub.f32 %v3234, %v3289
      %v3300 = vsub.f32 %v3237, %v3292
      %v3301 = vsub.f32 %v3281, %v3295
      %v3302 = vsub.f32 %v3284, %v3298
      %v3303 = vmul.f32 %v3299, 1.442695
      %v3304 = vpow.pop %v3303
      %v3305 = vmul.f32 %v3300, 1.442695
      %v3306 = vpow.pop %v3305
      %v3307 = vmul.f32 %v3301, 1.442695
      %v3308 = vpow.pop %v3307
      %v3309 = vmul.f32 %v3302, 1.442695
      %v3310 = vpow.pop %v3309
      %v3311 = vsel %vm1122, %v3304, 0.0
      %3312 = vadd.xlane.f32.xlu0 %v3311
      %v3313 = vpop.xlane.xlu0 %3312
      %v3314 = vsel %vm1122, %v3306, 0.0
      %3315 = vadd.xlane.f32.xlu0 %v3314
      %v3316 = vpop.xlane.xlu0 %3315
      %v3317 = vsel %vm1122, %v3308, 0.0
      %3318 = vadd.xlane.f32.xlu0 %v3317
      %v3319 = vpop.xlane.xlu0 %3318
      %v3320 = vsel %vm1122, %v3310, 0.0
      %3321 = vadd.xlane.f32.xlu0 %v3320
      %v3322 = vpop.xlane.xlu0 %3321
      %v3323 = vrcp.pop %v3313
      %v3324 = vrcp.pop %v3316
      %v3325 = vrcp.pop %v3319
      %v3326 = vrcp.pop %v3322
      %v3327 = vpack.c.bf16 %v3306, %v3304
      %v3328 = vpack.c.bf16 %v3310, %v3308
      %3330 = vrot.lane.b32.xlu0 %v3191, 96
      %v3331 = vpop.permute.xlu0 %3330
      %v3334 = vsel %vm1122, %v3327, 0
      %3336 = vmatprep.subr.bf16.mxu0 0
      %3337 = vmatpush1.bf16.msra.mxu0 %v3331
      %3338 = vmatprep.subr.bf16.mxu0 0
      %3339 = vmatpush1.bf16.msra.mxu0 0
      %3340 = vmatprep.subr.bf16.mxu0 0
      %3341 = vmatpush1.bf16.msra.mxu0 0
      %3342 = vmatprep.subr.bf16.mxu0 0
      %3343 = vmatpush1.bf16.msra.mxu0 0
      %3344 = vmatprep.subr.bf16.mxu0 0
      %3345 = vmatpush1.bf16.msra.mxu0 0
      %3346 = vmatprep.subr.bf16.mxu0 0
      %3347 = vmatpush1.bf16.msra.mxu0 0
      %3348 = vmatprep.subr.bf16.mxu0 0
      %3349 = vmatpush1.bf16.msra.mxu0 0
      %3350 = vmatprep.subr.bf16.mxu0 0
      %3351 = vmatpush1.bf16.msra.mxu0 0
      %3352 = vmatprep.subr.bf16.mxu0 0
      %3353 = vmatpush1.bf16.msra.mxu0 0
      %3354 = vmatprep.subr.bf16.mxu0 0
      %3355 = vmatpush1.bf16.msra.mxu0 0
      %3356 = vmatprep.subr.bf16.mxu0 0
      %3357 = vmatpush1.bf16.msra.mxu0 0
      %3358 = vmatprep.subr.bf16.mxu0 0
      %3359 = vmatpush1.bf16.msra.mxu0 0
      %3360 = vmatprep.subr.bf16.mxu0 0
      %3361 = vmatpush1.bf16.msra.mxu0 0
      %3362 = vmatprep.subr.bf16.mxu0 0
      %3363 = vmatpush1.bf16.msra.mxu0 0
      %3364 = vmatprep.subr.bf16.mxu0 0
      %3365 = vmatpush1.bf16.msra.mxu0 0
      %3366 = vmatprep.subr.bf16.mxu0 0
      %3367 = vmatpush1.bf16.msra.mxu0 0
      %3368 = vmatprep.mubr.bf16.mxu0 0
      %3369 = vmatmul.mubr.bf16.gmra.mrb[0].mxu0 %v3334
      %v3370 = vpop.f32.mrb[0].mxu0
      %v3371 = vadd.f32 0.0, %v3370
      %v3372 = vpop.f32.mrb[0].mxu0
      %v3373 = vpop.f32.mrb[0].mxu0
      %v3374 = vadd.f32 0.0, %v3373
      %v3375 = vpop.f32.mrb[0].mxu0
      %3376 = vdwg.mxu0
      %3378 = vrot.lane.b32.xlu0 %v3192, 96
      %v3379 = vpop.permute.xlu0 %3378
      %v3382 = vsel %vm1122, %v3328, 0
      %3384 = vmatprep.subr.bf16.mxu0 0
      %3385 = vmatpush1.bf16.msra.mxu0 %v3379
      %3386 = vmatprep.subr.bf16.mxu0 0
      %3387 = vmatpush1.bf16.msra.mxu0 0
      %3388 = vmatprep.subr.bf16.mxu0 0
      %3389 = vmatpush1.bf16.msra.mxu0 0
      %3390 = vmatprep.subr.bf16.mxu0 0
      %3391 = vmatpush1.bf16.msra.mxu0 0
      %3392 = vmatprep.subr.bf16.mxu0 0
      %3393 = vmatpush1.bf16.msra.mxu0 0
      %3394 = vmatprep.subr.bf16.mxu0 0
      %3395 = vmatpush1.bf16.msra.mxu0 0
      %3396 = vmatprep.subr.bf16.mxu0 0
      %3397 = vmatpush1.bf16.msra.mxu0 0
      %3398 = vmatprep.subr.bf16.mxu0 0
      %3399 = vmatpush1.bf16.msra.mxu0 0
      %3400 = vmatprep.subr.bf16.mxu0 0
      %3401 = vmatpush1.bf16.msra.mxu0 0
      %3402 = vmatprep.subr.bf16.mxu0 0
      %3403 = vmatpush1.bf16.msra.mxu0 0
      %3404 = vmatprep.subr.bf16.mxu0 0
      %3405 = vmatpush1.bf16.msra.mxu0 0
      %3406 = vmatprep.subr.bf16.mxu0 0
      %3407 = vmatpush1.bf16.msra.mxu0 0
      %3408 = vmatprep.subr.bf16.mxu0 0
      %3409 = vmatpush1.bf16.msra.mxu0 0
      %3410 = vmatprep.subr.bf16.mxu0 0
      %3411 = vmatpush1.bf16.msra.mxu0 0
      %3412 = vmatprep.subr.bf16.mxu0 0
      %3413 = vmatpush1.bf16.msra.mxu0 0
      %3414 = vmatprep.subr.bf16.mxu0 0
      %3415 = vmatpush1.bf16.msra.mxu0 0
      %3416 = vmatprep.mubr.bf16.mxu0 0
      %3417 = vmatmul.mubr.bf16.gmra.mrb[0].mxu0 %v3382
      %v3418 = vpop.f32.mrb[0].mxu0
      %v3419 = vadd.f32 0.0, %v3418
      %v3420 = vpop.f32.mrb[0].mxu0
      %v3421 = vpop.f32.mrb[0].mxu0
      %v3422 = vadd.f32 0.0, %v3421
      %v3423 = vpop.f32.mrb[0].mxu0
      %3424 = vdwg.mxu0
      %v3425 = vmul.f32 %v3371, %v3323
      %v3426 = vmul.f32 %v3374, %v3324
      %v3427 = vmul.f32 %v3419, %v3325
      %v3428 = vmul.f32 %v3422, %v3326
      %v3429 = vld [vmem:[%s18] sm:$0xf]
      %v3430 = vld [vmem:[%s18 + $0x4] sm:$0xf]
      %v3431 = vld [vmem:[%s18 + $0x8] sm:$0xf]
      %v3432 = vld [vmem:[%s18 + $0xc] sm:$0xf]
      %v3433 = vpack.c.bf16 %v3426, %v3425
      %v3434 = vpack.c.bf16 %v3428, %v3427
      %v3435 = vld [vmem:[%s19] sm:$0x1]
      %v3437 = vlaneseq
      %v3438 = vshrl.u32 %v3437, 7
      %v3439 = vsub.s32 0, %v3438
      %v3440 = vrot.slane %v3435, %v3439
      %v3446 = vunpack.c.l.b16 %v3429
      %v3447 = vunpack.c.l.b16 %v3430
      %v3448 = vunpack.c.l.b16 %v3431
      %v3449 = vunpack.c.l.b16 %v3432
      %v3450 = vpack.c.b16 %v3447, %v3446
      %v3451 = vpack.c.b16 %v3449, %v3448
      %v3455 = vsel %vm932, %v3433, 0
      %v3458 = vsel %vm932, %v3434, 0
      %3460 = vmatprep.subr.bf16.mxu0 0
      %3461 = vmatpush1.bf16.msra.mxu0 %v3450
      %3462 = vmatprep.subr.bf16.mxu0 0
      %3463 = vmatpush1.bf16.msra.mxu0 %v3451
      %3464 = vmatprep.subr.bf16.mxu0 0
      %3465 = vmatpush1.bf16.msra.mxu0 0
      %3466 = vmatprep.subr.bf16.mxu0 0
      %3467 = vmatpush1.bf16.msra.mxu0 0
      %3468 = vmatprep.subr.bf16.mxu0 0
      %3469 = vmatpush1.bf16.msra.mxu0 0
      %3470 = vmatprep.subr.bf16.mxu0 0
      %3471 = vmatpush1.bf16.msra.mxu0 0
      %3472 = vmatprep.subr.bf16.mxu0 0
      %3473 = vmatpush1.bf16.msra.mxu0 0
      %3474 = vmatprep.subr.bf16.mxu0 0
      %3475 = vmatpush1.bf16.msra.mxu0 0
      %3476 = vmatprep.subr.bf16.mxu0 0
      %3477 = vmatpush1.bf16.msra.mxu0 0
      %3478 = vmatprep.subr.bf16.mxu0 0
      %3479 = vmatpush1.bf16.msra.mxu0 0
      %3480 = vmatprep.subr.bf16.mxu0 0
      %3481 = vmatpush1.bf16.msra.mxu0 0
      %3482 = vmatprep.subr.bf16.mxu0 0
      %3483 = vmatpush1.bf16.msra.mxu0 0
      %3484 = vmatprep.subr.bf16.mxu0 0
      %3485 = vmatpush1.bf16.msra.mxu0 0
      %3486 = vmatprep.subr.bf16.mxu0 0
      %3487 = vmatpush1.bf16.msra.mxu0 0
      %3488 = vmatprep.subr.bf16.mxu0 0
      %3489 = vmatpush1.bf16.msra.mxu0 0
      %3490 = vmatprep.subr.bf16.mxu0 0
      %3491 = vmatpush1.bf16.msra.mxu0 0
      %3492 = vmatprep.mubr.bf16.mxu0 0
      %3493 = vmatmul.mubr.bf16.gmra.mrb[0].mxu0 %v3455
      %v3494 = vpop.f32.mrb[0].mxu0
      %v3495 = vadd.f32 %v3440, %v3494
      %v3496 = vpop.f32.mrb[0].mxu0
      %v3497 = vpop.f32.mrb[0].mxu0
      %v3498 = vadd.f32 %v3440, %v3497
      %v3499 = vpop.f32.mrb[0].mxu0
      %3500 = vmatprep.mubr.bf16.mxu0 0
      %3501 = vmatmul.mubr.bf16.gmra.mrb[0].mxu0 %v3458
      %v3502 = vpop.f32.mrb[0].mxu0
      %v3503 = vadd.f32 %v3440, %v3502
      %v3504 = vpop.f32.mrb[0].mxu0
      %v3505 = vpop.f32.mrb[0].mxu0
      %v3506 = vadd.f32 %v3440, %v3505
      %v3507 = vpop.f32.mrb[0].mxu0
      %3508 = vdwg.mxu0
      %v3509 = vsub.f32 %v3495, %v816
      %v3510 = vsub.f32 %v3498, %v816
      %v3511 = vsub.f32 %v3503, %v816
      %v3512 = vsub.f32 %v3506, %v816
      %v3513 = vadd.f32 %v796, 1e-10
      %v3515 = vlaneseq
      %v3516 = vshrl.u32 %v3515, 7
      %v3517 = vsub.s32 0, %v3516
      %v3518 = vrot.slane %v3513, %v3517
      %v3520 = vrcp.pop %v3518
      %v3521 = vmul.f32 %v3509, %v3520
      %v3522 = vmul.f32 %v3510, %v3520
      %v3523 = vmul.f32 %v3511, %v3520
      %v3524 = vmul.f32 %v3512, %v3520
      %v3525 = vmul.f32 %v3521, %v784
      %v3526 = vmul.f32 %v3522, %v784
      %v3527 = vmul.f32 %v3523, %v791
      %v3528 = vmul.f32 %v3524, %v791
      %v3529 = vadd.f32 %v3525, %v746
      %v3530 = vadd.f32 %v3526, %v746
      %v3531 = vadd.f32 %v3527, %v747
      %v3532 = vadd.f32 %v3528, %v747
      %3533 = vst.msk [vmem:[%s715] sm:$0xff] %vm726, %v3529
      %3534 = vst.msk [vmem:[%s715 + $0x8] sm:$0xff] %vm726, %v3530
      %3535 = vst.msk [vmem:[%s715 + $0x10] sm:$0xff] %vm726, %v3531
      %3536 = vst.msk [vmem:[%s715 + $0x18] sm:$0xff] %vm726, %v3532
      %s3537 = smul.u32 2, %s33
      %p3538 = scmp.lt.s32.totalorder %s3537, 3
      %s3539 = scalar_select %p3538, %s3537, 3
      %s3540 = smul.addr %s3539, 2
      %s3541 = smul.addr %s3540, 8
      %s3542 = scalar_lea.vmem %s22, %s3541
      // Predicated region
      $region109: #{net_forward.1} parent=107 // pred_check
        %p3543 = pneg %p523
      $region110: #{net_forward.1} parent=107 // pred_check_branch
        %3545 = sbr.rel (%p3543) target = $region112
      $region111: #{net_forward.1} parent=107 // pred_region
        %s3546 = smul.u32 2, %s33
      $region112: #{net_forward.1} parent=107 // pred_fallthru
        _
    $region108: #{net_forward.1} parent=5 // pred_fallthru
      _
    %p3547 = scmp.le.s32.totalorder 2, %s28
    // Predicated region
    $region113: #{net_forward.1} parent=5 // pred_check
      %p3548 = pneg %p3547
    $region114: #{net_forward.1} parent=5 // pred_check_branch
      %3550 = sbr.rel (%p3548) target = $region116
    $region115: #{net_forward.1} parent=5 // pred_region
      %s3551 = ssub.s32 %s28, 2
      // Predicated region
      $region117: #{net_forward.1} parent=115 // pred_check
        %p3552 = pneg %p529
      $region118: #{net_forward.1} parent=115 // pred_check_branch
        %3554 = sbr.rel (%p3552) target = $region120
      $region119: #{net_forward.1} parent=115 // pred_region
        %s3555 = smul.u32 2, %s34
        %p3556 = scmp.lt.s32.totalorder %s3555, 3
        %s3557 = scalar_select %p3556, %s3555, 3
        %s3558 = smul.addr %s3557, 2
        %s3559 = smul.addr %s3558, 8
        %s3560 = scalar_lea.vmem %s22, %s3559
      $region120: #{net_forward.1} parent=115 // pred_fallthru
        _
    $region116: #{net_forward.1} parent=5 // pred_fallthru
      _
  $region6: #{net_forward.1} parent=0 // loop_footer
    %s32 = sadd.s32 1, %s28
  $region7: #{net_forward.1} parent=0 // loop_footer_branch
    %27 = sbr.rel target = $region3
  $region8: #{net_forward.1} parent=0 // loop_exit
    _

</llo_original>
